<compile_context>
chip_gen: v7x
topology: tpu7x:2x2x1
jax: 0.10.0
libtpu: 0.0.40
codegen_flags: <defaults>
</compile_context>

<pallas_src>
import math

import jax
import jax.numpy as jnp
from jax.experimental import pallas as pl
from jax.experimental.pallas import tpu as pltpu


# ---------------------------------------------------------------------------
# Pool-aware im2col (wrapper-side XLA op).
# For a 3x3 / pad-1 conv followed by a 2x2 maxpool, emit
#   X[q, n*Ho*Wo + po, 9*Cin]
# where q = dh*2+dw is the position of a conv output inside its pooling
# window and po = ph*Wo+pw is the pooled output pixel.  The kernel then does
# one (4*B*Ho*Wo, 9*Cin) x (9*Cin, Cout) dot and maxes over the q axis.
# ---------------------------------------------------------------------------
def _pool_im2col(x):
    N, H, W, Cin = x.shape
    Ho, Wo = H // 2, W // 2
    xp = jnp.pad(x.astype(jnp.bfloat16), ((0, 0), (1, 1), (1, 1), (0, 0)))
    cols = jnp.concatenate(
        [xp[:, kh:kh + H, kw:kw + W, :] for kh in range(3) for kw in range(3)],
        axis=-1)                                      # (N, H, W, 9*Cin)
    cols = cols.reshape(N, Ho, 2, Wo, 2, 9 * Cin)
    cols = cols.transpose(2, 4, 0, 1, 3, 5)           # (dh, dw, N, Ho, Wo, 9Cin)
    return cols.reshape(4, N * Ho * Wo, 9 * Cin)


def _pick_batch_block(N, hw_out, target_rows=256):
    """Images per grid step B: want 4*B*hw_out >= target_rows (MXU M-dim),
    B | N, and B*hw_out % 8 == 0 unless the block spans the whole batch."""
    want = max(1, -(-target_rows // (4 * hw_out)))
    for b in range(1, N + 1):
        if N % b:
            continue
        if (b * hw_out) % 8 and b != N:
            continue
        if b >= want:
            return b
    return N


# ---------------------------------------------------------------------------
# Shared conv + 2x2 maxpool body (pre-bias).  x_ref: (4, M0, K) bf16,
# w_ref: (K, Cout) bf16.  Returns (M0, Cout) f32.
# ---------------------------------------------------------------------------
def _conv_pool_body(x_ref, w_ref):
    f32 = jnp.float32
    q, m0, k = x_ref.shape
    w = w_ref[...]
    cout = w.shape[-1]
    if m0 % 8 == 0:
        # Single big MXU dot: M = 4 * B * Ho * Wo (>= 256 at realistic batch).
        acc = jnp.dot(x_ref[...].reshape(q * m0, k), w,
                      preferred_element_type=f32)
        a = acc.reshape(q, m0, cout)
        return jnp.maximum(jnp.maximum(a[0], a[1]), jnp.maximum(a[2], a[3]))
    # Tiny-batch fallback (M0 not 8-aligned): one dot per window position.
    pooled = jnp.dot(x_ref[0], w, preferred_element_type=f32)
    for i in range(1, q):
        pooled = jnp.maximum(pooled,
                             jnp.dot(x_ref[i], w, preferred_element_type=f32))
    return pooled


def _conv_relu_pool_kernel(x_ref, w_ref, b_ref, o_ref):
    pooled = _conv_pool_body(x_ref, w_ref)
    # Bias applied once, post-pool: relu(max(.)+b) == max over window of
    # relu(.+b), exactly.
    o_ref[...] = jnp.maximum(pooled + b_ref[...], 0.0).astype(o_ref.dtype)


def _conv_relu_pool_fc_kernel(x_ref, w_ref, b_ref, w1_ref, b1_ref,
                              w2_ref, b2_ref, w3_ref, b3_ref, o_ref):
    """Last conv + pool fused with the 3-layer classifier (features stay in
    VMEM).  Output: (B, n_pad) f32 lane-dense logits."""
    f32, bf16 = jnp.float32, jnp.bfloat16
    pooled = _conv_pool_body(x_ref, w_ref)
    feat = jnp.maximum(pooled + b_ref[...], 0.0).astype(bf16)     # (B, 512)
    # TODO(synk): Dropout is identity here (eval-mode semantics).
    h = jnp.dot(feat, w1_ref[...], preferred_element_type=f32)
    h = jnp.maximum(h + b1_ref[...], 0.0).astype(bf16)
    h = jnp.dot(h, w2_ref[...], preferred_element_type=f32)
    h = jnp.maximum(h + b2_ref[...], 0.0).astype(bf16)
    out = jnp.dot(h, w3_ref[...], preferred_element_type=f32) + b3_ref[...]
    o_ref[...] = out.astype(o_ref.dtype)


# ---------------------------------------------------------------------------
# conv3x3(pad=1) + bias + ReLU + 2x2 maxpool
# ---------------------------------------------------------------------------
def conv3x3_relu_maxpool(x, w, b):
    """x: (N,H,W,Cin);  w: (3,3,Cin,Cout) f32;  b: (Cout,) f32.
    Returns the pooled activation (N, H//2, W//2, Cout) bf16."""
    N, H, W, Cin = x.shape
    Cout = w.shape[-1]
    Ho, Wo = H // 2, W // 2
    K = 9 * Cin

    X = _pool_im2col(x)                                # (4, N*Ho*Wo, K) bf16
    wcol = w.reshape(K, Cout).astype(jnp.bfloat16)     # (kh,kw,cin) order
    brow = b.reshape(1, Cout).astype(jnp.float32)

    B = _pick_batch_block(N, Ho * Wo)
    mb = B * Ho * Wo
    Mt = N * Ho * Wo
    out = pl.pallas_call(
        _conv_relu_pool_kernel,
        out_shape=jax.ShapeDtypeStruct((Mt, Cout), jnp.bfloat16),
        grid=(Mt // mb,),                              # batch chunks -> 2 TCs on v7x
        in_specs=[
            pl.BlockSpec((4, mb, K), lambda i: (0, i, 0)),
            pl.BlockSpec((K, Cout), lambda i: (0, 0)),     # VMEM-resident weights
            pl.BlockSpec((1, Cout), lambda i: (0, 0)),
        ],
        out_specs=pl.BlockSpec((mb, Cout), lambda i: (i, 0)),
        compiler_params=pltpu.CompilerParams(dimension_semantics=("parallel",)),
    )(X, wcol, brow)
    return out.reshape(N, Ho, Wo, Cout)


# ---------------------------------------------------------------------------
# Last conv + pool fused with the classifier
# ---------------------------------------------------------------------------
def conv3x3_relu_maxpool_classifier(x, conv_wb, fc1, fc2, fc3):
    N, H, W, Cin = x.shape
    w, b = conv_wb
    Cout = w.shape[-1]
    Ho, Wo = H // 2, W // 2
    assert Ho == 1 and Wo == 1 and Cout == fc1[0].shape[0], (
        "classifier fusion expects the final conv+pool to emit (1,1,512)")
    K = 9 * Cin

    X = _pool_im2col(x)                                # (4, N, K) bf16
    wcol = w.reshape(K, Cout).astype(jnp.bfloat16)
    brow = b.reshape(1, Cout).astype(jnp.float32)

    (w1, b1), (w2, b2), (w3, b3) = fc1, fc2, fc3
    H1, H2, ncls = w1.shape[1], w2.shape[1], w3.shape[1]
    npad = pl.cdiv(ncls, 128) * 128                    # lane-dense logits (10->128)
    w1b = w1.astype(jnp.bfloat16)
    w2b = w2.astype(jnp.bfloat16)
    w3b = jnp.pad(w3, ((0, 0), (0, npad - ncls))).astype(jnp.bfloat16)
    b1r = b1.reshape(1, H1).astype(jnp.float32)
    b2r = b2.reshape(1, H2).astype(jnp.float32)
    b3r = jnp.pad(b3, ((0, npad - ncls),)).reshape(1, npad).astype(jnp.float32)

    B = _pick_batch_block(N, 1)
    out = pl.pallas_call(
        _conv_relu_pool_fc_kernel,
        out_shape=jax.ShapeDtypeStruct((N, npad), jnp.float32),
        grid=(N // B,),
        in_specs=[
            pl.BlockSpec((4, B, K), lambda i: (0, i, 0)),
            pl.BlockSpec((K, Cout), lambda i: (0, 0)),
            pl.BlockSpec((1, Cout), lambda i: (0, 0)),
            pl.BlockSpec((Cout, H1), lambda i: (0, 0)),    # resident FC weights
            pl.BlockSpec((1, H1), lambda i: (0, 0)),
            pl.BlockSpec((H1, H2), lambda i: (0, 0)),
            pl.BlockSpec((1, H2), lambda i: (0, 0)),
            pl.BlockSpec((H2, npad), lambda i: (0, 0)),
            pl.BlockSpec((1, npad), lambda i: (0, 0)),
        ],
        out_specs=pl.BlockSpec((B, npad), lambda i: (i, 0)),
        compiler_params=pltpu.CompilerParams(dimension_semantics=("parallel",)),
    )(X, wcol, brow, w1b, b1r, w2b, b2r, w3b, b3r)
    return out[:, :ncls]


# ---------------------------------------------------------------------------
# Parameters (deterministic init mirroring the torch module's __init__)
# ---------------------------------------------------------------------------
def init_params(key):
    conv_cfg = [(3, 64), (64, 128), (128, 512)]
    params = {"convs": []}
    for cin, cout in conv_cfg:
        key, kw = jax.random.split(key)
        n = 3 * 3 * cout                                     # torch: normal(0, sqrt(2/n))
        w = jax.random.normal(kw, (3, 3, cin, cout), jnp.float32) * math.sqrt(2.0 / n)
        b = jnp.zeros((cout,), jnp.float32)                  # torch: bias zero
        params["convs"].append((w, b))

    def linear(k, fin, fout):                                # torch default Linear init
        k1, k2 = jax.random.split(k)
        bound = 1.0 / math.sqrt(fin)
        w = jax.random.uniform(k1, (fin, fout), jnp.float32, -bound, bound)
        b = jax.random.uniform(k2, (fout,), jnp.float32, -bound, bound)
        return w, b

    key, k1, k2, k3 = jax.random.split(key, 4)
    params["fc1"] = linear(k1, 512, 512)
    params["fc2"] = linear(k2, 512, 512)
    params["fc3"] = linear(k3, 512, 10)
    return params


# ---------------------------------------------------------------------------
# Full forward pass
# ---------------------------------------------------------------------------
def vgg_forward(x_nchw, params):
    x = jnp.transpose(x_nchw, (0, 2, 3, 1))                  # NCHW -> NHWC
    convs = params["convs"]
    for (w, b) in convs[:-1]:
        x = conv3x3_relu_maxpool(x, w, b)

    n, h, w_, _ = x.shape
    assert h == 2 and w_ == 2 and convs[-1][0].shape[-1] == 512, (
        "VGG classifier expects the feature map to collapse to (1,1,512); "
        f"got pre-final spatial {(h, w_)} -- use an 8x8 input with this stack.")
    # torch x.view(N,-1) on (N,512,1,1) == our pooled (N,512) feature rows.
    return conv3x3_relu_maxpool_classifier(
        x, convs[-1], params["fc1"], params["fc2"], params["fc3"])


if __name__ == "__main__":
    x = jax.random.normal(jax.random.PRNGKey(0), (2, 3, 8, 8), jnp.float32)
    params = init_params(jax.random.PRNGKey(1))
    out = jax.jit(vgg_forward)(x, params)
    out = jax.block_until_ready(out)
    assert out.shape == (2, 10), out.shape
    assert jnp.all(jnp.isfinite(out))
    print("KERNEL_OK")
</pallas_src>

<mosaic_0001>
module attributes {stable_mosaic.version = 11 : i64} {
  func.func @_conv_relu_pool_kernel(%arg0: i32, %arg1: memref<4x32x27xbf16, #tpu.memory_space<vmem>>, %arg2: memref<27x64xbf16, #tpu.memory_space<vmem>>, %arg3: memref<1x64xf32, #tpu.memory_space<vmem>>, %arg4: memref<32x64xbf16, #tpu.memory_space<vmem>>) attributes {dimension_semantics = [#tpu.dimension_semantics<parallel>], iteration_bounds = array<i64: 1>, scalar_prefetch = 0 : i64, scratch_operands = 0 : i64, tpu.core_type = #tpu.core_type<tc>, window_params = [{transform_indices = @transform_0, window_bounds = array<i64: 4, 32, 27>}, {pipeline_mode = #tpu.pipeline_mode<synchronous>, transform_indices = @transform_1, window_bounds = array<i64: 27, 64>}, {pipeline_mode = #tpu.pipeline_mode<synchronous>, transform_indices = @transform_2, window_bounds = array<i64: 1, 64>}, {transform_indices = @transform_3, window_bounds = array<i64: 32, 64>}]} {
    %c0 = arith.constant 0 : index
    %c0_0 = arith.constant 0 : index
    %0 = vector.load %arg2[%c0, %c0_0] : memref<27x64xbf16, #tpu.memory_space<vmem>>, vector<27x64xbf16>
    %c0_1 = arith.constant 0 : index
    %c0_2 = arith.constant 0 : index
    %c0_3 = arith.constant 0 : index
    %1 = vector.load %arg1[%c0_1, %c0_2, %c0_3] : memref<4x32x27xbf16, #tpu.memory_space<vmem>>, vector<4x32x27xbf16>
    %2 = vector.shape_cast %1 : vector<4x32x27xbf16> to vector<128x27xbf16>
    %cst = arith.constant dense<0.000000e+00> : vector<128x64xf32>
    %3 = tpu.matmul %2, %0, %cst {dimension_numbers = #tpu.dot_dimension_numbers<[1], [0], [0], [1], [0, 0, 1, 1], [], []>} : vector<128x27xbf16>, vector<27x64xbf16>, vector<128x64xf32> -> vector<128x64xf32>
    %4 = vector.shape_cast %3 : vector<128x64xf32> to vector<4x32x64xf32>
    %5 = vector.extract_strided_slice %4 {offsets = [0, 0, 0], sizes = [1, 32, 64], strides = [1, 1, 1]} : vector<4x32x64xf32> to vector<1x32x64xf32>
    %6 = vector.shape_cast %5 : vector<1x32x64xf32> to vector<32x64xf32>
    %7 = vector.extract_strided_slice %4 {offsets = [1, 0, 0], sizes = [1, 32, 64], strides = [1, 1, 1]} : vector<4x32x64xf32> to vector<1x32x64xf32>
    %8 = vector.shape_cast %7 : vector<1x32x64xf32> to vector<32x64xf32>
    %9 = arith.maximumf %6, %8 : vector<32x64xf32>
    %10 = vector.extract_strided_slice %4 {offsets = [2, 0, 0], sizes = [1, 32, 64], strides = [1, 1, 1]} : vector<4x32x64xf32> to vector<1x32x64xf32>
    %11 = vector.shape_cast %10 : vector<1x32x64xf32> to vector<32x64xf32>
    %12 = vector.extract_strided_slice %4 {offsets = [3, 0, 0], sizes = [1, 32, 64], strides = [1, 1, 1]} : vector<4x32x64xf32> to vector<1x32x64xf32>
    %13 = vector.shape_cast %12 : vector<1x32x64xf32> to vector<32x64xf32>
    %14 = arith.maximumf %11, %13 : vector<32x64xf32>
    %15 = arith.maximumf %9, %14 : vector<32x64xf32>
    %c0_4 = arith.constant 0 : index
    %c0_5 = arith.constant 0 : index
    %16 = vector.load %arg3[%c0_4, %c0_5] : memref<1x64xf32, #tpu.memory_space<vmem>>, vector<1x64xf32>
    %17 = vector.broadcast %16 : vector<1x64xf32> to vector<32x64xf32>
    %18 = arith.addf %15, %17 : vector<32x64xf32>
    %cst_6 = arith.constant 0.000000e+00 : f32
    %19 = vector.broadcast %cst_6 : f32 to vector<32x64xf32>
    %20 = arith.maximumf %18, %19 : vector<32x64xf32>
    %21 = arith.truncf %20 : vector<32x64xf32> to vector<32x64xbf16>
    %c0_7 = arith.constant 0 : index
    %c0_8 = arith.constant 0 : index
    %22 = vector.load %arg4[%c0_7, %c0_8] : memref<32x64xbf16, #tpu.memory_space<vmem>>, vector<32x64xbf16>
    tpu.vector_store %arg4[%c0_7, %c0_8], %21 {strides = array<i32>} : memref<32x64xbf16, #tpu.memory_space<vmem>>, vector<32x64xbf16>,
    return
  }
  func.func @transform_0(%arg0: i32) -> (i32, i32, i32) {
    %c0_i32 = arith.constant 0 : i32
    %c0_i32_0 = arith.constant 0 : i32
    %c0_i32_1 = arith.constant 0 : i32
    return %c0_i32, %arg0, %c0_i32_0 : i32, i32, i32
  }
  func.func @transform_1(%arg0: i32) -> (i32, i32) {
    %c0_i32 = arith.constant 0 : i32
    %c0_i32_0 = arith.constant 0 : i32
    %c0_i32_1 = arith.constant 0 : i32
    return %c0_i32, %c0_i32_0 : i32, i32
  }
  func.func @transform_2(%arg0: i32) -> (i32, i32) {
    %c0_i32 = arith.constant 0 : i32
    %c0_i32_0 = arith.constant 0 : i32
    %c0_i32_1 = arith.constant 0 : i32
    return %c0_i32, %c0_i32_0 : i32, i32
  }
  func.func @transform_3(%arg0: i32) -> (i32, i32) {
    %c0_i32 = arith.constant 0 : i32
    %c0_i32_0 = arith.constant 0 : i32
    return %arg0, %c0_i32 : i32, i32
  }
}

module attributes {stable_mosaic.version = 11 : i64} {
  func.func @_conv_relu_pool_kernel(%arg0: i32, %arg1: memref<4x8x576xbf16, #tpu.memory_space<vmem>>, %arg2: memref<576x128xbf16, #tpu.memory_space<vmem>>, %arg3: memref<1x128xf32, #tpu.memory_space<vmem>>, %arg4: memref<8x128xbf16, #tpu.memory_space<vmem>>) attributes {dimension_semantics = [#tpu.dimension_semantics<parallel>], iteration_bounds = array<i64: 1>, scalar_prefetch = 0 : i64, scratch_operands = 0 : i64, tpu.core_type = #tpu.core_type<tc>, window_params = [{transform_indices = @transform_0, window_bounds = array<i64: 4, 8, 576>}, {pipeline_mode = #tpu.pipeline_mode<synchronous>, transform_indices = @transform_1, window_bounds = array<i64: 576, 128>}, {pipeline_mode = #tpu.pipeline_mode<synchronous>, transform_indices = @transform_2, window_bounds = array<i64: 1, 128>}, {transform_indices = @transform_3, window_bounds = array<i64: 8, 128>}]} {
    %c0 = arith.constant 0 : index
    %c0_0 = arith.constant 0 : index
    %0 = vector.load %arg2[%c0, %c0_0] : memref<576x128xbf16, #tpu.memory_space<vmem>>, vector<576x128xbf16>
    %c0_1 = arith.constant 0 : index
    %c0_2 = arith.constant 0 : index
    %c0_3 = arith.constant 0 : index
    %1 = vector.load %arg1[%c0_1, %c0_2, %c0_3] : memref<4x8x576xbf16, #tpu.memory_space<vmem>>, vector<4x8x576xbf16>
    %2 = vector.shape_cast %1 : vector<4x8x576xbf16> to vector<32x576xbf16>
    %cst = arith.constant dense<0.000000e+00> : vector<32x128xf32>
    %3 = tpu.matmul %2, %0, %cst {dimension_numbers = #tpu.dot_dimension_numbers<[1], [0], [0], [1], [0, 0, 1, 1], [], []>} : vector<32x576xbf16>, vector<576x128xbf16>, vector<32x128xf32> -> vector<32x128xf32>
    %4 = vector.shape_cast %3 : vector<32x128xf32> to vector<4x8x128xf32>
    %5 = vector.extract_strided_slice %4 {offsets = [0, 0, 0], sizes = [1, 8, 128], strides = [1, 1, 1]} : vector<4x8x128xf32> to vector<1x8x128xf32>
    %6 = vector.shape_cast %5 : vector<1x8x128xf32> to vector<8x128xf32>
    %7 = vector.extract_strided_slice %4 {offsets = [1, 0, 0], sizes = [1, 8, 128], strides = [1, 1, 1]} : vector<4x8x128xf32> to vector<1x8x128xf32>
    %8 = vector.shape_cast %7 : vector<1x8x128xf32> to vector<8x128xf32>
    %9 = arith.maximumf %6, %8 : vector<8x128xf32>
    %10 = vector.extract_strided_slice %4 {offsets = [2, 0, 0], sizes = [1, 8, 128], strides = [1, 1, 1]} : vector<4x8x128xf32> to vector<1x8x128xf32>
    %11 = vector.shape_cast %10 : vector<1x8x128xf32> to vector<8x128xf32>
    %12 = vector.extract_strided_slice %4 {offsets = [3, 0, 0], sizes = [1, 8, 128], strides = [1, 1, 1]} : vector<4x8x128xf32> to vector<1x8x128xf32>
    %13 = vector.shape_cast %12 : vector<1x8x128xf32> to vector<8x128xf32>
    %14 = arith.maximumf %11, %13 : vector<8x128xf32>
    %15 = arith.maximumf %9, %14 : vector<8x128xf32>
    %c0_4 = arith.constant 0 : index
    %c0_5 = arith.constant 0 : index
    %16 = vector.load %arg3[%c0_4, %c0_5] : memref<1x128xf32, #tpu.memory_space<vmem>>, vector<1x128xf32>
    %17 = vector.broadcast %16 : vector<1x128xf32> to vector<8x128xf32>
    %18 = arith.addf %15, %17 : vector<8x128xf32>
    %cst_6 = arith.constant 0.000000e+00 : f32
    %19 = vector.broadcast %cst_6 : f32 to vector<8x128xf32>
    %20 = arith.maximumf %18, %19 : vector<8x128xf32>
    %21 = arith.truncf %20 : vector<8x128xf32> to vector<8x128xbf16>
    %c0_7 = arith.constant 0 : index
    %c0_8 = arith.constant 0 : index
    %22 = vector.load %arg4[%c0_7, %c0_8] : memref<8x128xbf16, #tpu.memory_space<vmem>>, vector<8x128xbf16>
    tpu.vector_store %arg4[%c0_7, %c0_8], %21 {strides = array<i32>} : memref<8x128xbf16, #tpu.memory_space<vmem>>, vector<8x128xbf16>,
    return
  }
  func.func @transform_0(%arg0: i32) -> (i32, i32, i32) {
    %c0_i32 = arith.constant 0 : i32
    %c0_i32_0 = arith.constant 0 : i32
    %c0_i32_1 = arith.constant 0 : i32
    return %c0_i32, %arg0, %c0_i32_0 : i32, i32, i32
  }
  func.func @transform_1(%arg0: i32) -> (i32, i32) {
    %c0_i32 = arith.constant 0 : i32
    %c0_i32_0 = arith.constant 0 : i32
    %c0_i32_1 = arith.constant 0 : i32
    return %c0_i32, %c0_i32_0 : i32, i32
  }
  func.func @transform_2(%arg0: i32) -> (i32, i32) {
    %c0_i32 = arith.constant 0 : i32
    %c0_i32_0 = arith.constant 0 : i32
    %c0_i32_1 = arith.constant 0 : i32
    return %c0_i32, %c0_i32_0 : i32, i32
  }
  func.func @transform_3(%arg0: i32) -> (i32, i32) {
    %c0_i32 = arith.constant 0 : i32
    %c0_i32_0 = arith.constant 0 : i32
    return %arg0, %c0_i32 : i32, i32
  }
}

module attributes {stable_mosaic.version = 11 : i64} {
  func.func @_conv_relu_pool_fc_kernel(%arg0: i32, %arg1: memref<4x2x1152xbf16, #tpu.memory_space<vmem>>, %arg2: memref<1152x512xbf16, #tpu.memory_space<vmem>>, %arg3: memref<1x512xf32, #tpu.memory_space<vmem>>, %arg4: memref<512x512xbf16, #tpu.memory_space<vmem>>, %arg5: memref<1x512xf32, #tpu.memory_space<vmem>>, %arg6: memref<512x512xbf16, #tpu.memory_space<vmem>>, %arg7: memref<1x512xf32, #tpu.memory_space<vmem>>, %arg8: memref<512x128xbf16, #tpu.memory_space<vmem>>, %arg9: memref<1x128xf32, #tpu.memory_space<vmem>>, %arg10: memref<2x128xf32, #tpu.memory_space<vmem>>) attributes {dimension_semantics = [#tpu.dimension_semantics<parallel>], iteration_bounds = array<i64: 1>, scalar_prefetch = 0 : i64, scratch_operands = 0 : i64, tpu.core_type = #tpu.core_type<tc>, window_params = [{transform_indices = @transform_0, window_bounds = array<i64: 4, 2, 1152>}, {pipeline_mode = #tpu.pipeline_mode<synchronous>, transform_indices = @transform_1, window_bounds = array<i64: 1152, 512>}, {pipeline_mode = #tpu.pipeline_mode<synchronous>, transform_indices = @transform_2, window_bounds = array<i64: 1, 512>}, {pipeline_mode = #tpu.pipeline_mode<synchronous>, transform_indices = @transform_3, window_bounds = array<i64: 512, 512>}, {pipeline_mode = #tpu.pipeline_mode<synchronous>, transform_indices = @transform_4, window_bounds = array<i64: 1, 512>}, {pipeline_mode = #tpu.pipeline_mode<synchronous>, transform_indices = @transform_5, window_bounds = array<i64: 512, 512>}, {pipeline_mode = #tpu.pipeline_mode<synchronous>, transform_indices = @transform_6, window_bounds = array<i64: 1, 512>}, {pipeline_mode = #tpu.pipeline_mode<synchronous>, transform_indices = @transform_7, window_bounds = array<i64: 512, 128>}, {pipeline_mode = #tpu.pipeline_mode<synchronous>, transform_indices = @transform_8, window_bounds = array<i64: 1, 128>}, {transform_indices = @transform_9, window_bounds = array<i64: 2, 128>}]} {
    %c0 = arith.constant 0 : index
    %c0_0 = arith.constant 0 : index
    %0 = vector.load %arg2[%c0, %c0_0] : memref<1152x512xbf16, #tpu.memory_space<vmem>>, vector<1152x512xbf16>
    %c0_1 = arith.constant 0 : index
    %c0_2 = arith.constant 0 : index
    %c0_3 = arith.constant 0 : index
    %1 = vector.load %arg1[%c0_1, %c0_2, %c0_3] : memref<4x2x1152xbf16, #tpu.memory_space<vmem>>, vector<1x2x1152xbf16>
    %2 = vector.shape_cast %1 : vector<1x2x1152xbf16> to vector<2x1152xbf16>
    %cst = arith.constant dense<0.000000e+00> : vector<2x512xf32>
    %3 = tpu.matmul %2, %0, %cst {dimension_numbers = #tpu.dot_dimension_numbers<[1], [0], [0], [1], [0, 0, 1, 1], [], []>} : vector<2x1152xbf16>, vector<1152x512xbf16>, vector<2x512xf32> -> vector<2x512xf32>
    %c1 = arith.constant 1 : index
    %c0_4 = arith.constant 0 : index
    %c0_5 = arith.constant 0 : index
    %4 = vector.load %arg1[%c1, %c0_4, %c0_5] : memref<4x2x1152xbf16, #tpu.memory_space<vmem>>, vector<1x2x1152xbf16>
    %5 = vector.shape_cast %4 : vector<1x2x1152xbf16> to vector<2x1152xbf16>
    %cst_6 = arith.constant dense<0.000000e+00> : vector<2x512xf32>
    %6 = tpu.matmul %5, %0, %cst_6 {dimension_numbers = #tpu.dot_dimension_numbers<[1], [0], [0], [1], [0, 0, 1, 1], [], []>} : vector<2x1152xbf16>, vector<1152x512xbf16>, vector<2x512xf32> -> vector<2x512xf32>
    %7 = arith.maximumf %3, %6 : vector<2x512xf32>
    %c2 = arith.constant 2 : index
    %c0_7 = arith.constant 0 : index
    %c0_8 = arith.constant 0 : index
    %8 = vector.load %arg1[%c2, %c0_7, %c0_8] : memref<4x2x1152xbf16, #tpu.memory_space<vmem>>, vector<1x2x1152xbf16>
    %9 = vector.shape_cast %8 : vector<1x2x1152xbf16> to vector<2x1152xbf16>
    %cst_9 = arith.constant dense<0.000000e+00> : vector<2x512xf32>
    %10 = tpu.matmul %9, %0, %cst_9 {dimension_numbers = #tpu.dot_dimension_numbers<[1], [0], [0], [1], [0, 0, 1, 1], [], []>} : vector<2x1152xbf16>, vector<1152x512xbf16>, vector<2x512xf32> -> vector<2x512xf32>
    %11 = arith.maximumf %7, %10 : vector<2x512xf32>
    %c3 = arith.constant 3 : index
    %c0_10 = arith.constant 0 : index
    %c0_11 = arith.constant 0 : index
    %12 = vector.load %arg1[%c3, %c0_10, %c0_11] : memref<4x2x1152xbf16, #tpu.memory_space<vmem>>, vector<1x2x1152xbf16>
    %13 = vector.shape_cast %12 : vector<1x2x1152xbf16> to vector<2x1152xbf16>
    %cst_12 = arith.constant dense<0.000000e+00> : vector<2x512xf32>
    %14 = tpu.matmul %13, %0, %cst_12 {dimension_numbers = #tpu.dot_dimension_numbers<[1], [0], [0], [1], [0, 0, 1, 1], [], []>} : vector<2x1152xbf16>, vector<1152x512xbf16>, vector<2x512xf32> -> vector<2x512xf32>
    %15 = arith.maximumf %11, %14 : vector<2x512xf32>
    %c0_13 = arith.constant 0 : index
    %c0_14 = arith.constant 0 : index
    %16 = vector.load %arg3[%c0_13, %c0_14] : memref<1x512xf32, #tpu.memory_space<vmem>>, vector<1x512xf32>
    %17 = vector.broadcast %16 : vector<1x512xf32> to vector<2x512xf32>
    %18 = arith.addf %15, %17 : vector<2x512xf32>
    %cst_15 = arith.constant 0.000000e+00 : f32
    %19 = vector.broadcast %cst_15 : f32 to vector<2x512xf32>
    %20 = arith.maximumf %18, %19 : vector<2x512xf32>
    %21 = arith.truncf %20 : vector<2x512xf32> to vector<2x512xbf16>
    %c0_16 = arith.constant 0 : index
    %c0_17 = arith.constant 0 : index
    %22 = vector.load %arg4[%c0_16, %c0_17] : memref<512x512xbf16, #tpu.memory_space<vmem>>, vector<512x512xbf16>
    %cst_18 = arith.constant dense<0.000000e+00> : vector<2x512xf32>
    %23 = tpu.matmul %21, %22, %cst_18 {dimension_numbers = #tpu.dot_dimension_numbers<[1], [0], [0], [1], [0, 0, 1, 1], [], []>} : vector<2x512xbf16>, vector<512x512xbf16>, vector<2x512xf32> -> vector<2x512xf32>
    %c0_19 = arith.constant 0 : index
    %c0_20 = arith.constant 0 : index
    %24 = vector.load %arg5[%c0_19, %c0_20] : memref<1x512xf32, #tpu.memory_space<vmem>>, vector<1x512xf32>
    %25 = vector.broadcast %24 : vector<1x512xf32> to vector<2x512xf32>
    %26 = arith.addf %23, %25 : vector<2x512xf32>
    %cst_21 = arith.constant 0.000000e+00 : f32
    %27 = vector.broadcast %cst_21 : f32 to vector<2x512xf32>
    %28 = arith.maximumf %26, %27 : vector<2x512xf32>
    %29 = arith.truncf %28 : vector<2x512xf32> to vector<2x512xbf16>
    %c0_22 = arith.constant 0 : index
    %c0_23 = arith.constant 0 : index
    %30 = vector.load %arg6[%c0_22, %c0_23] : memref<512x512xbf16, #tpu.memory_space<vmem>>, vector<512x512xbf16>
    %cst_24 = arith.constant dense<0.000000e+00> : vector<2x512xf32>
    %31 = tpu.matmul %29, %30, %cst_24 {dimension_numbers = #tpu.dot_dimension_numbers<[1], [0], [0], [1], [0, 0, 1, 1], [], []>} : vector<2x512xbf16>, vector<512x512xbf16>, vector<2x512xf32> -> vector<2x512xf32>
    %c0_25 = arith.constant 0 : index
    %c0_26 = arith.constant 0 : index
    %32 = vector.load %arg7[%c0_25, %c0_26] : memref<1x512xf32, #tpu.memory_space<vmem>>, vector<1x512xf32>
    %33 = vector.broadcast %32 : vector<1x512xf32> to vector<2x512xf32>
    %34 = arith.addf %31, %33 : vector<2x512xf32>
    %cst_27 = arith.constant 0.000000e+00 : f32
    %35 = vector.broadcast %cst_27 : f32 to vector<2x512xf32>
    %36 = arith.maximumf %34, %35 : vector<2x512xf32>
    %37 = arith.truncf %36 : vector<2x512xf32> to vector<2x512xbf16>
    %c0_28 = arith.constant 0 : index
    %c0_29 = arith.constant 0 : index
    %38 = vector.load %arg8[%c0_28, %c0_29] : memref<512x128xbf16, #tpu.memory_space<vmem>>, vector<512x128xbf16>
    %cst_30 = arith.constant dense<0.000000e+00> : vector<2x128xf32>
    %39 = tpu.matmul %37, %38, %cst_30 {dimension_numbers = #tpu.dot_dimension_numbers<[1], [0], [0], [1], [0, 0, 1, 1], [], []>} : vector<2x512xbf16>, vector<512x128xbf16>, vector<2x128xf32> -> vector<2x128xf32>
    %c0_31 = arith.constant 0 : index
    %c0_32 = arith.constant 0 : index
    %40 = vector.load %arg9[%c0_31, %c0_32] : memref<1x128xf32, #tpu.memory_space<vmem>>, vector<1x128xf32>
    %41 = vector.broadcast %40 : vector<1x128xf32> to vector<2x128xf32>
    %42 = arith.addf %39, %41 : vector<2x128xf32>
    %c0_33 = arith.constant 0 : index
    %c0_34 = arith.constant 0 : index
    %43 = vector.load %arg10[%c0_33, %c0_34] : memref<2x128xf32, #tpu.memory_space<vmem>>, vector<2x128xf32>
    tpu.vector_store %arg10[%c0_33, %c0_34], %42 {strides = array<i32>} : memref<2x128xf32, #tpu.memory_space<vmem>>, vector<2x128xf32>,
    return
  }
  func.func @transform_0(%arg0: i32) -> (i32, i32, i32) {
    %c0_i32 = arith.constant 0 : i32
    %c0_i32_0 = arith.constant 0 : i32
    %c0_i32_1 = arith.constant 0 : i32
    return %c0_i32, %arg0, %c0_i32_0 : i32, i32, i32
  }
  func.func @transform_1(%arg0: i32) -> (i32, i32) {
    %c0_i32 = arith.constant 0 : i32
    %c0_i32_0 = arith.constant 0 : i32
    %c0_i32_1 = arith.constant 0 : i32
    return %c0_i32, %c0_i32_0 : i32, i32
  }
  func.func @transform_2(%arg0: i32) -> (i32, i32) {
    %c0_i32 = arith.constant 0 : i32
    %c0_i32_0 = arith.constant 0 : i32
    %c0_i32_1 = arith.constant 0 : i32
    return %c0_i32, %c0_i32_0 : i32, i32
  }
  func.func @transform_3(%arg0: i32) -> (i32, i32) {
    %c0_i32 = arith.constant 0 : i32
    %c0_i32_0 = arith.constant 0 : i32
    %c0_i32_1 = arith.constant 0 : i32
    return %c0_i32, %c0_i32_0 : i32, i32
  }
  func.func @transform_4(%arg0: i32) -> (i32, i32) {
    %c0_i32 = arith.constant 0 : i32
    %c0_i32_0 = arith.constant 0 : i32
    %c0_i32_1 = arith.constant 0 : i32
    return %c0_i32, %c0_i32_0 : i32, i32
  }
  func.func @transform_5(%arg0: i32) -> (i32, i32) {
    %c0_i32 = arith.constant 0 : i32
    %c0_i32_0 = arith.constant 0 : i32
    %c0_i32_1 = arith.constant 0 : i32
    return %c0_i32, %c0_i32_0 : i32, i32
  }
  func.func @transform_6(%arg0: i32) -> (i32, i32) {
    %c0_i32 = arith.constant 0 : i32
    %c0_i32_0 = arith.constant 0 : i32
    %c0_i32_1 = arith.constant 0 : i32
    return %c0_i32, %c0_i32_0 : i32, i32
  }
  func.func @transform_7(%arg0: i32) -> (i32, i32) {
    %c0_i32 = arith.constant 0 : i32
    %c0_i32_0 = arith.constant 0 : i32
    %c0_i32_1 = arith.constant 0 : i32
    return %c0_i32, %c0_i32_0 : i32, i32
  }
  func.func @transform_8(%arg0: i32) -> (i32, i32) {
    %c0_i32 = arith.constant 0 : i32
    %c0_i32_0 = arith.constant 0 : i32
    %c0_i32_1 = arith.constant 0 : i32
    return %c0_i32, %c0_i32_0 : i32, i32
  }
  func.func @transform_9(%arg0: i32) -> (i32, i32) {
    %c0_i32 = arith.constant 0 : i32
    %c0_i32_0 = arith.constant 0 : i32
    return %arg0, %c0_i32 : i32, i32
  }
}

</mosaic_0001>

<llo_original>
// kernel: vgg_forward.3
$region0: #{vgg_forward.3}
  #allocation0 [shape = 'u32[]', space=smem, size = 0x4, offset = 0x4, fixed_abs, tag = 'smem constant byte address 0x4 - core index']
  #allocation1 [shape = 'u32[144,128]{1,0:T(1,128)}', space=vmem, size = 0x12000, scoped, tag = 'internal scratch']
  %s0 = inlined_call_operand.vmem [shape: bf16[4,32,27], index: 0, kind: input, shape index: {}]
  %s1 = inlined_call_operand.vmem [shape: bf16[27,64], index: 1, kind: input, shape index: {}]
  %s2 = inlined_call_operand.hbm [shape: f32[1,64], index: 2, kind: input, shape index: {}]
  %s3 = inlined_call_operand.vmem [shape: bf16[32,64], index: 3, kind: output, shape index: {}]
  %s4 = sld [smem:[#allocation0]]
  $region26: #{vgg_forward.3} parent=0
    _
  %s6 = ssub.s32 1, %s4
  %s7 = scalar_select 0, %s6, %s4
  $region1: #{vgg_forward.3} parent=0
    #allocation2 [shape = 'u8[512]{0}', space=vmem, size = 0x400, scoped, tag = 'input window, operand 2, single buffered']
    #allocation3 [shape = 's32[1]{0}', space=sflag, size = 0x4, scoped, tag = 'scoped memory for vgg_forward.3']
    %8 = vsyncpa [#allocation3], 0
    // Predicated region
    $region2: #{vgg_forward.3} parent=1 // pred_check
      _
    $region3: #{vgg_forward.3} parent=1 // pred_check_branch
      %10 = sbr.rel (0) target = $region5
    $region4: #{vgg_forward.3} parent=1 // pred_region
      _
    $region5: #{vgg_forward.3} parent=1 // pred_fallthru
      _
    // Predicated region
    $region6: #{vgg_forward.3} parent=1 // pred_check
      _
    $region7: #{vgg_forward.3} parent=1 // pred_check_branch
      %12 = sbr.rel (0) target = $region9
    $region8: #{vgg_forward.3} parent=1 // pred_region
      _
    $region9: #{vgg_forward.3} parent=1 // pred_fallthru
      _
    // Predicated region
    $region10: #{vgg_forward.3} parent=1 // pred_check
      _
    $region11: #{vgg_forward.3} parent=1 // pred_check_branch
      %14 = sbr.rel (0) target = $region13
    $region12: #{vgg_forward.3} parent=1 // pred_region
      %s16 = ssub.s32 16, 16
      %17 = vsyncadd [#allocation3], %s16
      %s19 = sshll.u32 [#allocation2], 4
      %s20 = int_to_ptr.vmem [resolvable:$true] %s19
      %22 = dma.hbm_to_vmem [thread:$0]  %s2, 16, %s20, [#allocation3]
    $region13: #{vgg_forward.3} parent=1 // pred_fallthru
      _
    // Predicated region
    $region14: #{vgg_forward.3} parent=1 // pred_check
      _
    $region15: #{vgg_forward.3} parent=1 // pred_check_branch
      %24 = sbr.rel (0) target = $region17
    $region16: #{vgg_forward.3} parent=1 // pred_region
      %25 = dma.done [#allocation3], 16
    $region17: #{vgg_forward.3} parent=1 // pred_fallthru
      _
    %v27 = vld [vmem:[%s1] sm:$0xf]
    %v28 = vld [vmem:[%s1 + $0x4] sm:$0xf]
    %v29 = vld [vmem:[%s1 + $0x8] sm:$0xf]
    %v30 = vld [vmem:[%s1 + $0xc] sm:$0x3]
    %v31 = vld [vmem:[%s0] sm:$0xf]
    %v32 = vld [vmem:[%s0 + $0x4] sm:$0xf]
    %v33 = vld [vmem:[%s0 + $0x8] sm:$0xf]
    %v34 = vld [vmem:[%s0 + $0xc] sm:$0xf]
    %v35 = vld [vmem:[%s0 + $0x10] sm:$0xf]
    %v36 = vld [vmem:[%s0 + $0x14] sm:$0xf]
    %v37 = vld [vmem:[%s0 + $0x18] sm:$0xf]
    %v38 = vld [vmem:[%s0 + $0x1c] sm:$0xf]
    %v39 = vld [vmem:[%s0 + $0x20] sm:$0xf]
    %v40 = vld [vmem:[%s0 + $0x24] sm:$0xf]
    %v41 = vld [vmem:[%s0 + $0x28] sm:$0xf]
    %v42 = vld [vmem:[%s0 + $0x2c] sm:$0xf]
    %v43 = vld [vmem:[%s0 + $0x30] sm:$0xf]
    %v44 = vld [vmem:[%s0 + $0x34] sm:$0xf]
    %v45 = vld [vmem:[%s0 + $0x38] sm:$0xf]
    %v46 = vld [vmem:[%s0 + $0x3c] sm:$0xf]
    %v63 = vunpack.c.l.b16 %v31
    %v64 = vunpack.c.l.b16 %v32
    %v65 = vunpack.c.l.b16 %v33
    %v66 = vunpack.c.l.b16 %v34
    %v67 = vunpack.c.l.b16 %v35
    %v68 = vunpack.c.l.b16 %v36
    %v69 = vunpack.c.l.b16 %v37
    %v70 = vunpack.c.l.b16 %v38
    %v71 = vunpack.c.l.b16 %v39
    %v72 = vunpack.c.l.b16 %v40
    %v73 = vunpack.c.l.b16 %v41
    %v74 = vunpack.c.l.b16 %v42
    %v75 = vunpack.c.l.b16 %v43
    %v76 = vunpack.c.l.b16 %v44
    %v77 = vunpack.c.l.b16 %v45
    %v78 = vunpack.c.l.b16 %v46
    %v79 = vpack.c.b16 %v64, %v63
    %v80 = vpack.c.b16 %v66, %v65
    %v81 = vpack.c.b16 %v68, %v67
    %v82 = vpack.c.b16 %v70, %v69
    %v83 = vpack.c.b16 %v72, %v71
    %v84 = vpack.c.b16 %v74, %v73
    %v85 = vpack.c.b16 %v76, %v75
    %v86 = vpack.c.b16 %v78, %v77
    %v91 = vunpack.c.l.b16 %v27
    %v92 = vunpack.c.l.b16 %v28
    %v93 = vunpack.c.l.b16 %v29
    %v94 = vunpack.c.l.b16 %v30
    %v95 = vpack.c.b16 %v92, %v91
    %v96 = vpack.c.b16 %v94, %v93
    %vm98 = vcmask 220160
    %v100 = vsel %vm98, %v79, 0
    %v103 = vsel %vm98, %v80, 0
    %v106 = vsel %vm98, %v81, 0
    %v109 = vsel %vm98, %v82, 0
    %v112 = vsel %vm98, %v83, 0
    %v115 = vsel %vm98, %v84, 0
    %v118 = vsel %vm98, %v85, 0
    %v121 = vsel %vm98, %v86, 0
    %vm123 = vcmask 1044480
    %vm124 = vcmask 1045504
    %v125 = vsel %vm123, 4294967295, 65535
    %v126 = vsel %vm124, %v125, 0
    %v128 = vand.u32 %v96, %v126
    %130 = vmatprep.subr.bf16.mxu0 0
    %131 = vmatpush1.bf16.msra.mxu0 %v95
    %132 = vmatprep.subr.bf16.mxu0 0
    %133 = vmatpush1.bf16.msra.mxu0 %v128
    %134 = vmatprep.subr.bf16.mxu0 0
    %135 = vmatpush1.bf16.msra.mxu0 0
    %136 = vmatprep.subr.bf16.mxu0 0
    %137 = vmatpush1.bf16.msra.mxu0 0
    %138 = vmatprep.subr.bf16.mxu0 0
    %139 = vmatpush1.bf16.msra.mxu0 0
    %140 = vmatprep.subr.bf16.mxu0 0
    %141 = vmatpush1.bf16.msra.mxu0 0
    %142 = vmatprep.subr.bf16.mxu0 0
    %143 = vmatpush1.bf16.msra.mxu0 0
    %144 = vmatprep.subr.bf16.mxu0 0
    %145 = vmatpush1.bf16.msra.mxu0 0
    %146 = vmatprep.subr.bf16.mxu0 0
    %147 = vmatpush1.bf16.msra.mxu0 0
    %148 = vmatprep.subr.bf16.mxu0 0
    %149 = vmatpush1.bf16.msra.mxu0 0
    %150 = vmatprep.subr.bf16.mxu0 0
    %151 = vmatpush1.bf16.msra.mxu0 0
    %152 = vmatprep.subr.bf16.mxu0 0
    %153 = vmatpush1.bf16.msra.mxu0 0
    %154 = vmatprep.subr.bf16.mxu0 0
    %155 = vmatpush1.bf16.msra.mxu0 0
    %156 = vmatprep.subr.bf16.mxu0 0
    %157 = vmatpush1.bf16.msra.mxu0 0
    %158 = vmatprep.subr.bf16.mxu0 0
    %159 = vmatpush1.bf16.msra.mxu0 0
    %160 = vmatprep.subr.bf16.mxu0 0
    %161 = vmatpush1.bf16.msra.mxu0 0
    %162 = vmatprep.mubr.bf16.mxu0 0
    %163 = vmatmul.mubr.bf16.gmra.mrb[0].mxu0 %v100
    %v164 = vpop.f32.mrb[0].mxu0
    %v165 = vadd.f32 0.0, %v164
    %v166 = vpop.f32.mrb[0].mxu0
    %v167 = vpop.f32.mrb[0].mxu0
    %v168 = vadd.f32 0.0, %v167
    %v169 = vpop.f32.mrb[0].mxu0
    %170 = vmatprep.mubr.bf16.mxu0 0
    %171 = vmatmul.mubr.bf16.gmra.mrb[0].mxu0 %v103
    %v172 = vpop.f32.mrb[0].mxu0
    %v173 = vadd.f32 0.0, %v172
    %v174 = vpop.f32.mrb[0].mxu0
    %v175 = vpop.f32.mrb[0].mxu0
    %v176 = vadd.f32 0.0, %v175
    %v177 = vpop.f32.mrb[0].mxu0
    %178 = vmatprep.mubr.bf16.mxu0 0
    %179 = vmatmul.mubr.bf16.gmra.mrb[0].mxu0 %v106
    %v180 = vpop.f32.mrb[0].mxu0
    %v181 = vadd.f32 0.0, %v180
    %v182 = vpop.f32.mrb[0].mxu0
    %v183 = vpop.f32.mrb[0].mxu0
    %v184 = vadd.f32 0.0, %v183
    %v185 = vpop.f32.mrb[0].mxu0
    %186 = vmatprep.mubr.bf16.mxu0 0
    %187 = vmatmul.mubr.bf16.gmra.mrb[0].mxu0 %v109
    %v188 = vpop.f32.mrb[0].mxu0
    %v189 = vadd.f32 0.0, %v188
    %v190 = vpop.f32.mrb[0].mxu0
    %v191 = vpop.f32.mrb[0].mxu0
    %v192 = vadd.f32 0.0, %v191
    %v193 = vpop.f32.mrb[0].mxu0
    %194 = vmatprep.mubr.bf16.mxu0 0
    %195 = vmatmul.mubr.bf16.gmra.mrb[0].mxu0 %v112
    %v196 = vpop.f32.mrb[0].mxu0
    %v197 = vadd.f32 0.0, %v196
    %v198 = vpop.f32.mrb[0].mxu0
    %v199 = vpop.f32.mrb[0].mxu0
    %v200 = vadd.f32 0.0, %v199
    %v201 = vpop.f32.mrb[0].mxu0
    %202 = vmatprep.mubr.bf16.mxu0 0
    %203 = vmatmul.mubr.bf16.gmra.mrb[0].mxu0 %v115
    %v204 = vpop.f32.mrb[0].mxu0
    %v205 = vadd.f32 0.0, %v204
    %v206 = vpop.f32.mrb[0].mxu0
    %v207 = vpop.f32.mrb[0].mxu0
    %v208 = vadd.f32 0.0, %v207
    %v209 = vpop.f32.mrb[0].mxu0
    %210 = vmatprep.mubr.bf16.mxu0 0
    %211 = vmatmul.mubr.bf16.gmra.mrb[0].mxu0 %v118
    %v212 = vpop.f32.mrb[0].mxu0
    %v213 = vadd.f32 0.0, %v212
    %v214 = vpop.f32.mrb[0].mxu0
    %v215 = vpop.f32.mrb[0].mxu0
    %v216 = vadd.f32 0.0, %v215
    %v217 = vpop.f32.mrb[0].mxu0
    %218 = vmatprep.mubr.bf16.mxu0 0
    %219 = vmatmul.mubr.bf16.gmra.mrb[0].mxu0 %v121
    %v220 = vpop.f32.mrb[0].mxu0
    %v221 = vadd.f32 0.0, %v220
    %v222 = vpop.f32.mrb[0].mxu0
    %v223 = vpop.f32.mrb[0].mxu0
    %v224 = vadd.f32 0.0, %v223
    %v225 = vpop.f32.mrb[0].mxu0
    %226 = vdwg.mxu0
    %v227 = vmax.f32 %v165, %v181
    %v228 = vmax.f32 %v168, %v184
    %v229 = vmax.f32 %v173, %v189
    %v230 = vmax.f32 %v176, %v192
    %v231 = vmax.f32 %v197, %v213
    %v232 = vmax.f32 %v200, %v216
    %v233 = vmax.f32 %v205, %v221
    %v234 = vmax.f32 %v208, %v224
    %v235 = vmax.f32 %v227, %v231
    %v236 = vmax.f32 %v228, %v232
    %v237 = vmax.f32 %v229, %v233
    %v238 = vmax.f32 %v230, %v234
    %v239 = vld [vmem:[#allocation2] sm:$0x1]
    %v241 = vlaneseq
    %v242 = vshrl.u32 %v241, 7
    %v243 = vsub.s32 0, %v242
    %v244 = vrot.slane %v239, %v243
    %v246 = vadd.f32 %v235, %v244
    %v247 = vadd.f32 %v236, %v244
    %v248 = vadd.f32 %v237, %v244
    %v249 = vadd.f32 %v238, %v244
    %v250 = vmax.f32 %v246, 0.0
    %v251 = vmax.f32 %v247, 0.0
    %v252 = vmax.f32 %v248, 0.0
    %v253 = vmax.f32 %v249, 0.0
    %v254 = vpack.c.bf16 %v251, %v250
    %v255 = vpack.c.bf16 %v253, %v252
    %v258 = vunpack.c.l.b16 %v254
    %v259 = vunpack.c.h.b16 %v254
    %v260 = vunpack.c.l.b16 %v255
    %v261 = vunpack.c.h.b16 %v255
    %v262 = vpack.c.b16 %v258, %v258
    %v263 = vpack.c.b16 %v259, %v259
    %v264 = vpack.c.b16 %v260, %v260
    %v265 = vpack.c.b16 %v261, %v261
    %vm270 = vcmask 519168
    %271 = vst.msk [vmem:[%s3] sm:$0xf] %vm270, %v262
    %272 = vst.msk [vmem:[%s3 + $0x4] sm:$0xf] %vm270, %v263
    %273 = vst.msk [vmem:[%s3 + $0x8] sm:$0xf] %vm270, %v264
    %274 = vst.msk [vmem:[%s3 + $0xc] sm:$0xf] %vm270, %v265
    // Predicated region
    $region18: #{vgg_forward.3} parent=1 // pred_check
      _
    $region19: #{vgg_forward.3} parent=1 // pred_check_branch
      %276 = sbr.rel (0) target = $region21
    $region20: #{vgg_forward.3} parent=1 // pred_region
      _
    $region21: #{vgg_forward.3} parent=1 // pred_fallthru
      _
    // Predicated region
    $region22: #{vgg_forward.3} parent=1 // pred_check
      _
    $region23: #{vgg_forward.3} parent=1 // pred_check_branch
      %278 = sbr.rel (0) target = $region25
    $region24: #{vgg_forward.3} parent=1 // pred_region
      _
    $region25: #{vgg_forward.3} parent=1 // pred_fallthru
      _
    %279 = vsyncpa [#allocation3], 1

// kernel: vgg_forward.4
$region0: #{vgg_forward.4}
  #allocation0 [shape = 'u32[]', space=smem, size = 0x4, offset = 0x4, fixed_abs, tag = 'smem constant byte address 0x4 - core index']
  #allocation1 [shape = 'u32[144,128]{1,0:T(1,128)}', space=vmem, size = 0x12000, scoped, tag = 'internal scratch']
  %s0 = inlined_call_operand.vmem [shape: bf16[4,8,576], index: 0, kind: input, shape index: {}]
  %s1 = inlined_call_operand.vmem [shape: bf16[576,128], index: 1, kind: input, shape index: {}]
  %s2 = inlined_call_operand.vmem [shape: f32[1,128], index: 2, kind: input, shape index: {}]
  %s3 = inlined_call_operand.vmem [shape: bf16[8,128], index: 3, kind: output, shape index: {}]
  %s4 = sld [smem:[#allocation0]]
  $region22: #{vgg_forward.4} parent=0
    _
  %s6 = ssub.s32 1, %s4
  %s7 = scalar_select 0, %s6, %s4
  // Predicated region
  $region2: #{vgg_forward.4} parent=0 // pred_check
    _
  $region3: #{vgg_forward.4} parent=0 // pred_check_branch
    %9 = sbr.rel (0) target = $region5
  $region4: #{vgg_forward.4} parent=0 // pred_region
    _
  $region5: #{vgg_forward.4} parent=0 // pred_fallthru
    _
  // Predicated region
  $region6: #{vgg_forward.4} parent=0 // pred_check
    _
  $region7: #{vgg_forward.4} parent=0 // pred_check_branch
    %11 = sbr.rel (0) target = $region9
  $region8: #{vgg_forward.4} parent=0 // pred_region
    _
  $region9: #{vgg_forward.4} parent=0 // pred_fallthru
    _
  // Predicated region
  $region10: #{vgg_forward.4} parent=0 // pred_check
    _
  $region11: #{vgg_forward.4} parent=0 // pred_check_branch
    %13 = sbr.rel (0) target = $region13
  $region12: #{vgg_forward.4} parent=0 // pred_region
    _
  $region13: #{vgg_forward.4} parent=0 // pred_fallthru
    _
  %v15 = vld [vmem:[%s1] sm:$0xf]
  %v16 = vld [vmem:[%s1 + $0x4] sm:$0xf]
  %v17 = vld [vmem:[%s1 + $0x8] sm:$0xf]
  %v18 = vld [vmem:[%s1 + $0xc] sm:$0xf]
  %v19 = vld [vmem:[%s1 + $0x10] sm:$0xf]
  %v20 = vld [vmem:[%s1 + $0x14] sm:$0xf]
  %v21 = vld [vmem:[%s1 + $0x18] sm:$0xf]
  %v22 = vld [vmem:[%s1 + $0x1c] sm:$0xf]
  %v23 = vld [vmem:[%s1 + $0x20] sm:$0xf]
  %v24 = vld [vmem:[%s1 + $0x24] sm:$0xf]
  %v25 = vld [vmem:[%s1 + $0x28] sm:$0xf]
  %v26 = vld [vmem:[%s1 + $0x2c] sm:$0xf]
  %v27 = vld [vmem:[%s1 + $0x30] sm:$0xf]
  %v28 = vld [vmem:[%s1 + $0x34] sm:$0xf]
  %v29 = vld [vmem:[%s1 + $0x38] sm:$0xf]
  %v30 = vld [vmem:[%s1 + $0x3c] sm:$0xf]
  %v31 = vld [vmem:[%s1 + $0x40] sm:$0xf]
  %v32 = vld [vmem:[%s1 + $0x44] sm:$0xf]
  %v33 = vld [vmem:[%s1 + $0x48] sm:$0xf]
  %v34 = vld [vmem:[%s1 + $0x4c] sm:$0xf]
  %v35 = vld [vmem:[%s1 + $0x50] sm:$0xf]
  %v36 = vld [vmem:[%s1 + $0x54] sm:$0xf]
  %v37 = vld [vmem:[%s1 + $0x58] sm:$0xf]
  %v38 = vld [vmem:[%s1 + $0x5c] sm:$0xf]
  %v39 = vld [vmem:[%s1 + $0x60] sm:$0xf]
  %v40 = vld [vmem:[%s1 + $0x64] sm:$0xf]
  %v41 = vld [vmem:[%s1 + $0x68] sm:$0xf]
  %v42 = vld [vmem:[%s1 + $0x6c] sm:$0xf]
  %v43 = vld [vmem:[%s1 + $0x70] sm:$0xf]
  %v44 = vld [vmem:[%s1 + $0x74] sm:$0xf]
  %v45 = vld [vmem:[%s1 + $0x78] sm:$0xf]
  %v46 = vld [vmem:[%s1 + $0x7c] sm:$0xf]
  %v47 = vld [vmem:[%s1 + $0x80] sm:$0xf]
  %v48 = vld [vmem:[%s1 + $0x84] sm:$0xf]
  %v49 = vld [vmem:[%s1 + $0x88] sm:$0xf]
  %v50 = vld [vmem:[%s1 + $0x8c] sm:$0xf]
  %v51 = vld [vmem:[%s1 + $0x90] sm:$0xf]
  %v52 = vld [vmem:[%s1 + $0x94] sm:$0xf]
  %v53 = vld [vmem:[%s1 + $0x98] sm:$0xf]
  %v54 = vld [vmem:[%s1 + $0x9c] sm:$0xf]
  %v55 = vld [vmem:[%s1 + $0xa0] sm:$0xf]
  %v56 = vld [vmem:[%s1 + $0xa4] sm:$0xf]
  %v57 = vld [vmem:[%s1 + $0xa8] sm:$0xf]
  %v58 = vld [vmem:[%s1 + $0xac] sm:$0xf]
  %v59 = vld [vmem:[%s1 + $0xb0] sm:$0xf]
  %v60 = vld [vmem:[%s1 + $0xb4] sm:$0xf]
  %v61 = vld [vmem:[%s1 + $0xb8] sm:$0xf]
  %v62 = vld [vmem:[%s1 + $0xbc] sm:$0xf]
  %v63 = vld [vmem:[%s1 + $0xc0] sm:$0xf]
  %v64 = vld [vmem:[%s1 + $0xc4] sm:$0xf]
  %v65 = vld [vmem:[%s1 + $0xc8] sm:$0xf]
  %v66 = vld [vmem:[%s1 + $0xcc] sm:$0xf]
  %v67 = vld [vmem:[%s1 + $0xd0] sm:$0xf]
  %v68 = vld [vmem:[%s1 + $0xd4] sm:$0xf]
  %v69 = vld [vmem:[%s1 + $0xd8] sm:$0xf]
  %v70 = vld [vmem:[%s1 + $0xdc] sm:$0xf]
  %v71 = vld [vmem:[%s1 + $0xe0] sm:$0xf]
  %v72 = vld [vmem:[%s1 + $0xe4] sm:$0xf]
  %v73 = vld [vmem:[%s1 + $0xe8] sm:$0xf]
  %v74 = vld [vmem:[%s1 + $0xec] sm:$0xf]
  %v75 = vld [vmem:[%s1 + $0xf0] sm:$0xf]
  %v76 = vld [vmem:[%s1 + $0xf4] sm:$0xf]
  %v77 = vld [vmem:[%s1 + $0xf8] sm:$0xf]
  %v78 = vld [vmem:[%s1 + $0xfc] sm:$0xf]
  %v79 = vld [vmem:[%s1 + $0x100] sm:$0xf]
  %v80 = vld [vmem:[%s1 + $0x104] sm:$0xf]
  %v81 = vld [vmem:[%s1 + $0x108] sm:$0xf]
  %v82 = vld [vmem:[%s1 + $0x10c] sm:$0xf]
  %v83 = vld [vmem:[%s1 + $0x110] sm:$0xf]
  %v84 = vld [vmem:[%s1 + $0x114] sm:$0xf]
  %v85 = vld [vmem:[%s1 + $0x118] sm:$0xf]
  %v86 = vld [vmem:[%s1 + $0x11c] sm:$0xf]
  %v87 = vld [vmem:[%s0] sm:$0xff]
  %v88 = vld [vmem:[%s0 + $0x8] sm:$0xff]
  %v89 = vld [vmem:[%s0 + $0x10] sm:$0xf]
  %v90 = vld [vmem:[%s0 + $0x14] sm:$0xff]
  %v91 = vld [vmem:[%s0 + $0x1c] sm:$0xff]
  %v92 = vld [vmem:[%s0 + $0x24] sm:$0xf]
  %v93 = vld [vmem:[%s0 + $0x28] sm:$0xff]
  %v94 = vld [vmem:[%s0 + $0x30] sm:$0xff]
  %v95 = vld [vmem:[%s0 + $0x38] sm:$0xf]
  %v96 = vld [vmem:[%s0 + $0x3c] sm:$0xff]
  %v97 = vld [vmem:[%s0 + $0x44] sm:$0xff]
  %v98 = vld [vmem:[%s0 + $0x4c] sm:$0xf]
  %v111 = vunpack.c.l.b16 %v87
  %v112 = vunpack.c.h.b16 %v87
  %v113 = vunpack.c.l.b16 %v88
  %v114 = vunpack.c.h.b16 %v88
  %v115 = vunpack.c.l.b16 %v89
  %v116 = vunpack.c.l.b16 %v90
  %v117 = vunpack.c.h.b16 %v90
  %v118 = vunpack.c.l.b16 %v91
  %v119 = vunpack.c.h.b16 %v91
  %v120 = vunpack.c.l.b16 %v92
  %v121 = vunpack.c.l.b16 %v93
  %v122 = vunpack.c.h.b16 %v93
  %v123 = vunpack.c.l.b16 %v94
  %v124 = vunpack.c.h.b16 %v94
  %v125 = vunpack.c.l.b16 %v95
  %v126 = vunpack.c.l.b16 %v96
  %v127 = vunpack.c.h.b16 %v96
  %v128 = vunpack.c.l.b16 %v97
  %v129 = vunpack.c.h.b16 %v97
  %v130 = vunpack.c.l.b16 %v98
  %v131 = vpack.c.b16 %v116, %v111
  %v132 = vpack.c.b16 %v117, %v112
  %v133 = vpack.c.b16 %v118, %v113
  %v134 = vpack.c.b16 %v119, %v114
  %v135 = vpack.c.b16 %v120, %v115
  %v136 = vpack.c.b16 %v126, %v121
  %v137 = vpack.c.b16 %v127, %v122
  %v138 = vpack.c.b16 %v128, %v123
  %v139 = vpack.c.b16 %v129, %v124
  %v140 = vpack.c.b16 %v130, %v125
  %v221 = vunpack.c.l.b16 %v15
  %v222 = vunpack.c.l.b16 %v16
  %v223 = vunpack.c.l.b16 %v17
  %v224 = vunpack.c.l.b16 %v18
  %v225 = vunpack.c.l.b16 %v19
  %v226 = vunpack.c.l.b16 %v20
  %v227 = vunpack.c.l.b16 %v21
  %v228 = vunpack.c.l.b16 %v22
  %v229 = vunpack.c.l.b16 %v23
  %v230 = vunpack.c.l.b16 %v24
  %v231 = vunpack.c.l.b16 %v25
  %v232 = vunpack.c.l.b16 %v26
  %v233 = vunpack.c.l.b16 %v27
  %v234 = vunpack.c.l.b16 %v28
  %v235 = vunpack.c.l.b16 %v29
  %v236 = vunpack.c.l.b16 %v30
  %v237 = vunpack.c.l.b16 %v31
  %v238 = vunpack.c.l.b16 %v32
  %v239 = vunpack.c.l.b16 %v33
  %v240 = vunpack.c.l.b16 %v34
  %v241 = vunpack.c.l.b16 %v35
  %v242 = vunpack.c.l.b16 %v36
  %v243 = vunpack.c.l.b16 %v37
  %v244 = vunpack.c.l.b16 %v38
  %v245 = vunpack.c.l.b16 %v39
  %v246 = vunpack.c.l.b16 %v40
  %v247 = vunpack.c.l.b16 %v41
  %v248 = vunpack.c.l.b16 %v42
  %v249 = vunpack.c.l.b16 %v43
  %v250 = vunpack.c.l.b16 %v44
  %v251 = vunpack.c.l.b16 %v45
  %v252 = vunpack.c.l.b16 %v46
  %v253 = vunpack.c.l.b16 %v47
  %v254 = vunpack.c.l.b16 %v48
  %v255 = vunpack.c.l.b16 %v49
  %v256 = vunpack.c.l.b16 %v50
  %v257 = vunpack.c.l.b16 %v51
  %v258 = vunpack.c.l.b16 %v52
  %v259 = vunpack.c.l.b16 %v53
  %v260 = vunpack.c.l.b16 %v54
  %v261 = vunpack.c.l.b16 %v55
  %v262 = vunpack.c.l.b16 %v56
  %v263 = vunpack.c.l.b16 %v57
  %v264 = vunpack.c.l.b16 %v58
  %v265 = vunpack.c.l.b16 %v59
  %v266 = vunpack.c.l.b16 %v60
  %v267 = vunpack.c.l.b16 %v61
  %v268 = vunpack.c.l.b16 %v62
  %v269 = vunpack.c.l.b16 %v63
  %v270 = vunpack.c.l.b16 %v64
  %v271 = vunpack.c.l.b16 %v65
  %v272 = vunpack.c.l.b16 %v66
  %v273 = vunpack.c.l.b16 %v67
  %v274 = vunpack.c.l.b16 %v68
  %v275 = vunpack.c.l.b16 %v69
  %v276 = vunpack.c.l.b16 %v70
  %v277 = vunpack.c.l.b16 %v71
  %v278 = vunpack.c.l.b16 %v72
  %v279 = vunpack.c.l.b16 %v73
  %v280 = vunpack.c.l.b16 %v74
  %v281 = vunpack.c.l.b16 %v75
  %v282 = vunpack.c.l.b16 %v76
  %v283 = vunpack.c.l.b16 %v77
  %v284 = vunpack.c.l.b16 %v78
  %v285 = vunpack.c.l.b16 %v79
  %v286 = vunpack.c.l.b16 %v80
  %v287 = vunpack.c.l.b16 %v81
  %v288 = vunpack.c.l.b16 %v82
  %v289 = vunpack.c.l.b16 %v83
  %v290 = vunpack.c.l.b16 %v84
  %v291 = vunpack.c.l.b16 %v85
  %v292 = vunpack.c.l.b16 %v86
  %v293 = vpack.c.b16 %v222, %v221
  %v294 = vpack.c.b16 %v224, %v223
  %v295 = vpack.c.b16 %v226, %v225
  %v296 = vpack.c.b16 %v228, %v227
  %v297 = vpack.c.b16 %v230, %v229
  %v298 = vpack.c.b16 %v232, %v231
  %v299 = vpack.c.b16 %v234, %v233
  %v300 = vpack.c.b16 %v236, %v235
  %v301 = vpack.c.b16 %v238, %v237
  %v302 = vpack.c.b16 %v240, %v239
  %v303 = vpack.c.b16 %v242, %v241
  %v304 = vpack.c.b16 %v244, %v243
  %v305 = vpack.c.b16 %v246, %v245
  %v306 = vpack.c.b16 %v248, %v247
  %v307 = vpack.c.b16 %v250, %v249
  %v308 = vpack.c.b16 %v252, %v251
  %v309 = vpack.c.b16 %v254, %v253
  %v310 = vpack.c.b16 %v256, %v255
  %v311 = vpack.c.b16 %v258, %v257
  %v312 = vpack.c.b16 %v260, %v259
  %v313 = vpack.c.b16 %v262, %v261
  %v314 = vpack.c.b16 %v264, %v263
  %v315 = vpack.c.b16 %v266, %v265
  %v316 = vpack.c.b16 %v268, %v267
  %v317 = vpack.c.b16 %v270, %v269
  %v318 = vpack.c.b16 %v272, %v271
  %v319 = vpack.c.b16 %v274, %v273
  %v320 = vpack.c.b16 %v276, %v275
  %v321 = vpack.c.b16 %v278, %v277
  %v322 = vpack.c.b16 %v280, %v279
  %v323 = vpack.c.b16 %v282, %v281
  %v324 = vpack.c.b16 %v284, %v283
  %v325 = vpack.c.b16 %v286, %v285
  %v326 = vpack.c.b16 %v288, %v287
  %v327 = vpack.c.b16 %v290, %v289
  %v328 = vpack.c.b16 %v292, %v291
  %vm365 = vcmask 523264
  %v367 = vsel %vm365, %v135, 0
  %v370 = vsel %vm365, %v140, 0
  %372 = vmatprep.subr.bf16.mxu0 0
  %373 = vmatpush1.bf16.msra.mxu0 %v293
  %374 = vmatprep.subr.bf16.mxu0 0
  %375 = vmatpush1.bf16.msra.mxu0 %v294
  %376 = vmatprep.subr.bf16.mxu0 0
  %377 = vmatpush1.bf16.msra.mxu0 %v295
  %378 = vmatprep.subr.bf16.mxu0 0
  %379 = vmatpush1.bf16.msra.mxu0 %v296
  %380 = vmatprep.subr.bf16.mxu0 0
  %381 = vmatpush1.bf16.msra.mxu0 %v297
  %382 = vmatprep.subr.bf16.mxu0 0
  %383 = vmatpush1.bf16.msra.mxu0 %v298
  %384 = vmatprep.subr.bf16.mxu0 0
  %385 = vmatpush1.bf16.msra.mxu0 %v299
  %386 = vmatprep.subr.bf16.mxu0 0
  %387 = vmatpush1.bf16.msra.mxu0 %v300
  %388 = vmatprep.subr.bf16.mxu0 0
  %389 = vmatpush1.bf16.msra.mxu0 %v301
  %390 = vmatprep.subr.bf16.mxu0 0
  %391 = vmatpush1.bf16.msra.mxu0 %v302
  %392 = vmatprep.subr.bf16.mxu0 0
  %393 = vmatpush1.bf16.msra.mxu0 %v303
  %394 = vmatprep.subr.bf16.mxu0 0
  %395 = vmatpush1.bf16.msra.mxu0 %v304
  %396 = vmatprep.subr.bf16.mxu0 0
  %397 = vmatpush1.bf16.msra.mxu0 %v305
  %398 = vmatprep.subr.bf16.mxu0 0
  %399 = vmatpush1.bf16.msra.mxu0 %v306
  %400 = vmatprep.subr.bf16.mxu0 0
  %401 = vmatpush1.bf16.msra.mxu0 %v307
  %402 = vmatprep.subr.bf16.mxu0 0
  %403 = vmatpush1.bf16.msra.mxu0 %v308
  %404 = vmatprep.mubr.bf16.mxu0 %v132
  %405 = vmatmul.mubr.bf16.gmra.mrb[0].mxu0 %v131
  %v406 = vpop.f32.mrb[0].mxu0
  %v407 = vadd.f32 0.0, %v406
  %v408 = vpop.f32.mrb[0].mxu0
  %v409 = vpop.f32.mrb[0].mxu0
  %v410 = vadd.f32 0.0, %v409
  %v411 = vpop.f32.mrb[0].mxu0
  %412 = vmatprep.mubr.bf16.mxu0 %v137
  %413 = vmatmul.mubr.bf16.gmra.mrb[0].mxu0 %v136
  %v414 = vpop.f32.mrb[0].mxu0
  %v415 = vadd.f32 0.0, %v414
  %v416 = vpop.f32.mrb[0].mxu0
  %v417 = vpop.f32.mrb[0].mxu0
  %v418 = vadd.f32 0.0, %v417
  %v419 = vpop.f32.mrb[0].mxu0
  %420 = vdwg.mxu0
  %421 = vmatprep.subr.bf16.mxu0 0
  %422 = vmatpush1.bf16.msra.mxu0 %v309
  %423 = vmatprep.subr.bf16.mxu0 0
  %424 = vmatpush1.bf16.msra.mxu0 %v310
  %425 = vmatprep.subr.bf16.mxu0 0
  %426 = vmatpush1.bf16.msra.mxu0 %v311
  %427 = vmatprep.subr.bf16.mxu0 0
  %428 = vmatpush1.bf16.msra.mxu0 %v312
  %429 = vmatprep.subr.bf16.mxu0 0
  %430 = vmatpush1.bf16.msra.mxu0 %v313
  %431 = vmatprep.subr.bf16.mxu0 0
  %432 = vmatpush1.bf16.msra.mxu0 %v314
  %433 = vmatprep.subr.bf16.mxu0 0
  %434 = vmatpush1.bf16.msra.mxu0 %v315
  %435 = vmatprep.subr.bf16.mxu0 0
  %436 = vmatpush1.bf16.msra.mxu0 %v316
  %437 = vmatprep.subr.bf16.mxu0 0
  %438 = vmatpush1.bf16.msra.mxu0 %v317
  %439 = vmatprep.subr.bf16.mxu0 0
  %440 = vmatpush1.bf16.msra.mxu0 %v318
  %441 = vmatprep.subr.bf16.mxu0 0
  %442 = vmatpush1.bf16.msra.mxu0 %v319
  %443 = vmatprep.subr.bf16.mxu0 0
  %444 = vmatpush1.bf16.msra.mxu0 %v320
  %445 = vmatprep.subr.bf16.mxu0 0
  %446 = vmatpush1.bf16.msra.mxu0 %v321
  %447 = vmatprep.subr.bf16.mxu0 0
  %448 = vmatpush1.bf16.msra.mxu0 %v322
  %449 = vmatprep.subr.bf16.mxu0 0
  %450 = vmatpush1.bf16.msra.mxu0 %v323
  %451 = vmatprep.subr.bf16.mxu0 0
  %452 = vmatpush1.bf16.msra.mxu0 %v324
  %453 = vmatprep.mubr.bf16.mxu0 %v134
  %454 = vmatmul.mubr.bf16.gmra.mrb[0].mxu0 %v133
  %v455 = vpop.f32.mrb[0].mxu0
  %v456 = vadd.f32 %v407, %v455
  %v457 = vpop.f32.mrb[0].mxu0
  %v458 = vpop.f32.mrb[0].mxu0
  %v459 = vadd.f32 %v410, %v458
  %v460 = vpop.f32.mrb[0].mxu0
  %461 = vmatprep.mubr.bf16.mxu0 %v139
  %462 = vmatmul.mubr.bf16.gmra.mrb[0].mxu0 %v138
  %v463 = vpop.f32.mrb[0].mxu0
  %v464 = vadd.f32 %v415, %v463
  %v465 = vpop.f32.mrb[0].mxu0
  %v466 = vpop.f32.mrb[0].mxu0
  %v467 = vadd.f32 %v418, %v466
  %v468 = vpop.f32.mrb[0].mxu0
  %469 = vdwg.mxu0
  %470 = vmatprep.subr.bf16.mxu0 0
  %471 = vmatpush1.bf16.msra.mxu0 %v325
  %472 = vmatprep.subr.bf16.mxu0 0
  %473 = vmatpush1.bf16.msra.mxu0 %v326
  %474 = vmatprep.subr.bf16.mxu0 0
  %475 = vmatpush1.bf16.msra.mxu0 %v327
  %476 = vmatprep.subr.bf16.mxu0 0
  %477 = vmatpush1.bf16.msra.mxu0 %v328
  %478 = vmatprep.subr.bf16.mxu0 0
  %479 = vmatpush1.bf16.msra.mxu0 0
  %480 = vmatprep.subr.bf16.mxu0 0
  %481 = vmatpush1.bf16.msra.mxu0 0
  %482 = vmatprep.subr.bf16.mxu0 0
  %483 = vmatpush1.bf16.msra.mxu0 0
  %484 = vmatprep.subr.bf16.mxu0 0
  %485 = vmatpush1.bf16.msra.mxu0 0
  %486 = vmatprep.subr.bf16.mxu0 0
  %487 = vmatpush1.bf16.msra.mxu0 0
  %488 = vmatprep.subr.bf16.mxu0 0
  %489 = vmatpush1.bf16.msra.mxu0 0
  %490 = vmatprep.subr.bf16.mxu0 0
  %491 = vmatpush1.bf16.msra.mxu0 0
  %492 = vmatprep.subr.bf16.mxu0 0
  %493 = vmatpush1.bf16.msra.mxu0 0
  %494 = vmatprep.subr.bf16.mxu0 0
  %495 = vmatpush1.bf16.msra.mxu0 0
  %496 = vmatprep.subr.bf16.mxu0 0
  %497 = vmatpush1.bf16.msra.mxu0 0
  %498 = vmatprep.subr.bf16.mxu0 0
  %499 = vmatpush1.bf16.msra.mxu0 0
  %500 = vmatprep.subr.bf16.mxu0 0
  %501 = vmatpush1.bf16.msra.mxu0 0
  %502 = vmatprep.mubr.bf16.mxu0 0
  %503 = vmatmul.mubr.bf16.gmra.mrb[0].mxu0 %v367
  %v504 = vpop.f32.mrb[0].mxu0
  %v505 = vadd.f32 %v456, %v504
  %v506 = vpop.f32.mrb[0].mxu0
  %v507 = vpop.f32.mrb[0].mxu0
  %v508 = vadd.f32 %v459, %v507
  %v509 = vpop.f32.mrb[0].mxu0
  %510 = vmatprep.mubr.bf16.mxu0 0
  %511 = vmatmul.mubr.bf16.gmra.mrb[0].mxu0 %v370
  %v512 = vpop.f32.mrb[0].mxu0
  %v513 = vadd.f32 %v464, %v512
  %v514 = vpop.f32.mrb[0].mxu0
  %v515 = vpop.f32.mrb[0].mxu0
  %v516 = vadd.f32 %v467, %v515
  %v517 = vpop.f32.mrb[0].mxu0
  %518 = vdwg.mxu0
  %v519 = vmax.f32 %v505, %v508
  %v520 = vmax.f32 %v513, %v516
  %v521 = vmax.f32 %v519, %v520
  %v522 = vld [vmem:[%s2] sm:$0x1]
  %v524 = vlaneseq
  %v525 = vshrl.u32 %v524, 7
  %v526 = vsub.s32 0, %v525
  %v527 = vrot.slane %v522, %v526
  %v529 = vadd.f32 %v521, %v527
  %v530 = vmax.f32 %v529, 0.0
  %v531 = vpack.c.bf16 %v530, %v530
  %532 = vst [vmem:[%s3] sm:$0xf] %v531
  // Predicated region
  $region14: #{vgg_forward.4} parent=0 // pred_check
    _
  $region15: #{vgg_forward.4} parent=0 // pred_check_branch
    %534 = sbr.rel (0) target = $region17
  $region16: #{vgg_forward.4} parent=0 // pred_region
    _
  $region17: #{vgg_forward.4} parent=0 // pred_fallthru
    _
  // Predicated region
  $region18: #{vgg_forward.4} parent=0 // pred_check
    _
  $region19: #{vgg_forward.4} parent=0 // pred_check_branch
    %536 = sbr.rel (0) target = $region21
  $region20: #{vgg_forward.4} parent=0 // pred_region
    _
  $region21: #{vgg_forward.4} parent=0 // pred_fallthru
    _

// kernel: vgg_forward.5
$region0: #{vgg_forward.5}
  #allocation0 [shape = 'u32[]', space=smem, size = 0x4, offset = 0x4, fixed_abs, tag = 'smem constant byte address 0x4 - core index']
  #allocation1 [shape = 'u32[144,128]{1,0:T(1,128)}', space=vmem, size = 0x12000, scoped, tag = 'internal scratch']
  %s0 = inlined_call_operand.vmem [shape: bf16[4,2,1152], index: 0, kind: input, shape index: {}]
  %s1 = inlined_call_operand.vmem [shape: bf16[1152,512], index: 1, kind: input, shape index: {}]
  %s2 = inlined_call_operand.vmem [shape: f32[1,512], index: 2, kind: input, shape index: {}]
  %s3 = inlined_call_operand.vmem [shape: bf16[512,512], index: 3, kind: input, shape index: {}]
  %s4 = inlined_call_operand.vmem [shape: f32[1,512], index: 4, kind: input, shape index: {}]
  %s5 = inlined_call_operand.vmem [shape: bf16[512,512], index: 5, kind: input, shape index: {}]
  %s6 = inlined_call_operand.vmem [shape: f32[1,512], index: 6, kind: input, shape index: {}]
  %s7 = inlined_call_operand.vmem [shape: bf16[512,128], index: 7, kind: input, shape index: {}]
  %s8 = inlined_call_operand.vmem [shape: f32[1,128], index: 8, kind: input, shape index: {}]
  %s9 = inlined_call_operand.hbm [shape: f32[2,128], index: 9, kind: output, shape index: {}]
  %s10 = sld [smem:[#allocation0]]
  $region46: #{vgg_forward.5} parent=0
    _
  %s12 = ssub.s32 1, %s10
  %s13 = scalar_select 0, %s12, %s10
  $region1: #{vgg_forward.5} parent=0
    #allocation2 [shape = 'u8[1024]{0}', space=vmem, size = 0x400, scoped, tag = 'output window, operand 0, single buffered']
    #allocation3 [shape = 's32[1]{0}', space=sflag, size = 0x4, scoped, tag = 'scoped memory for vgg_forward.5']
    %14 = vsyncpa [#allocation3], 0
    // Predicated region
    $region2: #{vgg_forward.5} parent=1 // pred_check
      _
    $region3: #{vgg_forward.5} parent=1 // pred_check_branch
      %16 = sbr.rel (0) target = $region5
    $region4: #{vgg_forward.5} parent=1 // pred_region
      _
    $region5: #{vgg_forward.5} parent=1 // pred_fallthru
      _
    // Predicated region
    $region6: #{vgg_forward.5} parent=1 // pred_check
      _
    $region7: #{vgg_forward.5} parent=1 // pred_check_branch
      %18 = sbr.rel (0) target = $region9
    $region8: #{vgg_forward.5} parent=1 // pred_region
      _
    $region9: #{vgg_forward.5} parent=1 // pred_fallthru
      _
    // Predicated region
    $region10: #{vgg_forward.5} parent=1 // pred_check
      _
    $region11: #{vgg_forward.5} parent=1 // pred_check_branch
      %20 = sbr.rel (0) target = $region13
    $region12: #{vgg_forward.5} parent=1 // pred_region
      _
    $region13: #{vgg_forward.5} parent=1 // pred_fallthru
      _
    // Predicated region
    $region14: #{vgg_forward.5} parent=1 // pred_check
      _
    $region15: #{vgg_forward.5} parent=1 // pred_check_branch
      %22 = sbr.rel (0) target = $region17
    $region16: #{vgg_forward.5} parent=1 // pred_region
      _
    $region17: #{vgg_forward.5} parent=1 // pred_fallthru
      _
    // Predicated region
    $region18: #{vgg_forward.5} parent=1 // pred_check
      _
    $region19: #{vgg_forward.5} parent=1 // pred_check_branch
      %24 = sbr.rel (0) target = $region21
    $region20: #{vgg_forward.5} parent=1 // pred_region
      _
    $region21: #{vgg_forward.5} parent=1 // pred_fallthru
      _
    // Predicated region
    $region22: #{vgg_forward.5} parent=1 // pred_check
      _
    $region23: #{vgg_forward.5} parent=1 // pred_check_branch
      %26 = sbr.rel (0) target = $region25
    $region24: #{vgg_forward.5} parent=1 // pred_region
      _
    $region25: #{vgg_forward.5} parent=1 // pred_fallthru
      _
    // Predicated region
    $region26: #{vgg_forward.5} parent=1 // pred_check
      _
    $region27: #{vgg_forward.5} parent=1 // pred_check_branch
      %28 = sbr.rel (0) target = $region29
    $region28: #{vgg_forward.5} parent=1 // pred_region
      _
    $region29: #{vgg_forward.5} parent=1 // pred_fallthru
      _
    // Predicated region
    $region30: #{vgg_forward.5} parent=1 // pred_check
      _
    $region31: #{vgg_forward.5} parent=1 // pred_check_branch
      %30 = sbr.rel (0) target = $region33
    $region32: #{vgg_forward.5} parent=1 // pred_region
      _
    $region33: #{vgg_forward.5} parent=1 // pred_fallthru
      _
    // Predicated region
    $region34: #{vgg_forward.5} parent=1 // pred_check
      _
    $region35: #{vgg_forward.5} parent=1 // pred_check_branch
      %32 = sbr.rel (0) target = $region37
    $region36: #{vgg_forward.5} parent=1 // pred_region
      _
    $region37: #{vgg_forward.5} parent=1 // pred_fallthru
      _
    %v34 = vld [vmem:[%s1] sm:$0xff]
    %v35 = vld [vmem:[%s1 + $0x8] sm:$0xff]
    %v36 = vld [vmem:[%s1 + $0x10] sm:$0xff]
    %v37 = vld [vmem:[%s1 + $0x18] sm:$0xff]
    %v38 = vld [vmem:[%s1 + $0x20] sm:$0xff]
    %v39 = vld [vmem:[%s1 + $0x28] sm:$0xff]
    %v40 = vld [vmem:[%s1 + $0x30] sm:$0xff]
    %v41 = vld [vmem:[%s1 + $0x38] sm:$0xff]
    %v42 = vld [vmem:[%s1 + $0x40] sm:$0xff]
    %v43 = vld [vmem:[%s1 + $0x48] sm:$0xff]
    %v44 = vld [vmem:[%s1 + $0x50] sm:$0xff]
    %v45 = vld [vmem:[%s1 + $0x58] sm:$0xff]
    %v46 = vld [vmem:[%s1 + $0x60] sm:$0xff]
    %v47 = vld [vmem:[%s1 + $0x68] sm:$0xff]
    %v48 = vld [vmem:[%s1 + $0x70] sm:$0xff]
    %v49 = vld [vmem:[%s1 + $0x78] sm:$0xff]
    %v50 = vld [vmem:[%s1 + $0x80] sm:$0xff]
    %v51 = vld [vmem:[%s1 + $0x88] sm:$0xff]
    %v52 = vld [vmem:[%s1 + $0x90] sm:$0xff]
    %v53 = vld [vmem:[%s1 + $0x98] sm:$0xff]
    %v54 = vld [vmem:[%s1 + $0xa0] sm:$0xff]
    %v55 = vld [vmem:[%s1 + $0xa8] sm:$0xff]
    %v56 = vld [vmem:[%s1 + $0xb0] sm:$0xff]
    %v57 = vld [vmem:[%s1 + $0xb8] sm:$0xff]
    %v58 = vld [vmem:[%s1 + $0xc0] sm:$0xff]
    %v59 = vld [vmem:[%s1 + $0xc8] sm:$0xff]
    %v60 = vld [vmem:[%s1 + $0xd0] sm:$0xff]
    %v61 = vld [vmem:[%s1 + $0xd8] sm:$0xff]
    %v62 = vld [vmem:[%s1 + $0xe0] sm:$0xff]
    %v63 = vld [vmem:[%s1 + $0xe8] sm:$0xff]
    %v64 = vld [vmem:[%s1 + $0xf0] sm:$0xff]
    %v65 = vld [vmem:[%s1 + $0xf8] sm:$0xff]
    %v66 = vld [vmem:[%s1 + $0x100] sm:$0xff]
    %v67 = vld [vmem:[%s1 + $0x108] sm:$0xff]
    %v68 = vld [vmem:[%s1 + $0x110] sm:$0xff]
    %v69 = vld [vmem:[%s1 + $0x118] sm:$0xff]
    %v70 = vld [vmem:[%s1 + $0x120] sm:$0xff]
    %v71 = vld [vmem:[%s1 + $0x128] sm:$0xff]
    %v72 = vld [vmem:[%s1 + $0x130] sm:$0xff]
    %v73 = vld [vmem:[%s1 + $0x138] sm:$0xff]
    %v74 = vld [vmem:[%s1 + $0x140] sm:$0xff]
    %v75 = vld [vmem:[%s1 + $0x148] sm:$0xff]
    %v76 = vld [vmem:[%s1 + $0x150] sm:$0xff]
    %v77 = vld [vmem:[%s1 + $0x158] sm:$0xff]
    %v78 = vld [vmem:[%s1 + $0x160] sm:$0xff]
    %v79 = vld [vmem:[%s1 + $0x168] sm:$0xff]
    %v80 = vld [vmem:[%s1 + $0x170] sm:$0xff]
    %v81 = vld [vmem:[%s1 + $0x178] sm:$0xff]
    %v82 = vld [vmem:[%s1 + $0x180] sm:$0xff]
    %v83 = vld [vmem:[%s1 + $0x188] sm:$0xff]
    %v84 = vld [vmem:[%s1 + $0x190] sm:$0xff]
    %v85 = vld [vmem:[%s1 + $0x198] sm:$0xff]
    %v86 = vld [vmem:[%s1 + $0x1a0] sm:$0xff]
    %v87 = vld [vmem:[%s1 + $0x1a8] sm:$0xff]
    %v88 = vld [vmem:[%s1 + $0x1b0] sm:$0xff]
    %v89 = vld [vmem:[%s1 + $0x1b8] sm:$0xff]
    %v90 = vld [vmem:[%s1 + $0x1c0] sm:$0xff]
    %v91 = vld [vmem:[%s1 + $0x1c8] sm:$0xff]
    %v92 = vld [vmem:[%s1 + $0x1d0] sm:$0xff]
    %v93 = vld [vmem:[%s1 + $0x1d8] sm:$0xff]
    %v94 = vld [vmem:[%s1 + $0x1e0] sm:$0xff]
    %v95 = vld [vmem:[%s1 + $0x1e8] sm:$0xff]
    %v96 = vld [vmem:[%s1 + $0x1f0] sm:$0xff]
    %v97 = vld [vmem:[%s1 + $0x1f8] sm:$0xff]
    %v98 = vld [vmem:[%s1 + $0x200] sm:$0xff]
    %v99 = vld [vmem:[%s1 + $0x208] sm:$0xff]
    %v100 = vld [vmem:[%s1 + $0x210] sm:$0xff]
    %v101 = vld [vmem:[%s1 + $0x218] sm:$0xff]
    %v102 = vld [vmem:[%s1 + $0x220] sm:$0xff]
    %v103 = vld [vmem:[%s1 + $0x228] sm:$0xff]
    %v104 = vld [vmem:[%s1 + $0x230] sm:$0xff]
    %v105 = vld [vmem:[%s1 + $0x238] sm:$0xff]
    %v106 = vld [vmem:[%s1 + $0x240] sm:$0xff]
    %v107 = vld [vmem:[%s1 + $0x248] sm:$0xff]
    %v108 = vld [vmem:[%s1 + $0x250] sm:$0xff]
    %v109 = vld [vmem:[%s1 + $0x258] sm:$0xff]
    %v110 = vld [vmem:[%s1 + $0x260] sm:$0xff]
    %v111 = vld [vmem:[%s1 + $0x268] sm:$0xff]
    %v112 = vld [vmem:[%s1 + $0x270] sm:$0xff]
    %v113 = vld [vmem:[%s1 + $0x278] sm:$0xff]
    %v114 = vld [vmem:[%s1 + $0x280] sm:$0xff]
    %v115 = vld [vmem:[%s1 + $0x288] sm:$0xff]
    %v116 = vld [vmem:[%s1 + $0x290] sm:$0xff]
    %v117 = vld [vmem:[%s1 + $0x298] sm:$0xff]
    %v118 = vld [vmem:[%s1 + $0x2a0] sm:$0xff]
    %v119 = vld [vmem:[%s1 + $0x2a8] sm:$0xff]
    %v120 = vld [vmem:[%s1 + $0x2b0] sm:$0xff]
    %v121 = vld [vmem:[%s1 + $0x2b8] sm:$0xff]
    %v122 = vld [vmem:[%s1 + $0x2c0] sm:$0xff]
    %v123 = vld [vmem:[%s1 + $0x2c8] sm:$0xff]
    %v124 = vld [vmem:[%s1 + $0x2d0] sm:$0xff]
    %v125 = vld [vmem:[%s1 + $0x2d8] sm:$0xff]
    %v126 = vld [vmem:[%s1 + $0x2e0] sm:$0xff]
    %v127 = vld [vmem:[%s1 + $0x2e8] sm:$0xff]
    %v128 = vld [vmem:[%s1 + $0x2f0] sm:$0xff]
    %v129 = vld [vmem:[%s1 + $0x2f8] sm:$0xff]
    %v130 = vld [vmem:[%s1 + $0x300] sm:$0xff]
    %v131 = vld [vmem:[%s1 + $0x308] sm:$0xff]
    %v132 = vld [vmem:[%s1 + $0x310] sm:$0xff]
    %v133 = vld [vmem:[%s1 + $0x318] sm:$0xff]
    %v134 = vld [vmem:[%s1 + $0x320] sm:$0xff]
    %v135 = vld [vmem:[%s1 + $0x328] sm:$0xff]
    %v136 = vld [vmem:[%s1 + $0x330] sm:$0xff]
    %v137 = vld [vmem:[%s1 + $0x338] sm:$0xff]
    %v138 = vld [vmem:[%s1 + $0x340] sm:$0xff]
    %v139 = vld [vmem:[%s1 + $0x348] sm:$0xff]
    %v140 = vld [vmem:[%s1 + $0x350] sm:$0xff]
    %v141 = vld [vmem:[%s1 + $0x358] sm:$0xff]
    %v142 = vld [vmem:[%s1 + $0x360] sm:$0xff]
    %v143 = vld [vmem:[%s1 + $0x368] sm:$0xff]
    %v144 = vld [vmem:[%s1 + $0x370] sm:$0xff]
    %v145 = vld [vmem:[%s1 + $0x378] sm:$0xff]
    %v146 = vld [vmem:[%s1 + $0x380] sm:$0xff]
    %v147 = vld [vmem:[%s1 + $0x388] sm:$0xff]
    %v148 = vld [vmem:[%s1 + $0x390] sm:$0xff]
    %v149 = vld [vmem:[%s1 + $0x398] sm:$0xff]
    %v150 = vld [vmem:[%s1 + $0x3a0] sm:$0xff]
    %v151 = vld [vmem:[%s1 + $0x3a8] sm:$0xff]
    %v152 = vld [vmem:[%s1 + $0x3b0] sm:$0xff]
    %v153 = vld [vmem:[%s1 + $0x3b8] sm:$0xff]
    %v154 = vld [vmem:[%s1 + $0x3c0] sm:$0xff]
    %v155 = vld [vmem:[%s1 + $0x3c8] sm:$0xff]
    %v156 = vld [vmem:[%s1 + $0x3d0] sm:$0xff]
    %v157 = vld [vmem:[%s1 + $0x3d8] sm:$0xff]
    %v158 = vld [vmem:[%s1 + $0x3e0] sm:$0xff]
    %v159 = vld [vmem:[%s1 + $0x3e8] sm:$0xff]
    %v160 = vld [vmem:[%s1 + $0x3f0] sm:$0xff]
    %v161 = vld [vmem:[%s1 + $0x3f8] sm:$0xff]
    %v162 = vld [vmem:[%s1 + $0x400] sm:$0xff]
    %v163 = vld [vmem:[%s1 + $0x408] sm:$0xff]
    %v164 = vld [vmem:[%s1 + $0x410] sm:$0xff]
    %v165 = vld [vmem:[%s1 + $0x418] sm:$0xff]
    %v166 = vld [vmem:[%s1 + $0x420] sm:$0xff]
    %v167 = vld [vmem:[%s1 + $0x428] sm:$0xff]
    %v168 = vld [vmem:[%s1 + $0x430] sm:$0xff]
    %v169 = vld [vmem:[%s1 + $0x438] sm:$0xff]
    %v170 = vld [vmem:[%s1 + $0x440] sm:$0xff]
    %v171 = vld [vmem:[%s1 + $0x448] sm:$0xff]
    %v172 = vld [vmem:[%s1 + $0x450] sm:$0xff]
    %v173 = vld [vmem:[%s1 + $0x458] sm:$0xff]
    %v174 = vld [vmem:[%s1 + $0x460] sm:$0xff]
    %v175 = vld [vmem:[%s1 + $0x468] sm:$0xff]
    %v176 = vld [vmem:[%s1 + $0x470] sm:$0xff]
    %v177 = vld [vmem:[%s1 + $0x478] sm:$0xff]
    %v178 = vld [vmem:[%s1 + $0x480] sm:$0xff]
    %v179 = vld [vmem:[%s1 + $0x488] sm:$0xff]
    %v180 = vld [vmem:[%s1 + $0x490] sm:$0xff]
    %v181 = vld [vmem:[%s1 + $0x498] sm:$0xff]
    %v182 = vld [vmem:[%s1 + $0x4a0] sm:$0xff]
    %v183 = vld [vmem:[%s1 + $0x4a8] sm:$0xff]
    %v184 = vld [vmem:[%s1 + $0x4b0] sm:$0xff]
    %v185 = vld [vmem:[%s1 + $0x4b8] sm:$0xff]
    %v186 = vld [vmem:[%s1 + $0x4c0] sm:$0xff]
    %v187 = vld [vmem:[%s1 + $0x4c8] sm:$0xff]
    %v188 = vld [vmem:[%s1 + $0x4d0] sm:$0xff]
    %v189 = vld [vmem:[%s1 + $0x4d8] sm:$0xff]
    %v190 = vld [vmem:[%s1 + $0x4e0] sm:$0xff]
    %v191 = vld [vmem:[%s1 + $0x4e8] sm:$0xff]
    %v192 = vld [vmem:[%s1 + $0x4f0] sm:$0xff]
    %v193 = vld [vmem:[%s1 + $0x4f8] sm:$0xff]
    %v194 = vld [vmem:[%s1 + $0x500] sm:$0xff]
    %v195 = vld [vmem:[%s1 + $0x508] sm:$0xff]
    %v196 = vld [vmem:[%s1 + $0x510] sm:$0xff]
    %v197 = vld [vmem:[%s1 + $0x518] sm:$0xff]
    %v198 = vld [vmem:[%s1 + $0x520] sm:$0xff]
    %v199 = vld [vmem:[%s1 + $0x528] sm:$0xff]
    %v200 = vld [vmem:[%s1 + $0x530] sm:$0xff]
    %v201 = vld [vmem:[%s1 + $0x538] sm:$0xff]
    %v202 = vld [vmem:[%s1 + $0x540] sm:$0xff]
    %v203 = vld [vmem:[%s1 + $0x548] sm:$0xff]
    %v204 = vld [vmem:[%s1 + $0x550] sm:$0xff]
    %v205 = vld [vmem:[%s1 + $0x558] sm:$0xff]
    %v206 = vld [vmem:[%s1 + $0x560] sm:$0xff]
    %v207 = vld [vmem:[%s1 + $0x568] sm:$0xff]
    %v208 = vld [vmem:[%s1 + $0x570] sm:$0xff]
    %v209 = vld [vmem:[%s1 + $0x578] sm:$0xff]
    %v210 = vld [vmem:[%s1 + $0x580] sm:$0xff]
    %v211 = vld [vmem:[%s1 + $0x588] sm:$0xff]
    %v212 = vld [vmem:[%s1 + $0x590] sm:$0xff]
    %v213 = vld [vmem:[%s1 + $0x598] sm:$0xff]
    %v214 = vld [vmem:[%s1 + $0x5a0] sm:$0xff]
    %v215 = vld [vmem:[%s1 + $0x5a8] sm:$0xff]
    %v216 = vld [vmem:[%s1 + $0x5b0] sm:$0xff]
    %v217 = vld [vmem:[%s1 + $0x5b8] sm:$0xff]
    %v218 = vld [vmem:[%s1 + $0x5c0] sm:$0xff]
    %v219 = vld [vmem:[%s1 + $0x5c8] sm:$0xff]
    %v220 = vld [vmem:[%s1 + $0x5d0] sm:$0xff]
    %v221 = vld [vmem:[%s1 + $0x5d8] sm:$0xff]
    %v222 = vld [vmem:[%s1 + $0x5e0] sm:$0xff]
    %v223 = vld [vmem:[%s1 + $0x5e8] sm:$0xff]
    %v224 = vld [vmem:[%s1 + $0x5f0] sm:$0xff]
    %v225 = vld [vmem:[%s1 + $0x5f8] sm:$0xff]
    %v226 = vld [vmem:[%s1 + $0x600] sm:$0xff]
    %v227 = vld [vmem:[%s1 + $0x608] sm:$0xff]
    %v228 = vld [vmem:[%s1 + $0x610] sm:$0xff]
    %v229 = vld [vmem:[%s1 + $0x618] sm:$0xff]
    %v230 = vld [vmem:[%s1 + $0x620] sm:$0xff]
    %v231 = vld [vmem:[%s1 + $0x628] sm:$0xff]
    %v232 = vld [vmem:[%s1 + $0x630] sm:$0xff]
    %v233 = vld [vmem:[%s1 + $0x638] sm:$0xff]
    %v234 = vld [vmem:[%s1 + $0x640] sm:$0xff]
    %v235 = vld [vmem:[%s1 + $0x648] sm:$0xff]
    %v236 = vld [vmem:[%s1 + $0x650] sm:$0xff]
    %v237 = vld [vmem:[%s1 + $0x658] sm:$0xff]
    %v238 = vld [vmem:[%s1 + $0x660] sm:$0xff]
    %v239 = vld [vmem:[%s1 + $0x668] sm:$0xff]
    %v240 = vld [vmem:[%s1 + $0x670] sm:$0xff]
    %v241 = vld [vmem:[%s1 + $0x678] sm:$0xff]
    %v242 = vld [vmem:[%s1 + $0x680] sm:$0xff]
    %v243 = vld [vmem:[%s1 + $0x688] sm:$0xff]
    %v244 = vld [vmem:[%s1 + $0x690] sm:$0xff]
    %v245 = vld [vmem:[%s1 + $0x698] sm:$0xff]
    %v246 = vld [vmem:[%s1 + $0x6a0] sm:$0xff]
    %v247 = vld [vmem:[%s1 + $0x6a8] sm:$0xff]
    %v248 = vld [vmem:[%s1 + $0x6b0] sm:$0xff]
    %v249 = vld [vmem:[%s1 + $0x6b8] sm:$0xff]
    %v250 = vld [vmem:[%s1 + $0x6c0] sm:$0xff]
    %v251 = vld [vmem:[%s1 + $0x6c8] sm:$0xff]
    %v252 = vld [vmem:[%s1 + $0x6d0] sm:$0xff]
    %v253 = vld [vmem:[%s1 + $0x6d8] sm:$0xff]
    %v254 = vld [vmem:[%s1 + $0x6e0] sm:$0xff]
    %v255 = vld [vmem:[%s1 + $0x6e8] sm:$0xff]
    %v256 = vld [vmem:[%s1 + $0x6f0] sm:$0xff]
    %v257 = vld [vmem:[%s1 + $0x6f8] sm:$0xff]
    %v258 = vld [vmem:[%s1 + $0x700] sm:$0xff]
    %v259 = vld [vmem:[%s1 + $0x708] sm:$0xff]
    %v260 = vld [vmem:[%s1 + $0x710] sm:$0xff]
    %v261 = vld [vmem:[%s1 + $0x718] sm:$0xff]
    %v262 = vld [vmem:[%s1 + $0x720] sm:$0xff]
    %v263 = vld [vmem:[%s1 + $0x728] sm:$0xff]
    %v264 = vld [vmem:[%s1 + $0x730] sm:$0xff]
    %v265 = vld [vmem:[%s1 + $0x738] sm:$0xff]
    %v266 = vld [vmem:[%s1 + $0x740] sm:$0xff]
    %v267 = vld [vmem:[%s1 + $0x748] sm:$0xff]
    %v268 = vld [vmem:[%s1 + $0x750] sm:$0xff]
    %v269 = vld [vmem:[%s1 + $0x758] sm:$0xff]
    %v270 = vld [vmem:[%s1 + $0x760] sm:$0xff]
    %v271 = vld [vmem:[%s1 + $0x768] sm:$0xff]
    %v272 = vld [vmem:[%s1 + $0x770] sm:$0xff]
    %v273 = vld [vmem:[%s1 + $0x778] sm:$0xff]
    %v274 = vld [vmem:[%s1 + $0x780] sm:$0xff]
    %v275 = vld [vmem:[%s1 + $0x788] sm:$0xff]
    %v276 = vld [vmem:[%s1 + $0x790] sm:$0xff]
    %v277 = vld [vmem:[%s1 + $0x798] sm:$0xff]
    %v278 = vld [vmem:[%s1 + $0x7a0] sm:$0xff]
    %v279 = vld [vmem:[%s1 + $0x7a8] sm:$0xff]
    %v280 = vld [vmem:[%s1 + $0x7b0] sm:$0xff]
    %v281 = vld [vmem:[%s1 + $0x7b8] sm:$0xff]
    %v282 = vld [vmem:[%s1 + $0x7c0] sm:$0xff]
    %v283 = vld [vmem:[%s1 + $0x7c8] sm:$0xff]
    %v284 = vld [vmem:[%s1 + $0x7d0] sm:$0xff]
    %v285 = vld [vmem:[%s1 + $0x7d8] sm:$0xff]
    %v286 = vld [vmem:[%s1 + $0x7e0] sm:$0xff]
    %v287 = vld [vmem:[%s1 + $0x7e8] sm:$0xff]
    %v288 = vld [vmem:[%s1 + $0x7f0] sm:$0xff]
    %v289 = vld [vmem:[%s1 + $0x7f8] sm:$0xff]
    %v290 = vld [vmem:[%s1 + $0x800] sm:$0xff]
    %v291 = vld [vmem:[%s1 + $0x808] sm:$0xff]
    %v292 = vld [vmem:[%s1 + $0x810] sm:$0xff]
    %v293 = vld [vmem:[%s1 + $0x818] sm:$0xff]
    %v294 = vld [vmem:[%s1 + $0x820] sm:$0xff]
    %v295 = vld [vmem:[%s1 + $0x828] sm:$0xff]
    %v296 = vld [vmem:[%s1 + $0x830] sm:$0xff]
    %v297 = vld [vmem:[%s1 + $0x838] sm:$0xff]
    %v298 = vld [vmem:[%s1 + $0x840] sm:$0xff]
    %v299 = vld [vmem:[%s1 + $0x848] sm:$0xff]
    %v300 = vld [vmem:[%s1 + $0x850] sm:$0xff]
    %v301 = vld [vmem:[%s1 + $0x858] sm:$0xff]
    %v302 = vld [vmem:[%s1 + $0x860] sm:$0xff]
    %v303 = vld [vmem:[%s1 + $0x868] sm:$0xff]
    %v304 = vld [vmem:[%s1 + $0x870] sm:$0xff]
    %v305 = vld [vmem:[%s1 + $0x878] sm:$0xff]
    %v306 = vld [vmem:[%s1 + $0x880] sm:$0xff]
    %v307 = vld [vmem:[%s1 + $0x888] sm:$0xff]
    %v308 = vld [vmem:[%s1 + $0x890] sm:$0xff]
    %v309 = vld [vmem:[%s1 + $0x898] sm:$0xff]
    %v310 = vld [vmem:[%s1 + $0x8a0] sm:$0xff]
    %v311 = vld [vmem:[%s1 + $0x8a8] sm:$0xff]
    %v312 = vld [vmem:[%s1 + $0x8b0] sm:$0xff]
    %v313 = vld [vmem:[%s1 + $0x8b8] sm:$0xff]
    %v314 = vld [vmem:[%s1 + $0x8c0] sm:$0xff]
    %v315 = vld [vmem:[%s1 + $0x8c8] sm:$0xff]
    %v316 = vld [vmem:[%s1 + $0x8d0] sm:$0xff]
    %v317 = vld [vmem:[%s1 + $0x8d8] sm:$0xff]
    %v318 = vld [vmem:[%s1 + $0x8e0] sm:$0xff]
    %v319 = vld [vmem:[%s1 + $0x8e8] sm:$0xff]
    %v320 = vld [vmem:[%s1 + $0x8f0] sm:$0xff]
    %v321 = vld [vmem:[%s1 + $0x8f8] sm:$0xff]
    %v322 = vld [vmem:[%s0] sm:$0xff]
    %v323 = vld [vmem:[%s0 + $0x8] sm:$0x1]
    %v326 = vcombine.high %v322, %v322
    %v328 = vunpack.c.l.s4 1966171168
    %v329 = vunpack.c.0.s8 %v328
    %v330 = vlaneseq
    %v331 = vshrl.u32 %v330, 7
    %v332 = vsub.s32 %v329, %v331
    %v333 = vrot.slane %v322, %v332
    %v335 = vunpack.c.l.s4 1966171168
    %v336 = vunpack.c.0.s8 %v335
    %v337 = vlaneseq
    %v338 = vshrl.u32 %v337, 7
    %v339 = vsub.s32 %v336, %v338
    %v340 = vrot.slane %v326, %v339
    %v341 = vcombine.high %v333, %v333
    %v342 = vcombine.high %v340, %v340
    %v344 = vunpack.c.l.s4 1966171168
    %v345 = vunpack.c.0.s8 %v344
    %v346 = vlaneseq
    %v347 = vshrl.u32 %v346, 7
    %v348 = vsub.s32 %v345, %v347
    %v349 = vrot.slane %v333, %v348
    %v351 = vunpack.c.l.s4 1966171168
    %v352 = vunpack.c.0.s8 %v351
    %v353 = vlaneseq
    %v354 = vshrl.u32 %v353, 7
    %v355 = vsub.s32 %v352, %v354
    %v356 = vrot.slane %v340, %v355
    %v358 = vunpack.c.l.s4 1966171168
    %v359 = vunpack.c.0.s8 %v358
    %v360 = vlaneseq
    %v361 = vshrl.u32 %v360, 7
    %v362 = vsub.s32 %v359, %v361
    %v363 = vrot.slane %v341, %v362
    %v365 = vunpack.c.l.s4 1966171168
    %v366 = vunpack.c.0.s8 %v365
    %v367 = vlaneseq
    %v368 = vshrl.u32 %v367, 7
    %v369 = vsub.s32 %v366, %v368
    %v370 = vrot.slane %v342, %v369
    %v371 = vcombine.high %v349, %v349
    %v372 = vcombine.high %v356, %v356
    %v373 = vcombine.high %v363, %v363
    %v374 = vcombine.high %v370, %v370
    %v376 = vunpack.c.l.s4 1966171168
    %v377 = vunpack.c.0.s8 %v376
    %v378 = vlaneseq
    %v379 = vshrl.u32 %v378, 7
    %v380 = vsub.s32 %v377, %v379
    %v381 = vrot.slane %v323, %v380
    %v383 = vunpack.c.l.s4 1966171168
    %v384 = vunpack.c.0.s8 %v383
    %v385 = vlaneseq
    %v386 = vshrl.u32 %v385, 7
    %v387 = vsub.s32 %v384, %v386
    %v388 = vrot.slane %v381, %v387
    %v686 = vunpack.c.l.b16 %v34
    %v687 = vunpack.c.h.b16 %v34
    %v688 = vunpack.c.l.b16 %v35
    %v689 = vunpack.c.h.b16 %v35
    %v690 = vunpack.c.l.b16 %v36
    %v691 = vunpack.c.h.b16 %v36
    %v692 = vunpack.c.l.b16 %v37
    %v693 = vunpack.c.h.b16 %v37
    %v694 = vunpack.c.l.b16 %v38
    %v695 = vunpack.c.h.b16 %v38
    %v696 = vunpack.c.l.b16 %v39
    %v697 = vunpack.c.h.b16 %v39
    %v698 = vunpack.c.l.b16 %v40
    %v699 = vunpack.c.h.b16 %v40
    %v700 = vunpack.c.l.b16 %v41
    %v701 = vunpack.c.h.b16 %v41
    %v702 = vunpack.c.l.b16 %v42
    %v703 = vunpack.c.h.b16 %v42
    %v704 = vunpack.c.l.b16 %v43
    %v705 = vunpack.c.h.b16 %v43
    %v706 = vunpack.c.l.b16 %v44
    %v707 = vunpack.c.h.b16 %v44
    %v708 = vunpack.c.l.b16 %v45
    %v709 = vunpack.c.h.b16 %v45
    %v710 = vunpack.c.l.b16 %v46
    %v711 = vunpack.c.h.b16 %v46
    %v712 = vunpack.c.l.b16 %v47
    %v713 = vunpack.c.h.b16 %v47
    %v714 = vunpack.c.l.b16 %v48
    %v715 = vunpack.c.h.b16 %v48
    %v716 = vunpack.c.l.b16 %v49
    %v717 = vunpack.c.h.b16 %v49
    %v718 = vunpack.c.l.b16 %v50
    %v719 = vunpack.c.h.b16 %v50
    %v720 = vunpack.c.l.b16 %v51
    %v721 = vunpack.c.h.b16 %v51
    %v722 = vunpack.c.l.b16 %v52
    %v723 = vunpack.c.h.b16 %v52
    %v724 = vunpack.c.l.b16 %v53
    %v725 = vunpack.c.h.b16 %v53
    %v726 = vunpack.c.l.b16 %v54
    %v727 = vunpack.c.h.b16 %v54
    %v728 = vunpack.c.l.b16 %v55
    %v729 = vunpack.c.h.b16 %v55
    %v730 = vunpack.c.l.b16 %v56
    %v731 = vunpack.c.h.b16 %v56
    %v732 = vunpack.c.l.b16 %v57
    %v733 = vunpack.c.h.b16 %v57
    %v734 = vunpack.c.l.b16 %v58
    %v735 = vunpack.c.h.b16 %v58
    %v736 = vunpack.c.l.b16 %v59
    %v737 = vunpack.c.h.b16 %v59
    %v738 = vunpack.c.l.b16 %v60
    %v739 = vunpack.c.h.b16 %v60
    %v740 = vunpack.c.l.b16 %v61
    %v741 = vunpack.c.h.b16 %v61
    %v742 = vunpack.c.l.b16 %v62
    %v743 = vunpack.c.h.b16 %v62
    %v744 = vunpack.c.l.b16 %v63
    %v745 = vunpack.c.h.b16 %v63
    %v746 = vunpack.c.l.b16 %v64
    %v747 = vunpack.c.h.b16 %v64
    %v748 = vunpack.c.l.b16 %v65
    %v749 = vunpack.c.h.b16 %v65
    %v750 = vunpack.c.l.b16 %v66
    %v751 = vunpack.c.h.b16 %v66
    %v752 = vunpack.c.l.b16 %v67
    %v753 = vunpack.c.h.b16 %v67
    %v754 = vunpack.c.l.b16 %v68
    %v755 = vunpack.c.h.b16 %v68
    %v756 = vunpack.c.l.b16 %v69
    %v757 = vunpack.c.h.b16 %v69
    %v758 = vunpack.c.l.b16 %v70
    %v759 = vunpack.c.h.b16 %v70
    %v760 = vunpack.c.l.b16 %v71
    %v761 = vunpack.c.h.b16 %v71
    %v762 = vunpack.c.l.b16 %v72
    %v763 = vunpack.c.h.b16 %v72
    %v764 = vunpack.c.l.b16 %v73
    %v765 = vunpack.c.h.b16 %v73
    %v766 = vunpack.c.l.b16 %v74
    %v767 = vunpack.c.h.b16 %v74
    %v768 = vunpack.c.l.b16 %v75
    %v769 = vunpack.c.h.b16 %v75
    %v770 = vunpack.c.l.b16 %v76
    %v771 = vunpack.c.h.b16 %v76
    %v772 = vunpack.c.l.b16 %v77
    %v773 = vunpack.c.h.b16 %v77
    %v774 = vunpack.c.l.b16 %v78
    %v775 = vunpack.c.h.b16 %v78
    %v776 = vunpack.c.l.b16 %v79
    %v777 = vunpack.c.h.b16 %v79
    %v778 = vunpack.c.l.b16 %v80
    %v779 = vunpack.c.h.b16 %v80
    %v780 = vunpack.c.l.b16 %v81
    %v781 = vunpack.c.h.b16 %v81
    %v782 = vunpack.c.l.b16 %v82
    %v783 = vunpack.c.h.b16 %v82
    %v784 = vunpack.c.l.b16 %v83
    %v785 = vunpack.c.h.b16 %v83
    %v786 = vunpack.c.l.b16 %v84
    %v787 = vunpack.c.h.b16 %v84
    %v788 = vunpack.c.l.b16 %v85
    %v789 = vunpack.c.h.b16 %v85
    %v790 = vunpack.c.l.b16 %v86
    %v791 = vunpack.c.h.b16 %v86
    %v792 = vunpack.c.l.b16 %v87
    %v793 = vunpack.c.h.b16 %v87
    %v794 = vunpack.c.l.b16 %v88
    %v795 = vunpack.c.h.b16 %v88
    %v796 = vunpack.c.l.b16 %v89
    %v797 = vunpack.c.h.b16 %v89
    %v798 = vunpack.c.l.b16 %v90
    %v799 = vunpack.c.h.b16 %v90
    %v800 = vunpack.c.l.b16 %v91
    %v801 = vunpack.c.h.b16 %v91
    %v802 = vunpack.c.l.b16 %v92
    %v803 = vunpack.c.h.b16 %v92
    %v804 = vunpack.c.l.b16 %v93
    %v805 = vunpack.c.h.b16 %v93
    %v806 = vunpack.c.l.b16 %v94
    %v807 = vunpack.c.h.b16 %v94
    %v808 = vunpack.c.l.b16 %v95
    %v809 = vunpack.c.h.b16 %v95
    %v810 = vunpack.c.l.b16 %v96
    %v811 = vunpack.c.h.b16 %v96
    %v812 = vunpack.c.l.b16 %v97
    %v813 = vunpack.c.h.b16 %v97
    %v814 = vunpack.c.l.b16 %v98
    %v815 = vunpack.c.h.b16 %v98
    %v816 = vunpack.c.l.b16 %v99
    %v817 = vunpack.c.h.b16 %v99
    %v818 = vunpack.c.l.b16 %v100
    %v819 = vunpack.c.h.b16 %v100
    %v820 = vunpack.c.l.b16 %v101
    %v821 = vunpack.c.h.b16 %v101
    %v822 = vunpack.c.l.b16 %v102
    %v823 = vunpack.c.h.b16 %v102
    %v824 = vunpack.c.l.b16 %v103
    %v825 = vunpack.c.h.b16 %v103
    %v826 = vunpack.c.l.b16 %v104
    %v827 = vunpack.c.h.b16 %v104
    %v828 = vunpack.c.l.b16 %v105
    %v829 = vunpack.c.h.b16 %v105
    %v830 = vunpack.c.l.b16 %v106
    %v831 = vunpack.c.h.b16 %v106
    %v832 = vunpack.c.l.b16 %v107
    %v833 = vunpack.c.h.b16 %v107
    %v834 = vunpack.c.l.b16 %v108
    %v835 = vunpack.c.h.b16 %v108
    %v836 = vunpack.c.l.b16 %v109
    %v837 = vunpack.c.h.b16 %v109
    %v838 = vunpack.c.l.b16 %v110
    %v839 = vunpack.c.h.b16 %v110
    %v840 = vunpack.c.l.b16 %v111
    %v841 = vunpack.c.h.b16 %v111
    %v842 = vunpack.c.l.b16 %v112
    %v843 = vunpack.c.h.b16 %v112
    %v844 = vunpack.c.l.b16 %v113
    %v845 = vunpack.c.h.b16 %v113
    %v846 = vunpack.c.l.b16 %v114
    %v847 = vunpack.c.h.b16 %v114
    %v848 = vunpack.c.l.b16 %v115
    %v849 = vunpack.c.h.b16 %v115
    %v850 = vunpack.c.l.b16 %v116
    %v851 = vunpack.c.h.b16 %v116
    %v852 = vunpack.c.l.b16 %v117
    %v853 = vunpack.c.h.b16 %v117
    %v854 = vunpack.c.l.b16 %v118
    %v855 = vunpack.c.h.b16 %v118
    %v856 = vunpack.c.l.b16 %v119
    %v857 = vunpack.c.h.b16 %v119
    %v858 = vunpack.c.l.b16 %v120
    %v859 = vunpack.c.h.b16 %v120
    %v860 = vunpack.c.l.b16 %v121
    %v861 = vunpack.c.h.b16 %v121
    %v862 = vunpack.c.l.b16 %v122
    %v863 = vunpack.c.h.b16 %v122
    %v864 = vunpack.c.l.b16 %v123
    %v865 = vunpack.c.h.b16 %v123
    %v866 = vunpack.c.l.b16 %v124
    %v867 = vunpack.c.h.b16 %v124
    %v868 = vunpack.c.l.b16 %v125
    %v869 = vunpack.c.h.b16 %v125
    %v870 = vunpack.c.l.b16 %v126
    %v871 = vunpack.c.h.b16 %v126
    %v872 = vunpack.c.l.b16 %v127
    %v873 = vunpack.c.h.b16 %v127
    %v874 = vunpack.c.l.b16 %v128
    %v875 = vunpack.c.h.b16 %v128
    %v876 = vunpack.c.l.b16 %v129
    %v877 = vunpack.c.h.b16 %v129
    %v878 = vunpack.c.l.b16 %v130
    %v879 = vunpack.c.h.b16 %v130
    %v880 = vunpack.c.l.b16 %v131
    %v881 = vunpack.c.h.b16 %v131
    %v882 = vunpack.c.l.b16 %v132
    %v883 = vunpack.c.h.b16 %v132
    %v884 = vunpack.c.l.b16 %v133
    %v885 = vunpack.c.h.b16 %v133
    %v886 = vunpack.c.l.b16 %v134
    %v887 = vunpack.c.h.b16 %v134
    %v888 = vunpack.c.l.b16 %v135
    %v889 = vunpack.c.h.b16 %v135
    %v890 = vunpack.c.l.b16 %v136
    %v891 = vunpack.c.h.b16 %v136
    %v892 = vunpack.c.l.b16 %v137
    %v893 = vunpack.c.h.b16 %v137
    %v894 = vunpack.c.l.b16 %v138
    %v895 = vunpack.c.h.b16 %v138
    %v896 = vunpack.c.l.b16 %v139
    %v897 = vunpack.c.h.b16 %v139
    %v898 = vunpack.c.l.b16 %v140
    %v899 = vunpack.c.h.b16 %v140
    %v900 = vunpack.c.l.b16 %v141
    %v901 = vunpack.c.h.b16 %v141
    %v902 = vunpack.c.l.b16 %v142
    %v903 = vunpack.c.h.b16 %v142
    %v904 = vunpack.c.l.b16 %v143
    %v905 = vunpack.c.h.b16 %v143
    %v906 = vunpack.c.l.b16 %v144
    %v907 = vunpack.c.h.b16 %v144
    %v908 = vunpack.c.l.b16 %v145
    %v909 = vunpack.c.h.b16 %v145
    %v910 = vunpack.c.l.b16 %v146
    %v911 = vunpack.c.h.b16 %v146
    %v912 = vunpack.c.l.b16 %v147
    %v913 = vunpack.c.h.b16 %v147
    %v914 = vunpack.c.l.b16 %v148
    %v915 = vunpack.c.h.b16 %v148
    %v916 = vunpack.c.l.b16 %v149
    %v917 = vunpack.c.h.b16 %v149
    %v918 = vunpack.c.l.b16 %v150
    %v919 = vunpack.c.h.b16 %v150
    %v920 = vunpack.c.l.b16 %v151
    %v921 = vunpack.c.h.b16 %v151
    %v922 = vunpack.c.l.b16 %v152
    %v923 = vunpack.c.h.b16 %v152
    %v924 = vunpack.c.l.b16 %v153
    %v925 = vunpack.c.h.b16 %v153
    %v926 = vunpack.c.l.b16 %v154
    %v927 = vunpack.c.h.b16 %v154
    %v928 = vunpack.c.l.b16 %v155
    %v929 = vunpack.c.h.b16 %v155
    %v930 = vunpack.c.l.b16 %v156
    %v931 = vunpack.c.h.b16 %v156
    %v932 = vunpack.c.l.b16 %v157
    %v933 = vunpack.c.h.b16 %v157
    %v934 = vunpack.c.l.b16 %v158
    %v935 = vunpack.c.h.b16 %v158
    %v936 = vunpack.c.l.b16 %v159
    %v937 = vunpack.c.h.b16 %v159
    %v938 = vunpack.c.l.b16 %v160
    %v939 = vunpack.c.h.b16 %v160
    %v940 = vunpack.c.l.b16 %v161
    %v941 = vunpack.c.h.b16 %v161
    %v942 = vunpack.c.l.b16 %v162
    %v943 = vunpack.c.h.b16 %v162
    %v944 = vunpack.c.l.b16 %v163
    %v945 = vunpack.c.h.b16 %v163
    %v946 = vunpack.c.l.b16 %v164
    %v947 = vunpack.c.h.b16 %v164
    %v948 = vunpack.c.l.b16 %v165
    %v949 = vunpack.c.h.b16 %v165
    %v950 = vunpack.c.l.b16 %v166
    %v951 = vunpack.c.h.b16 %v166
    %v952 = vunpack.c.l.b16 %v167
    %v953 = vunpack.c.h.b16 %v167
    %v954 = vunpack.c.l.b16 %v168
    %v955 = vunpack.c.h.b16 %v168
    %v956 = vunpack.c.l.b16 %v169
    %v957 = vunpack.c.h.b16 %v169
    %v958 = vunpack.c.l.b16 %v170
    %v959 = vunpack.c.h.b16 %v170
    %v960 = vunpack.c.l.b16 %v171
    %v961 = vunpack.c.h.b16 %v171
    %v962 = vunpack.c.l.b16 %v172
    %v963 = vunpack.c.h.b16 %v172
    %v964 = vunpack.c.l.b16 %v173
    %v965 = vunpack.c.h.b16 %v173
    %v966 = vunpack.c.l.b16 %v174
    %v967 = vunpack.c.h.b16 %v174
    %v968 = vunpack.c.l.b16 %v175
    %v969 = vunpack.c.h.b16 %v175
    %v970 = vunpack.c.l.b16 %v176
    %v971 = vunpack.c.h.b16 %v176
    %v972 = vunpack.c.l.b16 %v177
    %v973 = vunpack.c.h.b16 %v177
    %v974 = vunpack.c.l.b16 %v178
    %v975 = vunpack.c.h.b16 %v178
    %v976 = vunpack.c.l.b16 %v179
    %v977 = vunpack.c.h.b16 %v179
    %v978 = vunpack.c.l.b16 %v180
    %v979 = vunpack.c.h.b16 %v180
    %v980 = vunpack.c.l.b16 %v181
    %v981 = vunpack.c.h.b16 %v181
    %v982 = vunpack.c.l.b16 %v182
    %v983 = vunpack.c.h.b16 %v182
    %v984 = vunpack.c.l.b16 %v183
    %v985 = vunpack.c.h.b16 %v183
    %v986 = vunpack.c.l.b16 %v184
    %v987 = vunpack.c.h.b16 %v184
    %v988 = vunpack.c.l.b16 %v185
    %v989 = vunpack.c.h.b16 %v185
    %v990 = vunpack.c.l.b16 %v186
    %v991 = vunpack.c.h.b16 %v186
    %v992 = vunpack.c.l.b16 %v187
    %v993 = vunpack.c.h.b16 %v187
    %v994 = vunpack.c.l.b16 %v188
    %v995 = vunpack.c.h.b16 %v188
    %v996 = vunpack.c.l.b16 %v189
    %v997 = vunpack.c.h.b16 %v189
    %v998 = vunpack.c.l.b16 %v190
    %v999 = vunpack.c.h.b16 %v190
    %v1000 = vunpack.c.l.b16 %v191
    %v1001 = vunpack.c.h.b16 %v191
    %v1002 = vunpack.c.l.b16 %v192
    %v1003 = vunpack.c.h.b16 %v192
    %v1004 = vunpack.c.l.b16 %v193
    %v1005 = vunpack.c.h.b16 %v193
    %v1006 = vunpack.c.l.b16 %v194
    %v1007 = vunpack.c.h.b16 %v194
    %v1008 = vunpack.c.l.b16 %v195
    %v1009 = vunpack.c.h.b16 %v195
    %v1010 = vunpack.c.l.b16 %v196
    %v1011 = vunpack.c.h.b16 %v196
    %v1012 = vunpack.c.l.b16 %v197
    %v1013 = vunpack.c.h.b16 %v197
    %v1014 = vunpack.c.l.b16 %v198
    %v1015 = vunpack.c.h.b16 %v198
    %v1016 = vunpack.c.l.b16 %v199
    %v1017 = vunpack.c.h.b16 %v199
    %v1018 = vunpack.c.l.b16 %v200
    %v1019 = vunpack.c.h.b16 %v200
    %v1020 = vunpack.c.l.b16 %v201
    %v1021 = vunpack.c.h.b16 %v201
    %v1022 = vunpack.c.l.b16 %v202
    %v1023 = vunpack.c.h.b16 %v202
    %v1024 = vunpack.c.l.b16 %v203
    %v1025 = vunpack.c.h.b16 %v203
    %v1026 = vunpack.c.l.b16 %v204
    %v1027 = vunpack.c.h.b16 %v204
    %v1028 = vunpack.c.l.b16 %v205
    %v1029 = vunpack.c.h.b16 %v205
    %v1030 = vunpack.c.l.b16 %v206
    %v1031 = vunpack.c.h.b16 %v206
    %v1032 = vunpack.c.l.b16 %v207
    %v1033 = vunpack.c.h.b16 %v207
    %v1034 = vunpack.c.l.b16 %v208
    %v1035 = vunpack.c.h.b16 %v208
    %v1036 = vunpack.c.l.b16 %v209
    %v1037 = vunpack.c.h.b16 %v209
    %v1038 = vunpack.c.l.b16 %v210
    %v1039 = vunpack.c.h.b16 %v210
    %v1040 = vunpack.c.l.b16 %v211
    %v1041 = vunpack.c.h.b16 %v211
    %v1042 = vunpack.c.l.b16 %v212
    %v1043 = vunpack.c.h.b16 %v212
    %v1044 = vunpack.c.l.b16 %v213
    %v1045 = vunpack.c.h.b16 %v213
    %v1046 = vunpack.c.l.b16 %v214
    %v1047 = vunpack.c.h.b16 %v214
    %v1048 = vunpack.c.l.b16 %v215
    %v1049 = vunpack.c.h.b16 %v215
    %v1050 = vunpack.c.l.b16 %v216
    %v1051 = vunpack.c.h.b16 %v216
    %v1052 = vunpack.c.l.b16 %v217
    %v1053 = vunpack.c.h.b16 %v217
    %v1054 = vunpack.c.l.b16 %v218
    %v1055 = vunpack.c.h.b16 %v218
    %v1056 = vunpack.c.l.b16 %v219
    %v1057 = vunpack.c.h.b16 %v219
    %v1058 = vunpack.c.l.b16 %v220
    %v1059 = vunpack.c.h.b16 %v220
    %v1060 = vunpack.c.l.b16 %v221
    %v1061 = vunpack.c.h.b16 %v221
    %v1062 = vunpack.c.l.b16 %v222
    %v1063 = vunpack.c.h.b16 %v222
    %v1064 = vunpack.c.l.b16 %v223
    %v1065 = vunpack.c.h.b16 %v223
    %v1066 = vunpack.c.l.b16 %v224
    %v1067 = vunpack.c.h.b16 %v224
    %v1068 = vunpack.c.l.b16 %v225
    %v1069 = vunpack.c.h.b16 %v225
    %v1070 = vunpack.c.l.b16 %v226
    %v1071 = vunpack.c.h.b16 %v226
    %v1072 = vunpack.c.l.b16 %v227
    %v1073 = vunpack.c.h.b16 %v227
    %v1074 = vunpack.c.l.b16 %v228
    %v1075 = vunpack.c.h.b16 %v228
    %v1076 = vunpack.c.l.b16 %v229
    %v1077 = vunpack.c.h.b16 %v229
    %v1078 = vunpack.c.l.b16 %v230
    %v1079 = vunpack.c.h.b16 %v230
    %v1080 = vunpack.c.l.b16 %v231
    %v1081 = vunpack.c.h.b16 %v231
    %v1082 = vunpack.c.l.b16 %v232
    %v1083 = vunpack.c.h.b16 %v232
    %v1084 = vunpack.c.l.b16 %v233
    %v1085 = vunpack.c.h.b16 %v233
    %v1086 = vunpack.c.l.b16 %v234
    %v1087 = vunpack.c.h.b16 %v234
    %v1088 = vunpack.c.l.b16 %v235
    %v1089 = vunpack.c.h.b16 %v235
    %v1090 = vunpack.c.l.b16 %v236
    %v1091 = vunpack.c.h.b16 %v236
    %v1092 = vunpack.c.l.b16 %v237
    %v1093 = vunpack.c.h.b16 %v237
    %v1094 = vunpack.c.l.b16 %v238
    %v1095 = vunpack.c.h.b16 %v238
    %v1096 = vunpack.c.l.b16 %v239
    %v1097 = vunpack.c.h.b16 %v239
    %v1098 = vunpack.c.l.b16 %v240
    %v1099 = vunpack.c.h.b16 %v240
    %v1100 = vunpack.c.l.b16 %v241
    %v1101 = vunpack.c.h.b16 %v241
    %v1102 = vunpack.c.l.b16 %v242
    %v1103 = vunpack.c.h.b16 %v242
    %v1104 = vunpack.c.l.b16 %v243
    %v1105 = vunpack.c.h.b16 %v243
    %v1106 = vunpack.c.l.b16 %v244
    %v1107 = vunpack.c.h.b16 %v244
    %v1108 = vunpack.c.l.b16 %v245
    %v1109 = vunpack.c.h.b16 %v245
    %v1110 = vunpack.c.l.b16 %v246
    %v1111 = vunpack.c.h.b16 %v246
    %v1112 = vunpack.c.l.b16 %v247
    %v1113 = vunpack.c.h.b16 %v247
    %v1114 = vunpack.c.l.b16 %v248
    %v1115 = vunpack.c.h.b16 %v248
    %v1116 = vunpack.c.l.b16 %v249
    %v1117 = vunpack.c.h.b16 %v249
    %v1118 = vunpack.c.l.b16 %v250
    %v1119 = vunpack.c.h.b16 %v250
    %v1120 = vunpack.c.l.b16 %v251
    %v1121 = vunpack.c.h.b16 %v251
    %v1122 = vunpack.c.l.b16 %v252
    %v1123 = vunpack.c.h.b16 %v252
    %v1124 = vunpack.c.l.b16 %v253
    %v1125 = vunpack.c.h.b16 %v253
    %v1126 = vunpack.c.l.b16 %v254
    %v1127 = vunpack.c.h.b16 %v254
    %v1128 = vunpack.c.l.b16 %v255
    %v1129 = vunpack.c.h.b16 %v255
    %v1130 = vunpack.c.l.b16 %v256
    %v1131 = vunpack.c.h.b16 %v256
    %v1132 = vunpack.c.l.b16 %v257
    %v1133 = vunpack.c.h.b16 %v257
    %v1134 = vunpack.c.l.b16 %v258
    %v1135 = vunpack.c.h.b16 %v258
    %v1136 = vunpack.c.l.b16 %v259
    %v1137 = vunpack.c.h.b16 %v259
    %v1138 = vunpack.c.l.b16 %v260
    %v1139 = vunpack.c.h.b16 %v260
    %v1140 = vunpack.c.l.b16 %v261
    %v1141 = vunpack.c.h.b16 %v261
    %v1142 = vunpack.c.l.b16 %v262
    %v1143 = vunpack.c.h.b16 %v262
    %v1144 = vunpack.c.l.b16 %v263
    %v1145 = vunpack.c.h.b16 %v263
    %v1146 = vunpack.c.l.b16 %v264
    %v1147 = vunpack.c.h.b16 %v264
    %v1148 = vunpack.c.l.b16 %v265
    %v1149 = vunpack.c.h.b16 %v265
    %v1150 = vunpack.c.l.b16 %v266
    %v1151 = vunpack.c.h.b16 %v266
    %v1152 = vunpack.c.l.b16 %v267
    %v1153 = vunpack.c.h.b16 %v267
    %v1154 = vunpack.c.l.b16 %v268
    %v1155 = vunpack.c.h.b16 %v268
    %v1156 = vunpack.c.l.b16 %v269
    %v1157 = vunpack.c.h.b16 %v269
    %v1158 = vunpack.c.l.b16 %v270
    %v1159 = vunpack.c.h.b16 %v270
    %v1160 = vunpack.c.l.b16 %v271
    %v1161 = vunpack.c.h.b16 %v271
    %v1162 = vunpack.c.l.b16 %v272
    %v1163 = vunpack.c.h.b16 %v272
    %v1164 = vunpack.c.l.b16 %v273
    %v1165 = vunpack.c.h.b16 %v273
    %v1166 = vunpack.c.l.b16 %v274
    %v1167 = vunpack.c.h.b16 %v274
    %v1168 = vunpack.c.l.b16 %v275
    %v1169 = vunpack.c.h.b16 %v275
    %v1170 = vunpack.c.l.b16 %v276
    %v1171 = vunpack.c.h.b16 %v276
    %v1172 = vunpack.c.l.b16 %v277
    %v1173 = vunpack.c.h.b16 %v277
    %v1174 = vunpack.c.l.b16 %v278
    %v1175 = vunpack.c.h.b16 %v278
    %v1176 = vunpack.c.l.b16 %v279
    %v1177 = vunpack.c.h.b16 %v279
    %v1178 = vunpack.c.l.b16 %v280
    %v1179 = vunpack.c.h.b16 %v280
    %v1180 = vunpack.c.l.b16 %v281
    %v1181 = vunpack.c.h.b16 %v281
    %v1182 = vunpack.c.l.b16 %v282
    %v1183 = vunpack.c.h.b16 %v282
    %v1184 = vunpack.c.l.b16 %v283
    %v1185 = vunpack.c.h.b16 %v283
    %v1186 = vunpack.c.l.b16 %v284
    %v1187 = vunpack.c.h.b16 %v284
    %v1188 = vunpack.c.l.b16 %v285
    %v1189 = vunpack.c.h.b16 %v285
    %v1190 = vunpack.c.l.b16 %v286
    %v1191 = vunpack.c.h.b16 %v286
    %v1192 = vunpack.c.l.b16 %v287
    %v1193 = vunpack.c.h.b16 %v287
    %v1194 = vunpack.c.l.b16 %v288
    %v1195 = vunpack.c.h.b16 %v288
    %v1196 = vunpack.c.l.b16 %v289
    %v1197 = vunpack.c.h.b16 %v289
    %v1198 = vunpack.c.l.b16 %v290
    %v1199 = vunpack.c.h.b16 %v290
    %v1200 = vunpack.c.l.b16 %v291
    %v1201 = vunpack.c.h.b16 %v291
    %v1202 = vunpack.c.l.b16 %v292
    %v1203 = vunpack.c.h.b16 %v292
    %v1204 = vunpack.c.l.b16 %v293
    %v1205 = vunpack.c.h.b16 %v293
    %v1206 = vunpack.c.l.b16 %v294
    %v1207 = vunpack.c.h.b16 %v294
    %v1208 = vunpack.c.l.b16 %v295
    %v1209 = vunpack.c.h.b16 %v295
    %v1210 = vunpack.c.l.b16 %v296
    %v1211 = vunpack.c.h.b16 %v296
    %v1212 = vunpack.c.l.b16 %v297
    %v1213 = vunpack.c.h.b16 %v297
    %v1214 = vunpack.c.l.b16 %v298
    %v1215 = vunpack.c.h.b16 %v298
    %v1216 = vunpack.c.l.b16 %v299
    %v1217 = vunpack.c.h.b16 %v299
    %v1218 = vunpack.c.l.b16 %v300
    %v1219 = vunpack.c.h.b16 %v300
    %v1220 = vunpack.c.l.b16 %v301
    %v1221 = vunpack.c.h.b16 %v301
    %v1222 = vunpack.c.l.b16 %v302
    %v1223 = vunpack.c.h.b16 %v302
    %v1224 = vunpack.c.l.b16 %v303
    %v1225 = vunpack.c.h.b16 %v303
    %v1226 = vunpack.c.l.b16 %v304
    %v1227 = vunpack.c.h.b16 %v304
    %v1228 = vunpack.c.l.b16 %v305
    %v1229 = vunpack.c.h.b16 %v305
    %v1230 = vunpack.c.l.b16 %v306
    %v1231 = vunpack.c.h.b16 %v306
    %v1232 = vunpack.c.l.b16 %v307
    %v1233 = vunpack.c.h.b16 %v307
    %v1234 = vunpack.c.l.b16 %v308
    %v1235 = vunpack.c.h.b16 %v308
    %v1236 = vunpack.c.l.b16 %v309
    %v1237 = vunpack.c.h.b16 %v309
    %v1238 = vunpack.c.l.b16 %v310
    %v1239 = vunpack.c.h.b16 %v310
    %v1240 = vunpack.c.l.b16 %v311
    %v1241 = vunpack.c.h.b16 %v311
    %v1242 = vunpack.c.l.b16 %v312
    %v1243 = vunpack.c.h.b16 %v312
    %v1244 = vunpack.c.l.b16 %v313
    %v1245 = vunpack.c.h.b16 %v313
    %v1246 = vunpack.c.l.b16 %v314
    %v1247 = vunpack.c.h.b16 %v314
    %v1248 = vunpack.c.l.b16 %v315
    %v1249 = vunpack.c.h.b16 %v315
    %v1250 = vunpack.c.l.b16 %v316
    %v1251 = vunpack.c.h.b16 %v316
    %v1252 = vunpack.c.l.b16 %v317
    %v1253 = vunpack.c.h.b16 %v317
    %v1254 = vunpack.c.l.b16 %v318
    %v1255 = vunpack.c.h.b16 %v318
    %v1256 = vunpack.c.l.b16 %v319
    %v1257 = vunpack.c.h.b16 %v319
    %v1258 = vunpack.c.l.b16 %v320
    %v1259 = vunpack.c.h.b16 %v320
    %v1260 = vunpack.c.l.b16 %v321
    %v1261 = vunpack.c.h.b16 %v321
    %v1262 = vpack.c.b16 %v690, %v686
    %v1263 = vpack.c.b16 %v691, %v687
    %v1264 = vpack.c.b16 %v692, %v688
    %v1265 = vpack.c.b16 %v693, %v689
    %v1266 = vpack.c.b16 %v698, %v694
    %v1267 = vpack.c.b16 %v699, %v695
    %v1268 = vpack.c.b16 %v700, %v696
    %v1269 = vpack.c.b16 %v701, %v697
    %v1270 = vpack.c.b16 %v706, %v702
    %v1271 = vpack.c.b16 %v707, %v703
    %v1272 = vpack.c.b16 %v708, %v704
    %v1273 = vpack.c.b16 %v709, %v705
    %v1274 = vpack.c.b16 %v714, %v710
    %v1275 = vpack.c.b16 %v715, %v711
    %v1276 = vpack.c.b16 %v716, %v712
    %v1277 = vpack.c.b16 %v717, %v713
    %v1278 = vpack.c.b16 %v722, %v718
    %v1279 = vpack.c.b16 %v723, %v719
    %v1280 = vpack.c.b16 %v724, %v720
    %v1281 = vpack.c.b16 %v725, %v721
    %v1282 = vpack.c.b16 %v730, %v726
    %v1283 = vpack.c.b16 %v731, %v727
    %v1284 = vpack.c.b16 %v732, %v728
    %v1285 = vpack.c.b16 %v733, %v729
    %v1286 = vpack.c.b16 %v738, %v734
    %v1287 = vpack.c.b16 %v739, %v735
    %v1288 = vpack.c.b16 %v740, %v736
    %v1289 = vpack.c.b16 %v741, %v737
    %v1290 = vpack.c.b16 %v746, %v742
    %v1291 = vpack.c.b16 %v747, %v743
    %v1292 = vpack.c.b16 %v748, %v744
    %v1293 = vpack.c.b16 %v749, %v745
    %v1294 = vpack.c.b16 %v754, %v750
    %v1295 = vpack.c.b16 %v755, %v751
    %v1296 = vpack.c.b16 %v756, %v752
    %v1297 = vpack.c.b16 %v757, %v753
    %v1298 = vpack.c.b16 %v762, %v758
    %v1299 = vpack.c.b16 %v763, %v759
    %v1300 = vpack.c.b16 %v764, %v760
    %v1301 = vpack.c.b16 %v765, %v761
    %v1302 = vpack.c.b16 %v770, %v766
    %v1303 = vpack.c.b16 %v771, %v767
    %v1304 = vpack.c.b16 %v772, %v768
    %v1305 = vpack.c.b16 %v773, %v769
    %v1306 = vpack.c.b16 %v778, %v774
    %v1307 = vpack.c.b16 %v779, %v775
    %v1308 = vpack.c.b16 %v780, %v776
    %v1309 = vpack.c.b16 %v781, %v777
    %v1310 = vpack.c.b16 %v786, %v782
    %v1311 = vpack.c.b16 %v787, %v783
    %v1312 = vpack.c.b16 %v788, %v784
    %v1313 = vpack.c.b16 %v789, %v785
    %v1314 = vpack.c.b16 %v794, %v790
    %v1315 = vpack.c.b16 %v795, %v791
    %v1316 = vpack.c.b16 %v796, %v792
    %v1317 = vpack.c.b16 %v797, %v793
    %v1318 = vpack.c.b16 %v802, %v798
    %v1319 = vpack.c.b16 %v803, %v799
    %v1320 = vpack.c.b16 %v804, %v800
    %v1321 = vpack.c.b16 %v805, %v801
    %v1322 = vpack.c.b16 %v810, %v806
    %v1323 = vpack.c.b16 %v811, %v807
    %v1324 = vpack.c.b16 %v812, %v808
    %v1325 = vpack.c.b16 %v813, %v809
    %v1326 = vpack.c.b16 %v818, %v814
    %v1327 = vpack.c.b16 %v819, %v815
    %v1328 = vpack.c.b16 %v820, %v816
    %v1329 = vpack.c.b16 %v821, %v817
    %v1330 = vpack.c.b16 %v826, %v822
    %v1331 = vpack.c.b16 %v827, %v823
    %v1332 = vpack.c.b16 %v828, %v824
    %v1333 = vpack.c.b16 %v829, %v825
    %v1334 = vpack.c.b16 %v834, %v830
    %v1335 = vpack.c.b16 %v835, %v831
    %v1336 = vpack.c.b16 %v836, %v832
    %v1337 = vpack.c.b16 %v837, %v833
    %v1338 = vpack.c.b16 %v842, %v838
    %v1339 = vpack.c.b16 %v843, %v839
    %v1340 = vpack.c.b16 %v844, %v840
    %v1341 = vpack.c.b16 %v845, %v841
    %v1342 = vpack.c.b16 %v850, %v846
    %v1343 = vpack.c.b16 %v851, %v847
    %v1344 = vpack.c.b16 %v852, %v848
    %v1345 = vpack.c.b16 %v853, %v849
    %v1346 = vpack.c.b16 %v858, %v854
    %v1347 = vpack.c.b16 %v859, %v855
    %v1348 = vpack.c.b16 %v860, %v856
    %v1349 = vpack.c.b16 %v861, %v857
    %v1350 = vpack.c.b16 %v866, %v862
    %v1351 = vpack.c.b16 %v867, %v863
    %v1352 = vpack.c.b16 %v868, %v864
    %v1353 = vpack.c.b16 %v869, %v865
    %v1354 = vpack.c.b16 %v874, %v870
    %v1355 = vpack.c.b16 %v875, %v871
    %v1356 = vpack.c.b16 %v876, %v872
    %v1357 = vpack.c.b16 %v877, %v873
    %v1358 = vpack.c.b16 %v882, %v878
    %v1359 = vpack.c.b16 %v883, %v879
    %v1360 = vpack.c.b16 %v884, %v880
    %v1361 = vpack.c.b16 %v885, %v881
    %v1362 = vpack.c.b16 %v890, %v886
    %v1363 = vpack.c.b16 %v891, %v887
    %v1364 = vpack.c.b16 %v892, %v888
    %v1365 = vpack.c.b16 %v893, %v889
    %v1366 = vpack.c.b16 %v898, %v894
    %v1367 = vpack.c.b16 %v899, %v895
    %v1368 = vpack.c.b16 %v900, %v896
    %v1369 = vpack.c.b16 %v901, %v897
    %v1370 = vpack.c.b16 %v906, %v902
    %v1371 = vpack.c.b16 %v907, %v903
    %v1372 = vpack.c.b16 %v908, %v904
    %v1373 = vpack.c.b16 %v909, %v905
    %v1374 = vpack.c.b16 %v914, %v910
    %v1375 = vpack.c.b16 %v915, %v911
    %v1376 = vpack.c.b16 %v916, %v912
    %v1377 = vpack.c.b16 %v917, %v913
    %v1378 = vpack.c.b16 %v922, %v918
    %v1379 = vpack.c.b16 %v923, %v919
    %v1380 = vpack.c.b16 %v924, %v920
    %v1381 = vpack.c.b16 %v925, %v921
    %v1382 = vpack.c.b16 %v930, %v926
    %v1383 = vpack.c.b16 %v931, %v927
    %v1384 = vpack.c.b16 %v932, %v928
    %v1385 = vpack.c.b16 %v933, %v929
    %v1386 = vpack.c.b16 %v938, %v934
    %v1387 = vpack.c.b16 %v939, %v935
    %v1388 = vpack.c.b16 %v940, %v936
    %v1389 = vpack.c.b16 %v941, %v937
    %v1390 = vpack.c.b16 %v946, %v942
    %v1391 = vpack.c.b16 %v947, %v943
    %v1392 = vpack.c.b16 %v948, %v944
    %v1393 = vpack.c.b16 %v949, %v945
    %v1394 = vpack.c.b16 %v954, %v950
    %v1395 = vpack.c.b16 %v955, %v951
    %v1396 = vpack.c.b16 %v956, %v952
    %v1397 = vpack.c.b16 %v957, %v953
    %v1398 = vpack.c.b16 %v962, %v958
    %v1399 = vpack.c.b16 %v963, %v959
    %v1400 = vpack.c.b16 %v964, %v960
    %v1401 = vpack.c.b16 %v965, %v961
    %v1402 = vpack.c.b16 %v970, %v966
    %v1403 = vpack.c.b16 %v971, %v967
    %v1404 = vpack.c.b16 %v972, %v968
    %v1405 = vpack.c.b16 %v973, %v969
    %v1406 = vpack.c.b16 %v978, %v974
    %v1407 = vpack.c.b16 %v979, %v975
    %v1408 = vpack.c.b16 %v980, %v976
    %v1409 = vpack.c.b16 %v981, %v977
    %v1410 = vpack.c.b16 %v986, %v982
    %v1411 = vpack.c.b16 %v987, %v983
    %v1412 = vpack.c.b16 %v988, %v984
    %v1413 = vpack.c.b16 %v989, %v985
    %v1414 = vpack.c.b16 %v994, %v990
    %v1415 = vpack.c.b16 %v995, %v991
    %v1416 = vpack.c.b16 %v996, %v992
    %v1417 = vpack.c.b16 %v997, %v993
    %v1418 = vpack.c.b16 %v1002, %v998
    %v1419 = vpack.c.b16 %v1003, %v999
    %v1420 = vpack.c.b16 %v1004, %v1000
    %v1421 = vpack.c.b16 %v1005, %v1001
    %v1422 = vpack.c.b16 %v1010, %v1006
    %v1423 = vpack.c.b16 %v1011, %v1007
    %v1424 = vpack.c.b16 %v1012, %v1008
    %v1425 = vpack.c.b16 %v1013, %v1009
    %v1426 = vpack.c.b16 %v1018, %v1014
    %v1427 = vpack.c.b16 %v1019, %v1015
    %v1428 = vpack.c.b16 %v1020, %v1016
    %v1429 = vpack.c.b16 %v1021, %v1017
    %v1430 = vpack.c.b16 %v1026, %v1022
    %v1431 = vpack.c.b16 %v1027, %v1023
    %v1432 = vpack.c.b16 %v1028, %v1024
    %v1433 = vpack.c.b16 %v1029, %v1025
    %v1434 = vpack.c.b16 %v1034, %v1030
    %v1435 = vpack.c.b16 %v1035, %v1031
    %v1436 = vpack.c.b16 %v1036, %v1032
    %v1437 = vpack.c.b16 %v1037, %v1033
    %v1438 = vpack.c.b16 %v1042, %v1038
    %v1439 = vpack.c.b16 %v1043, %v1039
    %v1440 = vpack.c.b16 %v1044, %v1040
    %v1441 = vpack.c.b16 %v1045, %v1041
    %v1442 = vpack.c.b16 %v1050, %v1046
    %v1443 = vpack.c.b16 %v1051, %v1047
    %v1444 = vpack.c.b16 %v1052, %v1048
    %v1445 = vpack.c.b16 %v1053, %v1049
    %v1446 = vpack.c.b16 %v1058, %v1054
    %v1447 = vpack.c.b16 %v1059, %v1055
    %v1448 = vpack.c.b16 %v1060, %v1056
    %v1449 = vpack.c.b16 %v1061, %v1057
    %v1450 = vpack.c.b16 %v1066, %v1062
    %v1451 = vpack.c.b16 %v1067, %v1063
    %v1452 = vpack.c.b16 %v1068, %v1064
    %v1453 = vpack.c.b16 %v1069, %v1065
    %v1454 = vpack.c.b16 %v1074, %v1070
    %v1455 = vpack.c.b16 %v1075, %v1071
    %v1456 = vpack.c.b16 %v1076, %v1072
    %v1457 = vpack.c.b16 %v1077, %v1073
    %v1458 = vpack.c.b16 %v1082, %v1078
    %v1459 = vpack.c.b16 %v1083, %v1079
    %v1460 = vpack.c.b16 %v1084, %v1080
    %v1461 = vpack.c.b16 %v1085, %v1081
    %v1462 = vpack.c.b16 %v1090, %v1086
    %v1463 = vpack.c.b16 %v1091, %v1087
    %v1464 = vpack.c.b16 %v1092, %v1088
    %v1465 = vpack.c.b16 %v1093, %v1089
    %v1466 = vpack.c.b16 %v1098, %v1094
    %v1467 = vpack.c.b16 %v1099, %v1095
    %v1468 = vpack.c.b16 %v1100, %v1096
    %v1469 = vpack.c.b16 %v1101, %v1097
    %v1470 = vpack.c.b16 %v1106, %v1102
    %v1471 = vpack.c.b16 %v1107, %v1103
    %v1472 = vpack.c.b16 %v1108, %v1104
    %v1473 = vpack.c.b16 %v1109, %v1105
    %v1474 = vpack.c.b16 %v1114, %v1110
    %v1475 = vpack.c.b16 %v1115, %v1111
    %v1476 = vpack.c.b16 %v1116, %v1112
    %v1477 = vpack.c.b16 %v1117, %v1113
    %v1478 = vpack.c.b16 %v1122, %v1118
    %v1479 = vpack.c.b16 %v1123, %v1119
    %v1480 = vpack.c.b16 %v1124, %v1120
    %v1481 = vpack.c.b16 %v1125, %v1121
    %v1482 = vpack.c.b16 %v1130, %v1126
    %v1483 = vpack.c.b16 %v1131, %v1127
    %v1484 = vpack.c.b16 %v1132, %v1128
    %v1485 = vpack.c.b16 %v1133, %v1129
    %v1486 = vpack.c.b16 %v1138, %v1134
    %v1487 = vpack.c.b16 %v1139, %v1135
    %v1488 = vpack.c.b16 %v1140, %v1136
    %v1489 = vpack.c.b16 %v1141, %v1137
    %v1490 = vpack.c.b16 %v1146, %v1142
    %v1491 = vpack.c.b16 %v1147, %v1143
    %v1492 = vpack.c.b16 %v1148, %v1144
    %v1493 = vpack.c.b16 %v1149, %v1145
    %v1494 = vpack.c.b16 %v1154, %v1150
    %v1495 = vpack.c.b16 %v1155, %v1151
    %v1496 = vpack.c.b16 %v1156, %v1152
    %v1497 = vpack.c.b16 %v1157, %v1153
    %v1498 = vpack.c.b16 %v1162, %v1158
    %v1499 = vpack.c.b16 %v1163, %v1159
    %v1500 = vpack.c.b16 %v1164, %v1160
    %v1501 = vpack.c.b16 %v1165, %v1161
    %v1502 = vpack.c.b16 %v1170, %v1166
    %v1503 = vpack.c.b16 %v1171, %v1167
    %v1504 = vpack.c.b16 %v1172, %v1168
    %v1505 = vpack.c.b16 %v1173, %v1169
    %v1506 = vpack.c.b16 %v1178, %v1174
    %v1507 = vpack.c.b16 %v1179, %v1175
    %v1508 = vpack.c.b16 %v1180, %v1176
    %v1509 = vpack.c.b16 %v1181, %v1177
    %v1510 = vpack.c.b16 %v1186, %v1182
    %v1511 = vpack.c.b16 %v1187, %v1183
    %v1512 = vpack.c.b16 %v1188, %v1184
    %v1513 = vpack.c.b16 %v1189, %v1185
    %v1514 = vpack.c.b16 %v1194, %v1190
    %v1515 = vpack.c.b16 %v1195, %v1191
    %v1516 = vpack.c.b16 %v1196, %v1192
    %v1517 = vpack.c.b16 %v1197, %v1193
    %v1518 = vpack.c.b16 %v1202, %v1198
    %v1519 = vpack.c.b16 %v1203, %v1199
    %v1520 = vpack.c.b16 %v1204, %v1200
    %v1521 = vpack.c.b16 %v1205, %v1201
    %v1522 = vpack.c.b16 %v1210, %v1206
    %v1523 = vpack.c.b16 %v1211, %v1207
    %v1524 = vpack.c.b16 %v1212, %v1208
    %v1525 = vpack.c.b16 %v1213, %v1209
    %v1526 = vpack.c.b16 %v1218, %v1214
    %v1527 = vpack.c.b16 %v1219, %v1215
    %v1528 = vpack.c.b16 %v1220, %v1216
    %v1529 = vpack.c.b16 %v1221, %v1217
    %v1530 = vpack.c.b16 %v1226, %v1222
    %v1531 = vpack.c.b16 %v1227, %v1223
    %v1532 = vpack.c.b16 %v1228, %v1224
    %v1533 = vpack.c.b16 %v1229, %v1225
    %v1534 = vpack.c.b16 %v1234, %v1230
    %v1535 = vpack.c.b16 %v1235, %v1231
    %v1536 = vpack.c.b16 %v1236, %v1232
    %v1537 = vpack.c.b16 %v1237, %v1233
    %v1538 = vpack.c.b16 %v1242, %v1238
    %v1539 = vpack.c.b16 %v1243, %v1239
    %v1540 = vpack.c.b16 %v1244, %v1240
    %v1541 = vpack.c.b16 %v1245, %v1241
    %v1542 = vpack.c.b16 %v1250, %v1246
    %v1543 = vpack.c.b16 %v1251, %v1247
    %v1544 = vpack.c.b16 %v1252, %v1248
    %v1545 = vpack.c.b16 %v1253, %v1249
    %v1546 = vpack.c.b16 %v1258, %v1254
    %v1547 = vpack.c.b16 %v1259, %v1255
    %v1548 = vpack.c.b16 %v1260, %v1256
    %v1549 = vpack.c.b16 %v1261, %v1257
    %1838 = vmatprep.subr.bf16.mxu0 %v1263
    %1839 = vmatpush1.bf16.msra.mxu0 %v1262
    %1840 = vmatprep.subr.bf16.mxu0 %v1267
    %1841 = vmatpush1.bf16.msra.mxu0 %v1266
    %1842 = vmatprep.subr.bf16.mxu0 %v1271
    %1843 = vmatpush1.bf16.msra.mxu0 %v1270
    %1844 = vmatprep.subr.bf16.mxu0 %v1275
    %1845 = vmatpush1.bf16.msra.mxu0 %v1274
    %1846 = vmatprep.subr.bf16.mxu0 %v1279
    %1847 = vmatpush1.bf16.msra.mxu0 %v1278
    %1848 = vmatprep.subr.bf16.mxu0 %v1283
    %1849 = vmatpush1.bf16.msra.mxu0 %v1282
    %1850 = vmatprep.subr.bf16.mxu0 %v1287
    %1851 = vmatpush1.bf16.msra.mxu0 %v1286
    %1852 = vmatprep.subr.bf16.mxu0 %v1291
    %1853 = vmatpush1.bf16.msra.mxu0 %v1290
    %1854 = vmatprep.subr.bf16.mxu0 %v1295
    %1855 = vmatpush1.bf16.msra.mxu0 %v1294
    %1856 = vmatprep.subr.bf16.mxu0 %v1299
    %1857 = vmatpush1.bf16.msra.mxu0 %v1298
    %1858 = vmatprep.subr.bf16.mxu0 %v1303
    %1859 = vmatpush1.bf16.msra.mxu0 %v1302
    %1860 = vmatprep.subr.bf16.mxu0 %v1307
    %1861 = vmatpush1.bf16.msra.mxu0 %v1306
    %1862 = vmatprep.subr.bf16.mxu0 %v1311
    %1863 = vmatpush1.bf16.msra.mxu0 %v1310
    %1864 = vmatprep.subr.bf16.mxu0 %v1315
    %1865 = vmatpush1.bf16.msra.mxu0 %v1314
    %1866 = vmatprep.subr.bf16.mxu0 %v1319
    %1867 = vmatpush1.bf16.msra.mxu0 %v1318
    %1868 = vmatprep.subr.bf16.mxu0 %v1323
    %1869 = vmatpush1.bf16.msra.mxu0 %v1322
    %1870 = vmatprep.mubr.bf16.mxu0 %v363
    %1871 = vmatmul.mubr.bf16.gmra.mrb[0].mxu0 %v349
    %v1872 = vpop.f32.mrb[0].mxu0
    %v1873 = vadd.f32 0.0, %v1872
    %v1874 = vpop.f32.mrb[0].mxu0
    %v1875 = vadd.f32 0.0, %v1874
    %v1876 = vpop.f32.mrb[0].mxu0
    %v1877 = vpop.f32.mrb[0].mxu0
    %1878 = vdwg.mxu0
    %1879 = vmatprep.subr.bf16.mxu0 %v1327
    %1880 = vmatpush1.bf16.msra.mxu0 %v1326
    %1881 = vmatprep.subr.bf16.mxu0 %v1331
    %1882 = vmatpush1.bf16.msra.mxu0 %v1330
    %1883 = vmatprep.subr.bf16.mxu0 %v1335
    %1884 = vmatpush1.bf16.msra.mxu0 %v1334
    %1885 = vmatprep.subr.bf16.mxu0 %v1339
    %1886 = vmatpush1.bf16.msra.mxu0 %v1338
    %1887 = vmatprep.subr.bf16.mxu0 %v1343
    %1888 = vmatpush1.bf16.msra.mxu0 %v1342
    %1889 = vmatprep.subr.bf16.mxu0 %v1347
    %1890 = vmatpush1.bf16.msra.mxu0 %v1346
    %1891 = vmatprep.subr.bf16.mxu0 %v1351
    %1892 = vmatpush1.bf16.msra.mxu0 %v1350
    %1893 = vmatprep.subr.bf16.mxu0 %v1355
    %1894 = vmatpush1.bf16.msra.mxu0 %v1354
    %1895 = vmatprep.subr.bf16.mxu0 %v1359
    %1896 = vmatpush1.bf16.msra.mxu0 %v1358
    %1897 = vmatprep.subr.bf16.mxu0 %v1363
    %1898 = vmatpush1.bf16.msra.mxu0 %v1362
    %1899 = vmatprep.subr.bf16.mxu0 %v1367
    %1900 = vmatpush1.bf16.msra.mxu0 %v1366
    %1901 = vmatprep.subr.bf16.mxu0 %v1371
    %1902 = vmatpush1.bf16.msra.mxu0 %v1370
    %1903 = vmatprep.subr.bf16.mxu0 %v1375
    %1904 = vmatpush1.bf16.msra.mxu0 %v1374
    %1905 = vmatprep.subr.bf16.mxu0 %v1379
    %1906 = vmatpush1.bf16.msra.mxu0 %v1378
    %1907 = vmatprep.subr.bf16.mxu0 %v1383
    %1908 = vmatpush1.bf16.msra.mxu0 %v1382
    %1909 = vmatprep.subr.bf16.mxu0 %v1387
    %1910 = vmatpush1.bf16.msra.mxu0 %v1386
    %1911 = vmatprep.mubr.bf16.mxu0 %v373
    %1912 = vmatmul.mubr.bf16.gmra.mrb[0].mxu0 %v371
    %v1913 = vpop.f32.mrb[0].mxu0
    %v1914 = vadd.f32 %v1873, %v1913
    %v1915 = vpop.f32.mrb[0].mxu0
    %v1916 = vadd.f32 %v1875, %v1915
    %v1917 = vpop.f32.mrb[0].mxu0
    %v1918 = vpop.f32.mrb[0].mxu0
    %1919 = vdwg.mxu0
    %1920 = vmatprep.subr.bf16.mxu0 %v1391
    %1921 = vmatpush1.bf16.msra.mxu0 %v1390
    %1922 = vmatprep.subr.bf16.mxu0 %v1395
    %1923 = vmatpush1.bf16.msra.mxu0 %v1394
    %1924 = vmatprep.subr.bf16.mxu0 %v1399
    %1925 = vmatpush1.bf16.msra.mxu0 %v1398
    %1926 = vmatprep.subr.bf16.mxu0 %v1403
    %1927 = vmatpush1.bf16.msra.mxu0 %v1402
    %1928 = vmatprep.subr.bf16.mxu0 %v1407
    %1929 = vmatpush1.bf16.msra.mxu0 %v1406
    %1930 = vmatprep.subr.bf16.mxu0 %v1411
    %1931 = vmatpush1.bf16.msra.mxu0 %v1410
    %1932 = vmatprep.subr.bf16.mxu0 %v1415
    %1933 = vmatpush1.bf16.msra.mxu0 %v1414
    %1934 = vmatprep.subr.bf16.mxu0 %v1419
    %1935 = vmatpush1.bf16.msra.mxu0 %v1418
    %1936 = vmatprep.subr.bf16.mxu0 %v1423
    %1937 = vmatpush1.bf16.msra.mxu0 %v1422
    %1938 = vmatprep.subr.bf16.mxu0 %v1427
    %1939 = vmatpush1.bf16.msra.mxu0 %v1426
    %1940 = vmatprep.subr.bf16.mxu0 %v1431
    %1941 = vmatpush1.bf16.msra.mxu0 %v1430
    %1942 = vmatprep.subr.bf16.mxu0 %v1435
    %1943 = vmatpush1.bf16.msra.mxu0 %v1434
    %1944 = vmatprep.subr.bf16.mxu0 %v1439
    %1945 = vmatpush1.bf16.msra.mxu0 %v1438
    %1946 = vmatprep.subr.bf16.mxu0 %v1443
    %1947 = vmatpush1.bf16.msra.mxu0 %v1442
    %1948 = vmatprep.subr.bf16.mxu0 %v1447
    %1949 = vmatpush1.bf16.msra.mxu0 %v1446
    %1950 = vmatprep.subr.bf16.mxu0 %v1451
    %1951 = vmatpush1.bf16.msra.mxu0 %v1450
    %1952 = vmatprep.mubr.bf16.mxu0 %v370
    %1953 = vmatmul.mubr.bf16.gmra.mrb[0].mxu0 %v356
    %v1954 = vpop.f32.mrb[0].mxu0
    %v1955 = vadd.f32 %v1914, %v1954
    %v1956 = vpop.f32.mrb[0].mxu0
    %v1957 = vadd.f32 %v1916, %v1956
    %v1958 = vpop.f32.mrb[0].mxu0
    %v1959 = vpop.f32.mrb[0].mxu0
    %1960 = vdwg.mxu0
    %1961 = vmatprep.subr.bf16.mxu0 %v1455
    %1962 = vmatpush1.bf16.msra.mxu0 %v1454
    %1963 = vmatprep.subr.bf16.mxu0 %v1459
    %1964 = vmatpush1.bf16.msra.mxu0 %v1458
    %1965 = vmatprep.subr.bf16.mxu0 %v1463
    %1966 = vmatpush1.bf16.msra.mxu0 %v1462
    %1967 = vmatprep.subr.bf16.mxu0 %v1467
    %1968 = vmatpush1.bf16.msra.mxu0 %v1466
    %1969 = vmatprep.subr.bf16.mxu0 %v1471
    %1970 = vmatpush1.bf16.msra.mxu0 %v1470
    %1971 = vmatprep.subr.bf16.mxu0 %v1475
    %1972 = vmatpush1.bf16.msra.mxu0 %v1474
    %1973 = vmatprep.subr.bf16.mxu0 %v1479
    %1974 = vmatpush1.bf16.msra.mxu0 %v1478
    %1975 = vmatprep.subr.bf16.mxu0 %v1483
    %1976 = vmatpush1.bf16.msra.mxu0 %v1482
    %1977 = vmatprep.subr.bf16.mxu0 %v1487
    %1978 = vmatpush1.bf16.msra.mxu0 %v1486
    %1979 = vmatprep.subr.bf16.mxu0 %v1491
    %1980 = vmatpush1.bf16.msra.mxu0 %v1490
    %1981 = vmatprep.subr.bf16.mxu0 %v1495
    %1982 = vmatpush1.bf16.msra.mxu0 %v1494
    %1983 = vmatprep.subr.bf16.mxu0 %v1499
    %1984 = vmatpush1.bf16.msra.mxu0 %v1498
    %1985 = vmatprep.subr.bf16.mxu0 %v1503
    %1986 = vmatpush1.bf16.msra.mxu0 %v1502
    %1987 = vmatprep.subr.bf16.mxu0 %v1507
    %1988 = vmatpush1.bf16.msra.mxu0 %v1506
    %1989 = vmatprep.subr.bf16.mxu0 %v1511
    %1990 = vmatpush1.bf16.msra.mxu0 %v1510
    %1991 = vmatprep.subr.bf16.mxu0 %v1515
    %1992 = vmatpush1.bf16.msra.mxu0 %v1514
    %1993 = vmatprep.mubr.bf16.mxu0 %v374
    %1994 = vmatmul.mubr.bf16.gmra.mrb[0].mxu0 %v372
    %v1995 = vpop.f32.mrb[0].mxu0
    %v1996 = vadd.f32 %v1955, %v1995
    %v1997 = vpop.f32.mrb[0].mxu0
    %v1998 = vadd.f32 %v1957, %v1997
    %v1999 = vpop.f32.mrb[0].mxu0
    %v2000 = vpop.f32.mrb[0].mxu0
    %2001 = vdwg.mxu0
    %2002 = vmatprep.subr.bf16.mxu0 %v1519
    %2003 = vmatpush1.bf16.msra.mxu0 %v1518
    %2004 = vmatprep.subr.bf16.mxu0 %v1523
    %2005 = vmatpush1.bf16.msra.mxu0 %v1522
    %2006 = vmatprep.subr.bf16.mxu0 %v1527
    %2007 = vmatpush1.bf16.msra.mxu0 %v1526
    %2008 = vmatprep.subr.bf16.mxu0 %v1531
    %2009 = vmatpush1.bf16.msra.mxu0 %v1530
    %2010 = vmatprep.subr.bf16.mxu0 %v1535
    %2011 = vmatpush1.bf16.msra.mxu0 %v1534
    %2012 = vmatprep.subr.bf16.mxu0 %v1539
    %2013 = vmatpush1.bf16.msra.mxu0 %v1538
    %2014 = vmatprep.subr.bf16.mxu0 %v1543
    %2015 = vmatpush1.bf16.msra.mxu0 %v1542
    %2016 = vmatprep.subr.bf16.mxu0 %v1547
    %2017 = vmatpush1.bf16.msra.mxu0 %v1546
    %2018 = vmatprep.subr.bf16.mxu0 0
    %2019 = vmatpush1.bf16.msra.mxu0 0
    %2020 = vmatprep.subr.bf16.mxu0 0
    %2021 = vmatpush1.bf16.msra.mxu0 0
    %2022 = vmatprep.subr.bf16.mxu0 0
    %2023 = vmatpush1.bf16.msra.mxu0 0
    %2024 = vmatprep.subr.bf16.mxu0 0
    %2025 = vmatpush1.bf16.msra.mxu0 0
    %2026 = vmatprep.subr.bf16.mxu0 0
    %2027 = vmatpush1.bf16.msra.mxu0 0
    %2028 = vmatprep.subr.bf16.mxu0 0
    %2029 = vmatpush1.bf16.msra.mxu0 0
    %2030 = vmatprep.subr.bf16.mxu0 0
    %2031 = vmatpush1.bf16.msra.mxu0 0
    %2032 = vmatprep.subr.bf16.mxu0 0
    %2033 = vmatpush1.bf16.msra.mxu0 0
    %2034 = vmatprep.mubr.bf16.mxu0 0
    %2035 = vmatmul.mubr.bf16.gmra.mrb[0].mxu0 %v388
    %v2036 = vpop.f32.mrb[0].mxu0
    %v2037 = vadd.f32 %v1996, %v2036
    %v2038 = vpop.f32.mrb[0].mxu0
    %v2039 = vadd.f32 %v1998, %v2038
    %v2040 = vpop.f32.mrb[0].mxu0
    %v2041 = vpop.f32.mrb[0].mxu0
    %2042 = vdwg.mxu0
    %2043 = vmatprep.subr.bf16.mxu0 %v1265
    %2044 = vmatpush1.bf16.msra.mxu0 %v1264
    %2045 = vmatprep.subr.bf16.mxu0 %v1269
    %2046 = vmatpush1.bf16.msra.mxu0 %v1268
    %2047 = vmatprep.subr.bf16.mxu0 %v1273
    %2048 = vmatpush1.bf16.msra.mxu0 %v1272
    %2049 = vmatprep.subr.bf16.mxu0 %v1277
    %2050 = vmatpush1.bf16.msra.mxu0 %v1276
    %2051 = vmatprep.subr.bf16.mxu0 %v1281
    %2052 = vmatpush1.bf16.msra.mxu0 %v1280
    %2053 = vmatprep.subr.bf16.mxu0 %v1285
    %2054 = vmatpush1.bf16.msra.mxu0 %v1284
    %2055 = vmatprep.subr.bf16.mxu0 %v1289
    %2056 = vmatpush1.bf16.msra.mxu0 %v1288
    %2057 = vmatprep.subr.bf16.mxu0 %v1293
    %2058 = vmatpush1.bf16.msra.mxu0 %v1292
    %2059 = vmatprep.subr.bf16.mxu0 %v1297
    %2060 = vmatpush1.bf16.msra.mxu0 %v1296
    %2061 = vmatprep.subr.bf16.mxu0 %v1301
    %2062 = vmatpush1.bf16.msra.mxu0 %v1300
    %2063 = vmatprep.subr.bf16.mxu0 %v1305
    %2064 = vmatpush1.bf16.msra.mxu0 %v1304
    %2065 = vmatprep.subr.bf16.mxu0 %v1309
    %2066 = vmatpush1.bf16.msra.mxu0 %v1308
    %2067 = vmatprep.subr.bf16.mxu0 %v1313
    %2068 = vmatpush1.bf16.msra.mxu0 %v1312
    %2069 = vmatprep.subr.bf16.mxu0 %v1317
    %2070 = vmatpush1.bf16.msra.mxu0 %v1316
    %2071 = vmatprep.subr.bf16.mxu0 %v1321
    %2072 = vmatpush1.bf16.msra.mxu0 %v1320
    %2073 = vmatprep.subr.bf16.mxu0 %v1325
    %2074 = vmatpush1.bf16.msra.mxu0 %v1324
    %2075 = vmatprep.mubr.bf16.mxu0 %v363
    %2076 = vmatmul.mubr.bf16.gmra.mrb[0].mxu0 %v349
    %v2077 = vpop.f32.mrb[0].mxu0
    %v2078 = vadd.f32 0.0, %v2077
    %v2079 = vpop.f32.mrb[0].mxu0
    %v2080 = vadd.f32 0.0, %v2079
    %v2081 = vpop.f32.mrb[0].mxu0
    %v2082 = vpop.f32.mrb[0].mxu0
    %2083 = vdwg.mxu0
    %2084 = vmatprep.subr.bf16.mxu0 %v1329
    %2085 = vmatpush1.bf16.msra.mxu0 %v1328
    %2086 = vmatprep.subr.bf16.mxu0 %v1333
    %2087 = vmatpush1.bf16.msra.mxu0 %v1332
    %2088 = vmatprep.subr.bf16.mxu0 %v1337
    %2089 = vmatpush1.bf16.msra.mxu0 %v1336
    %2090 = vmatprep.subr.bf16.mxu0 %v1341
    %2091 = vmatpush1.bf16.msra.mxu0 %v1340
    %2092 = vmatprep.subr.bf16.mxu0 %v1345
    %2093 = vmatpush1.bf16.msra.mxu0 %v1344
    %2094 = vmatprep.subr.bf16.mxu0 %v1349
    %2095 = vmatpush1.bf16.msra.mxu0 %v1348
    %2096 = vmatprep.subr.bf16.mxu0 %v1353
    %2097 = vmatpush1.bf16.msra.mxu0 %v1352
    %2098 = vmatprep.subr.bf16.mxu0 %v1357
    %2099 = vmatpush1.bf16.msra.mxu0 %v1356
    %2100 = vmatprep.subr.bf16.mxu0 %v1361
    %2101 = vmatpush1.bf16.msra.mxu0 %v1360
    %2102 = vmatprep.subr.bf16.mxu0 %v1365
    %2103 = vmatpush1.bf16.msra.mxu0 %v1364
    %2104 = vmatprep.subr.bf16.mxu0 %v1369
    %2105 = vmatpush1.bf16.msra.mxu0 %v1368
    %2106 = vmatprep.subr.bf16.mxu0 %v1373
    %2107 = vmatpush1.bf16.msra.mxu0 %v1372
    %2108 = vmatprep.subr.bf16.mxu0 %v1377
    %2109 = vmatpush1.bf16.msra.mxu0 %v1376
    %2110 = vmatprep.subr.bf16.mxu0 %v1381
    %2111 = vmatpush1.bf16.msra.mxu0 %v1380
    %2112 = vmatprep.subr.bf16.mxu0 %v1385
    %2113 = vmatpush1.bf16.msra.mxu0 %v1384
    %2114 = vmatprep.subr.bf16.mxu0 %v1389
    %2115 = vmatpush1.bf16.msra.mxu0 %v1388
    %2116 = vmatprep.mubr.bf16.mxu0 %v373
    %2117 = vmatmul.mubr.bf16.gmra.mrb[0].mxu0 %v371
    %v2118 = vpop.f32.mrb[0].mxu0
    %v2119 = vadd.f32 %v2078, %v2118
    %v2120 = vpop.f32.mrb[0].mxu0
    %v2121 = vadd.f32 %v2080, %v2120
    %v2122 = vpop.f32.mrb[0].mxu0
    %v2123 = vpop.f32.mrb[0].mxu0
    %2124 = vdwg.mxu0
    %2125 = vmatprep.subr.bf16.mxu0 %v1393
    %2126 = vmatpush1.bf16.msra.mxu0 %v1392
    %2127 = vmatprep.subr.bf16.mxu0 %v1397
    %2128 = vmatpush1.bf16.msra.mxu0 %v1396
    %2129 = vmatprep.subr.bf16.mxu0 %v1401
    %2130 = vmatpush1.bf16.msra.mxu0 %v1400
    %2131 = vmatprep.subr.bf16.mxu0 %v1405
    %2132 = vmatpush1.bf16.msra.mxu0 %v1404
    %2133 = vmatprep.subr.bf16.mxu0 %v1409
    %2134 = vmatpush1.bf16.msra.mxu0 %v1408
    %2135 = vmatprep.subr.bf16.mxu0 %v1413
    %2136 = vmatpush1.bf16.msra.mxu0 %v1412
    %2137 = vmatprep.subr.bf16.mxu0 %v1417
    %2138 = vmatpush1.bf16.msra.mxu0 %v1416
    %2139 = vmatprep.subr.bf16.mxu0 %v1421
    %2140 = vmatpush1.bf16.msra.mxu0 %v1420
    %2141 = vmatprep.subr.bf16.mxu0 %v1425
    %2142 = vmatpush1.bf16.msra.mxu0 %v1424
    %2143 = vmatprep.subr.bf16.mxu0 %v1429
    %2144 = vmatpush1.bf16.msra.mxu0 %v1428
    %2145 = vmatprep.subr.bf16.mxu0 %v1433
    %2146 = vmatpush1.bf16.msra.mxu0 %v1432
    %2147 = vmatprep.subr.bf16.mxu0 %v1437
    %2148 = vmatpush1.bf16.msra.mxu0 %v1436
    %2149 = vmatprep.subr.bf16.mxu0 %v1441
    %2150 = vmatpush1.bf16.msra.mxu0 %v1440
    %2151 = vmatprep.subr.bf16.mxu0 %v1445
    %2152 = vmatpush1.bf16.msra.mxu0 %v1444
    %2153 = vmatprep.subr.bf16.mxu0 %v1449
    %2154 = vmatpush1.bf16.msra.mxu0 %v1448
    %2155 = vmatprep.subr.bf16.mxu0 %v1453
    %2156 = vmatpush1.bf16.msra.mxu0 %v1452
    %2157 = vmatprep.mubr.bf16.mxu0 %v370
    %2158 = vmatmul.mubr.bf16.gmra.mrb[0].mxu0 %v356
    %v2159 = vpop.f32.mrb[0].mxu0
    %v2160 = vadd.f32 %v2119, %v2159
    %v2161 = vpop.f32.mrb[0].mxu0
    %v2162 = vadd.f32 %v2121, %v2161
    %v2163 = vpop.f32.mrb[0].mxu0
    %v2164 = vpop.f32.mrb[0].mxu0
    %2165 = vdwg.mxu0
    %2166 = vmatprep.subr.bf16.mxu0 %v1457
    %2167 = vmatpush1.bf16.msra.mxu0 %v1456
    %2168 = vmatprep.subr.bf16.mxu0 %v1461
    %2169 = vmatpush1.bf16.msra.mxu0 %v1460
    %2170 = vmatprep.subr.bf16.mxu0 %v1465
    %2171 = vmatpush1.bf16.msra.mxu0 %v1464
    %2172 = vmatprep.subr.bf16.mxu0 %v1469
    %2173 = vmatpush1.bf16.msra.mxu0 %v1468
    %2174 = vmatprep.subr.bf16.mxu0 %v1473
    %2175 = vmatpush1.bf16.msra.mxu0 %v1472
    %2176 = vmatprep.subr.bf16.mxu0 %v1477
    %2177 = vmatpush1.bf16.msra.mxu0 %v1476
    %2178 = vmatprep.subr.bf16.mxu0 %v1481
    %2179 = vmatpush1.bf16.msra.mxu0 %v1480
    %2180 = vmatprep.subr.bf16.mxu0 %v1485
    %2181 = vmatpush1.bf16.msra.mxu0 %v1484
    %2182 = vmatprep.subr.bf16.mxu0 %v1489
    %2183 = vmatpush1.bf16.msra.mxu0 %v1488
    %2184 = vmatprep.subr.bf16.mxu0 %v1493
    %2185 = vmatpush1.bf16.msra.mxu0 %v1492
    %2186 = vmatprep.subr.bf16.mxu0 %v1497
    %2187 = vmatpush1.bf16.msra.mxu0 %v1496
    %2188 = vmatprep.subr.bf16.mxu0 %v1501
    %2189 = vmatpush1.bf16.msra.mxu0 %v1500
    %2190 = vmatprep.subr.bf16.mxu0 %v1505
    %2191 = vmatpush1.bf16.msra.mxu0 %v1504
    %2192 = vmatprep.subr.bf16.mxu0 %v1509
    %2193 = vmatpush1.bf16.msra.mxu0 %v1508
    %2194 = vmatprep.subr.bf16.mxu0 %v1513
    %2195 = vmatpush1.bf16.msra.mxu0 %v1512
    %2196 = vmatprep.subr.bf16.mxu0 %v1517
    %2197 = vmatpush1.bf16.msra.mxu0 %v1516
    %2198 = vmatprep.mubr.bf16.mxu0 %v374
    %2199 = vmatmul.mubr.bf16.gmra.mrb[0].mxu0 %v372
    %v2200 = vpop.f32.mrb[0].mxu0
    %v2201 = vadd.f32 %v2160, %v2200
    %v2202 = vpop.f32.mrb[0].mxu0
    %v2203 = vadd.f32 %v2162, %v2202
    %v2204 = vpop.f32.mrb[0].mxu0
    %v2205 = vpop.f32.mrb[0].mxu0
    %2206 = vdwg.mxu0
    %2207 = vmatprep.subr.bf16.mxu0 %v1521
    %2208 = vmatpush1.bf16.msra.mxu0 %v1520
    %2209 = vmatprep.subr.bf16.mxu0 %v1525
    %2210 = vmatpush1.bf16.msra.mxu0 %v1524
    %2211 = vmatprep.subr.bf16.mxu0 %v1529
    %2212 = vmatpush1.bf16.msra.mxu0 %v1528
    %2213 = vmatprep.subr.bf16.mxu0 %v1533
    %2214 = vmatpush1.bf16.msra.mxu0 %v1532
    %2215 = vmatprep.subr.bf16.mxu0 %v1537
    %2216 = vmatpush1.bf16.msra.mxu0 %v1536
    %2217 = vmatprep.subr.bf16.mxu0 %v1541
    %2218 = vmatpush1.bf16.msra.mxu0 %v1540
    %2219 = vmatprep.subr.bf16.mxu0 %v1545
    %2220 = vmatpush1.bf16.msra.mxu0 %v1544
    %2221 = vmatprep.subr.bf16.mxu0 %v1549
    %2222 = vmatpush1.bf16.msra.mxu0 %v1548
    %2223 = vmatprep.subr.bf16.mxu0 0
    %2224 = vmatpush1.bf16.msra.mxu0 0
    %2225 = vmatprep.subr.bf16.mxu0 0
    %2226 = vmatpush1.bf16.msra.mxu0 0
    %2227 = vmatprep.subr.bf16.mxu0 0
    %2228 = vmatpush1.bf16.msra.mxu0 0
    %2229 = vmatprep.subr.bf16.mxu0 0
    %2230 = vmatpush1.bf16.msra.mxu0 0
    %2231 = vmatprep.subr.bf16.mxu0 0
    %2232 = vmatpush1.bf16.msra.mxu0 0
    %2233 = vmatprep.subr.bf16.mxu0 0
    %2234 = vmatpush1.bf16.msra.mxu0 0
    %2235 = vmatprep.subr.bf16.mxu0 0
    %2236 = vmatpush1.bf16.msra.mxu0 0
    %2237 = vmatprep.subr.bf16.mxu0 0
    %2238 = vmatpush1.bf16.msra.mxu0 0
    %2239 = vmatprep.mubr.bf16.mxu0 0
    %2240 = vmatmul.mubr.bf16.gmra.mrb[0].mxu0 %v388
    %v2241 = vpop.f32.mrb[0].mxu0
    %v2242 = vadd.f32 %v2201, %v2241
    %v2243 = vpop.f32.mrb[0].mxu0
    %v2244 = vadd.f32 %v2203, %v2243
    %v2245 = vpop.f32.mrb[0].mxu0
    %v2246 = vpop.f32.mrb[0].mxu0
    %2247 = vdwg.mxu0
    %s2248 = scalar_lea.vmem %s0, 9
    %v2249 = vld [vmem:[%s2248] sm:$0xff]
    %v2250 = vld [vmem:[%s2248 + $0x8] sm:$0x1]
    %v2253 = vcombine.high %v2249, %v2249
    %v2255 = vunpack.c.l.s4 1966171168
    %v2256 = vunpack.c.0.s8 %v2255
    %v2257 = vlaneseq
    %v2258 = vshrl.u32 %v2257, 7
    %v2259 = vsub.s32 %v2256, %v2258
    %v2260 = vrot.slane %v2249, %v2259
    %v2262 = vunpack.c.l.s4 1966171168
    %v2263 = vunpack.c.0.s8 %v2262
    %v2264 = vlaneseq
    %v2265 = vshrl.u32 %v2264, 7
    %v2266 = vsub.s32 %v2263, %v2265
    %v2267 = vrot.slane %v2253, %v2266
    %v2268 = vcombine.high %v2260, %v2260
    %v2269 = vcombine.high %v2267, %v2267
    %v2271 = vunpack.c.l.s4 1966171168
    %v2272 = vunpack.c.0.s8 %v2271
    %v2273 = vlaneseq
    %v2274 = vshrl.u32 %v2273, 7
    %v2275 = vsub.s32 %v2272, %v2274
    %v2276 = vrot.slane %v2260, %v2275
    %v2278 = vunpack.c.l.s4 1966171168
    %v2279 = vunpack.c.0.s8 %v2278
    %v2280 = vlaneseq
    %v2281 = vshrl.u32 %v2280, 7
    %v2282 = vsub.s32 %v2279, %v2281
    %v2283 = vrot.slane %v2267, %v2282
    %v2285 = vunpack.c.l.s4 1966171168
    %v2286 = vunpack.c.0.s8 %v2285
    %v2287 = vlaneseq
    %v2288 = vshrl.u32 %v2287, 7
    %v2289 = vsub.s32 %v2286, %v2288
    %v2290 = vrot.slane %v2268, %v2289
    %v2292 = vunpack.c.l.s4 1966171168
    %v2293 = vunpack.c.0.s8 %v2292
    %v2294 = vlaneseq
    %v2295 = vshrl.u32 %v2294, 7
    %v2296 = vsub.s32 %v2293, %v2295
    %v2297 = vrot.slane %v2269, %v2296
    %v2298 = vcombine.high %v2276, %v2276
    %v2299 = vcombine.high %v2283, %v2283
    %v2300 = vcombine.high %v2290, %v2290
    %v2301 = vcombine.high %v2297, %v2297
    %v2303 = vunpack.c.l.s4 1966171168
    %v2304 = vunpack.c.0.s8 %v2303
    %v2305 = vlaneseq
    %v2306 = vshrl.u32 %v2305, 7
    %v2307 = vsub.s32 %v2304, %v2306
    %v2308 = vrot.slane %v2250, %v2307
    %v2310 = vunpack.c.l.s4 1966171168
    %v2311 = vunpack.c.0.s8 %v2310
    %v2312 = vlaneseq
    %v2313 = vshrl.u32 %v2312, 7
    %v2314 = vsub.s32 %v2311, %v2313
    %v2315 = vrot.slane %v2308, %v2314
    %2325 = vmatprep.subr.bf16.mxu0 %v1263
    %2326 = vmatpush1.bf16.msra.mxu0 %v1262
    %2327 = vmatprep.subr.bf16.mxu0 %v1267
    %2328 = vmatpush1.bf16.msra.mxu0 %v1266
    %2329 = vmatprep.subr.bf16.mxu0 %v1271
    %2330 = vmatpush1.bf16.msra.mxu0 %v1270
    %2331 = vmatprep.subr.bf16.mxu0 %v1275
    %2332 = vmatpush1.bf16.msra.mxu0 %v1274
    %2333 = vmatprep.subr.bf16.mxu0 %v1279
    %2334 = vmatpush1.bf16.msra.mxu0 %v1278
    %2335 = vmatprep.subr.bf16.mxu0 %v1283
    %2336 = vmatpush1.bf16.msra.mxu0 %v1282
    %2337 = vmatprep.subr.bf16.mxu0 %v1287
    %2338 = vmatpush1.bf16.msra.mxu0 %v1286
    %2339 = vmatprep.subr.bf16.mxu0 %v1291
    %2340 = vmatpush1.bf16.msra.mxu0 %v1290
    %2341 = vmatprep.subr.bf16.mxu0 %v1295
    %2342 = vmatpush1.bf16.msra.mxu0 %v1294
    %2343 = vmatprep.subr.bf16.mxu0 %v1299
    %2344 = vmatpush1.bf16.msra.mxu0 %v1298
    %2345 = vmatprep.subr.bf16.mxu0 %v1303
    %2346 = vmatpush1.bf16.msra.mxu0 %v1302
    %2347 = vmatprep.subr.bf16.mxu0 %v1307
    %2348 = vmatpush1.bf16.msra.mxu0 %v1306
    %2349 = vmatprep.subr.bf16.mxu0 %v1311
    %2350 = vmatpush1.bf16.msra.mxu0 %v1310
    %2351 = vmatprep.subr.bf16.mxu0 %v1315
    %2352 = vmatpush1.bf16.msra.mxu0 %v1314
    %2353 = vmatprep.subr.bf16.mxu0 %v1319
    %2354 = vmatpush1.bf16.msra.mxu0 %v1318
    %2355 = vmatprep.subr.bf16.mxu0 %v1323
    %2356 = vmatpush1.bf16.msra.mxu0 %v1322
    %2357 = vmatprep.mubr.bf16.mxu0 %v2290
    %2358 = vmatmul.mubr.bf16.gmra.mrb[0].mxu0 %v2276
    %v2359 = vpop.f32.mrb[0].mxu0
    %v2360 = vadd.f32 0.0, %v2359
    %v2361 = vpop.f32.mrb[0].mxu0
    %v2362 = vadd.f32 0.0, %v2361
    %v2363 = vpop.f32.mrb[0].mxu0
    %v2364 = vpop.f32.mrb[0].mxu0
    %2365 = vdwg.mxu0
    %2366 = vmatprep.subr.bf16.mxu0 %v1327
    %2367 = vmatpush1.bf16.msra.mxu0 %v1326
    %2368 = vmatprep.subr.bf16.mxu0 %v1331
    %2369 = vmatpush1.bf16.msra.mxu0 %v1330
    %2370 = vmatprep.subr.bf16.mxu0 %v1335
    %2371 = vmatpush1.bf16.msra.mxu0 %v1334
    %2372 = vmatprep.subr.bf16.mxu0 %v1339
    %2373 = vmatpush1.bf16.msra.mxu0 %v1338
    %2374 = vmatprep.subr.bf16.mxu0 %v1343
    %2375 = vmatpush1.bf16.msra.mxu0 %v1342
    %2376 = vmatprep.subr.bf16.mxu0 %v1347
    %2377 = vmatpush1.bf16.msra.mxu0 %v1346
    %2378 = vmatprep.subr.bf16.mxu0 %v1351
    %2379 = vmatpush1.bf16.msra.mxu0 %v1350
    %2380 = vmatprep.subr.bf16.mxu0 %v1355
    %2381 = vmatpush1.bf16.msra.mxu0 %v1354
    %2382 = vmatprep.subr.bf16.mxu0 %v1359
    %2383 = vmatpush1.bf16.msra.mxu0 %v1358
    %2384 = vmatprep.subr.bf16.mxu0 %v1363
    %2385 = vmatpush1.bf16.msra.mxu0 %v1362
    %2386 = vmatprep.subr.bf16.mxu0 %v1367
    %2387 = vmatpush1.bf16.msra.mxu0 %v1366
    %2388 = vmatprep.subr.bf16.mxu0 %v1371
    %2389 = vmatpush1.bf16.msra.mxu0 %v1370
    %2390 = vmatprep.subr.bf16.mxu0 %v1375
    %2391 = vmatpush1.bf16.msra.mxu0 %v1374
    %2392 = vmatprep.subr.bf16.mxu0 %v1379
    %2393 = vmatpush1.bf16.msra.mxu0 %v1378
    %2394 = vmatprep.subr.bf16.mxu0 %v1383
    %2395 = vmatpush1.bf16.msra.mxu0 %v1382
    %2396 = vmatprep.subr.bf16.mxu0 %v1387
    %2397 = vmatpush1.bf16.msra.mxu0 %v1386
    %2398 = vmatprep.mubr.bf16.mxu0 %v2300
    %2399 = vmatmul.mubr.bf16.gmra.mrb[0].mxu0 %v2298
    %v2400 = vpop.f32.mrb[0].mxu0
    %v2401 = vadd.f32 %v2360, %v2400
    %v2402 = vpop.f32.mrb[0].mxu0
    %v2403 = vadd.f32 %v2362, %v2402
    %v2404 = vpop.f32.mrb[0].mxu0
    %v2405 = vpop.f32.mrb[0].mxu0
    %2406 = vdwg.mxu0
    %2407 = vmatprep.subr.bf16.mxu0 %v1391
    %2408 = vmatpush1.bf16.msra.mxu0 %v1390
    %2409 = vmatprep.subr.bf16.mxu0 %v1395
    %2410 = vmatpush1.bf16.msra.mxu0 %v1394
    %2411 = vmatprep.subr.bf16.mxu0 %v1399
    %2412 = vmatpush1.bf16.msra.mxu0 %v1398
    %2413 = vmatprep.subr.bf16.mxu0 %v1403
    %2414 = vmatpush1.bf16.msra.mxu0 %v1402
    %2415 = vmatprep.subr.bf16.mxu0 %v1407
    %2416 = vmatpush1.bf16.msra.mxu0 %v1406
    %2417 = vmatprep.subr.bf16.mxu0 %v1411
    %2418 = vmatpush1.bf16.msra.mxu0 %v1410
    %2419 = vmatprep.subr.bf16.mxu0 %v1415
    %2420 = vmatpush1.bf16.msra.mxu0 %v1414
    %2421 = vmatprep.subr.bf16.mxu0 %v1419
    %2422 = vmatpush1.bf16.msra.mxu0 %v1418
    %2423 = vmatprep.subr.bf16.mxu0 %v1423
    %2424 = vmatpush1.bf16.msra.mxu0 %v1422
    %2425 = vmatprep.subr.bf16.mxu0 %v1427
    %2426 = vmatpush1.bf16.msra.mxu0 %v1426
    %2427 = vmatprep.subr.bf16.mxu0 %v1431
    %2428 = vmatpush1.bf16.msra.mxu0 %v1430
    %2429 = vmatprep.subr.bf16.mxu0 %v1435
    %2430 = vmatpush1.bf16.msra.mxu0 %v1434
    %2431 = vmatprep.subr.bf16.mxu0 %v1439
    %2432 = vmatpush1.bf16.msra.mxu0 %v1438
    %2433 = vmatprep.subr.bf16.mxu0 %v1443
    %2434 = vmatpush1.bf16.msra.mxu0 %v1442
    %2435 = vmatprep.subr.bf16.mxu0 %v1447
    %2436 = vmatpush1.bf16.msra.mxu0 %v1446
    %2437 = vmatprep.subr.bf16.mxu0 %v1451
    %2438 = vmatpush1.bf16.msra.mxu0 %v1450
    %2439 = vmatprep.mubr.bf16.mxu0 %v2297
    %2440 = vmatmul.mubr.bf16.gmra.mrb[0].mxu0 %v2283
    %v2441 = vpop.f32.mrb[0].mxu0
    %v2442 = vadd.f32 %v2401, %v2441
    %v2443 = vpop.f32.mrb[0].mxu0
    %v2444 = vadd.f32 %v2403, %v2443
    %v2445 = vpop.f32.mrb[0].mxu0
    %v2446 = vpop.f32.mrb[0].mxu0
    %2447 = vdwg.mxu0
    %2448 = vmatprep.subr.bf16.mxu0 %v1455
    %2449 = vmatpush1.bf16.msra.mxu0 %v1454
    %2450 = vmatprep.subr.bf16.mxu0 %v1459
    %2451 = vmatpush1.bf16.msra.mxu0 %v1458
    %2452 = vmatprep.subr.bf16.mxu0 %v1463
    %2453 = vmatpush1.bf16.msra.mxu0 %v1462
    %2454 = vmatprep.subr.bf16.mxu0 %v1467
    %2455 = vmatpush1.bf16.msra.mxu0 %v1466
    %2456 = vmatprep.subr.bf16.mxu0 %v1471
    %2457 = vmatpush1.bf16.msra.mxu0 %v1470
    %2458 = vmatprep.subr.bf16.mxu0 %v1475
    %2459 = vmatpush1.bf16.msra.mxu0 %v1474
    %2460 = vmatprep.subr.bf16.mxu0 %v1479
    %2461 = vmatpush1.bf16.msra.mxu0 %v1478
    %2462 = vmatprep.subr.bf16.mxu0 %v1483
    %2463 = vmatpush1.bf16.msra.mxu0 %v1482
    %2464 = vmatprep.subr.bf16.mxu0 %v1487
    %2465 = vmatpush1.bf16.msra.mxu0 %v1486
    %2466 = vmatprep.subr.bf16.mxu0 %v1491
    %2467 = vmatpush1.bf16.msra.mxu0 %v1490
    %2468 = vmatprep.subr.bf16.mxu0 %v1495
    %2469 = vmatpush1.bf16.msra.mxu0 %v1494
    %2470 = vmatprep.subr.bf16.mxu0 %v1499
    %2471 = vmatpush1.bf16.msra.mxu0 %v1498
    %2472 = vmatprep.subr.bf16.mxu0 %v1503
    %2473 = vmatpush1.bf16.msra.mxu0 %v1502
    %2474 = vmatprep.subr.bf16.mxu0 %v1507
    %2475 = vmatpush1.bf16.msra.mxu0 %v1506
    %2476 = vmatprep.subr.bf16.mxu0 %v1511
    %2477 = vmatpush1.bf16.msra.mxu0 %v1510
    %2478 = vmatprep.subr.bf16.mxu0 %v1515
    %2479 = vmatpush1.bf16.msra.mxu0 %v1514
    %2480 = vmatprep.mubr.bf16.mxu0 %v2301
    %2481 = vmatmul.mubr.bf16.gmra.mrb[0].mxu0 %v2299
    %v2482 = vpop.f32.mrb[0].mxu0
    %v2483 = vadd.f32 %v2442, %v2482
    %v2484 = vpop.f32.mrb[0].mxu0
    %v2485 = vadd.f32 %v2444, %v2484
    %v2486 = vpop.f32.mrb[0].mxu0
    %v2487 = vpop.f32.mrb[0].mxu0
    %2488 = vdwg.mxu0
    %2489 = vmatprep.subr.bf16.mxu0 %v1519
    %2490 = vmatpush1.bf16.msra.mxu0 %v1518
    %2491 = vmatprep.subr.bf16.mxu0 %v1523
    %2492 = vmatpush1.bf16.msra.mxu0 %v1522
    %2493 = vmatprep.subr.bf16.mxu0 %v1527
    %2494 = vmatpush1.bf16.msra.mxu0 %v1526
    %2495 = vmatprep.subr.bf16.mxu0 %v1531
    %2496 = vmatpush1.bf16.msra.mxu0 %v1530
    %2497 = vmatprep.subr.bf16.mxu0 %v1535
    %2498 = vmatpush1.bf16.msra.mxu0 %v1534
    %2499 = vmatprep.subr.bf16.mxu0 %v1539
    %2500 = vmatpush1.bf16.msra.mxu0 %v1538
    %2501 = vmatprep.subr.bf16.mxu0 %v1543
    %2502 = vmatpush1.bf16.msra.mxu0 %v1542
    %2503 = vmatprep.subr.bf16.mxu0 %v1547
    %2504 = vmatpush1.bf16.msra.mxu0 %v1546
    %2505 = vmatprep.subr.bf16.mxu0 0
    %2506 = vmatpush1.bf16.msra.mxu0 0
    %2507 = vmatprep.subr.bf16.mxu0 0
    %2508 = vmatpush1.bf16.msra.mxu0 0
    %2509 = vmatprep.subr.bf16.mxu0 0
    %2510 = vmatpush1.bf16.msra.mxu0 0
    %2511 = vmatprep.subr.bf16.mxu0 0
    %2512 = vmatpush1.bf16.msra.mxu0 0
    %2513 = vmatprep.subr.bf16.mxu0 0
    %2514 = vmatpush1.bf16.msra.mxu0 0
    %2515 = vmatprep.subr.bf16.mxu0 0
    %2516 = vmatpush1.bf16.msra.mxu0 0
    %2517 = vmatprep.subr.bf16.mxu0 0
    %2518 = vmatpush1.bf16.msra.mxu0 0
    %2519 = vmatprep.subr.bf16.mxu0 0
    %2520 = vmatpush1.bf16.msra.mxu0 0
    %2521 = vmatprep.mubr.bf16.mxu0 0
    %2522 = vmatmul.mubr.bf16.gmra.mrb[0].mxu0 %v2315
    %v2523 = vpop.f32.mrb[0].mxu0
    %v2524 = vadd.f32 %v2483, %v2523
    %v2525 = vpop.f32.mrb[0].mxu0
    %v2526 = vadd.f32 %v2485, %v2525
    %v2527 = vpop.f32.mrb[0].mxu0
    %v2528 = vpop.f32.mrb[0].mxu0
    %2529 = vdwg.mxu0
    %2530 = vmatprep.subr.bf16.mxu0 %v1265
    %2531 = vmatpush1.bf16.msra.mxu0 %v1264
    %2532 = vmatprep.subr.bf16.mxu0 %v1269
    %2533 = vmatpush1.bf16.msra.mxu0 %v1268
    %2534 = vmatprep.subr.bf16.mxu0 %v1273
    %2535 = vmatpush1.bf16.msra.mxu0 %v1272
    %2536 = vmatprep.subr.bf16.mxu0 %v1277
    %2537 = vmatpush1.bf16.msra.mxu0 %v1276
    %2538 = vmatprep.subr.bf16.mxu0 %v1281
    %2539 = vmatpush1.bf16.msra.mxu0 %v1280
    %2540 = vmatprep.subr.bf16.mxu0 %v1285
    %2541 = vmatpush1.bf16.msra.mxu0 %v1284
    %2542 = vmatprep.subr.bf16.mxu0 %v1289
    %2543 = vmatpush1.bf16.msra.mxu0 %v1288
    %2544 = vmatprep.subr.bf16.mxu0 %v1293
    %2545 = vmatpush1.bf16.msra.mxu0 %v1292
    %2546 = vmatprep.subr.bf16.mxu0 %v1297
    %2547 = vmatpush1.bf16.msra.mxu0 %v1296
    %2548 = vmatprep.subr.bf16.mxu0 %v1301
    %2549 = vmatpush1.bf16.msra.mxu0 %v1300
    %2550 = vmatprep.subr.bf16.mxu0 %v1305
    %2551 = vmatpush1.bf16.msra.mxu0 %v1304
    %2552 = vmatprep.subr.bf16.mxu0 %v1309
    %2553 = vmatpush1.bf16.msra.mxu0 %v1308
    %2554 = vmatprep.subr.bf16.mxu0 %v1313
    %2555 = vmatpush1.bf16.msra.mxu0 %v1312
    %2556 = vmatprep.subr.bf16.mxu0 %v1317
    %2557 = vmatpush1.bf16.msra.mxu0 %v1316
    %2558 = vmatprep.subr.bf16.mxu0 %v1321
    %2559 = vmatpush1.bf16.msra.mxu0 %v1320
    %2560 = vmatprep.subr.bf16.mxu0 %v1325
    %2561 = vmatpush1.bf16.msra.mxu0 %v1324
    %2562 = vmatprep.mubr.bf16.mxu0 %v2290
    %2563 = vmatmul.mubr.bf16.gmra.mrb[0].mxu0 %v2276
    %v2564 = vpop.f32.mrb[0].mxu0
    %v2565 = vadd.f32 0.0, %v2564
    %v2566 = vpop.f32.mrb[0].mxu0
    %v2567 = vadd.f32 0.0, %v2566
    %v2568 = vpop.f32.mrb[0].mxu0
    %v2569 = vpop.f32.mrb[0].mxu0
    %2570 = vdwg.mxu0
    %2571 = vmatprep.subr.bf16.mxu0 %v1329
    %2572 = vmatpush1.bf16.msra.mxu0 %v1328
    %2573 = vmatprep.subr.bf16.mxu0 %v1333
    %2574 = vmatpush1.bf16.msra.mxu0 %v1332
    %2575 = vmatprep.subr.bf16.mxu0 %v1337
    %2576 = vmatpush1.bf16.msra.mxu0 %v1336
    %2577 = vmatprep.subr.bf16.mxu0 %v1341
    %2578 = vmatpush1.bf16.msra.mxu0 %v1340
    %2579 = vmatprep.subr.bf16.mxu0 %v1345
    %2580 = vmatpush1.bf16.msra.mxu0 %v1344
    %2581 = vmatprep.subr.bf16.mxu0 %v1349
    %2582 = vmatpush1.bf16.msra.mxu0 %v1348
    %2583 = vmatprep.subr.bf16.mxu0 %v1353
    %2584 = vmatpush1.bf16.msra.mxu0 %v1352
    %2585 = vmatprep.subr.bf16.mxu0 %v1357
    %2586 = vmatpush1.bf16.msra.mxu0 %v1356
    %2587 = vmatprep.subr.bf16.mxu0 %v1361
    %2588 = vmatpush1.bf16.msra.mxu0 %v1360
    %2589 = vmatprep.subr.bf16.mxu0 %v1365
    %2590 = vmatpush1.bf16.msra.mxu0 %v1364
    %2591 = vmatprep.subr.bf16.mxu0 %v1369
    %2592 = vmatpush1.bf16.msra.mxu0 %v1368
    %2593 = vmatprep.subr.bf16.mxu0 %v1373
    %2594 = vmatpush1.bf16.msra.mxu0 %v1372
    %2595 = vmatprep.subr.bf16.mxu0 %v1377
    %2596 = vmatpush1.bf16.msra.mxu0 %v1376
    %2597 = vmatprep.subr.bf16.mxu0 %v1381
    %2598 = vmatpush1.bf16.msra.mxu0 %v1380
    %2599 = vmatprep.subr.bf16.mxu0 %v1385
    %2600 = vmatpush1.bf16.msra.mxu0 %v1384
    %2601 = vmatprep.subr.bf16.mxu0 %v1389
    %2602 = vmatpush1.bf16.msra.mxu0 %v1388
    %2603 = vmatprep.mubr.bf16.mxu0 %v2300
    %2604 = vmatmul.mubr.bf16.gmra.mrb[0].mxu0 %v2298
    %v2605 = vpop.f32.mrb[0].mxu0
    %v2606 = vadd.f32 %v2565, %v2605
    %v2607 = vpop.f32.mrb[0].mxu0
    %v2608 = vadd.f32 %v2567, %v2607
    %v2609 = vpop.f32.mrb[0].mxu0
    %v2610 = vpop.f32.mrb[0].mxu0
    %2611 = vdwg.mxu0
    %2612 = vmatprep.subr.bf16.mxu0 %v1393
    %2613 = vmatpush1.bf16.msra.mxu0 %v1392
    %2614 = vmatprep.subr.bf16.mxu0 %v1397
    %2615 = vmatpush1.bf16.msra.mxu0 %v1396
    %2616 = vmatprep.subr.bf16.mxu0 %v1401
    %2617 = vmatpush1.bf16.msra.mxu0 %v1400
    %2618 = vmatprep.subr.bf16.mxu0 %v1405
    %2619 = vmatpush1.bf16.msra.mxu0 %v1404
    %2620 = vmatprep.subr.bf16.mxu0 %v1409
    %2621 = vmatpush1.bf16.msra.mxu0 %v1408
    %2622 = vmatprep.subr.bf16.mxu0 %v1413
    %2623 = vmatpush1.bf16.msra.mxu0 %v1412
    %2624 = vmatprep.subr.bf16.mxu0 %v1417
    %2625 = vmatpush1.bf16.msra.mxu0 %v1416
    %2626 = vmatprep.subr.bf16.mxu0 %v1421
    %2627 = vmatpush1.bf16.msra.mxu0 %v1420
    %2628 = vmatprep.subr.bf16.mxu0 %v1425
    %2629 = vmatpush1.bf16.msra.mxu0 %v1424
    %2630 = vmatprep.subr.bf16.mxu0 %v1429
    %2631 = vmatpush1.bf16.msra.mxu0 %v1428
    %2632 = vmatprep.subr.bf16.mxu0 %v1433
    %2633 = vmatpush1.bf16.msra.mxu0 %v1432
    %2634 = vmatprep.subr.bf16.mxu0 %v1437
    %2635 = vmatpush1.bf16.msra.mxu0 %v1436
    %2636 = vmatprep.subr.bf16.mxu0 %v1441
    %2637 = vmatpush1.bf16.msra.mxu0 %v1440
    %2638 = vmatprep.subr.bf16.mxu0 %v1445
    %2639 = vmatpush1.bf16.msra.mxu0 %v1444
    %2640 = vmatprep.subr.bf16.mxu0 %v1449
    %2641 = vmatpush1.bf16.msra.mxu0 %v1448
    %2642 = vmatprep.subr.bf16.mxu0 %v1453
    %2643 = vmatpush1.bf16.msra.mxu0 %v1452
    %2644 = vmatprep.mubr.bf16.mxu0 %v2297
    %2645 = vmatmul.mubr.bf16.gmra.mrb[0].mxu0 %v2283
    %v2646 = vpop.f32.mrb[0].mxu0
    %v2647 = vadd.f32 %v2606, %v2646
    %v2648 = vpop.f32.mrb[0].mxu0
    %v2649 = vadd.f32 %v2608, %v2648
    %v2650 = vpop.f32.mrb[0].mxu0
    %v2651 = vpop.f32.mrb[0].mxu0
    %2652 = vdwg.mxu0
    %2653 = vmatprep.subr.bf16.mxu0 %v1457
    %2654 = vmatpush1.bf16.msra.mxu0 %v1456
    %2655 = vmatprep.subr.bf16.mxu0 %v1461
    %2656 = vmatpush1.bf16.msra.mxu0 %v1460
    %2657 = vmatprep.subr.bf16.mxu0 %v1465
    %2658 = vmatpush1.bf16.msra.mxu0 %v1464
    %2659 = vmatprep.subr.bf16.mxu0 %v1469
    %2660 = vmatpush1.bf16.msra.mxu0 %v1468
    %2661 = vmatprep.subr.bf16.mxu0 %v1473
    %2662 = vmatpush1.bf16.msra.mxu0 %v1472
    %2663 = vmatprep.subr.bf16.mxu0 %v1477
    %2664 = vmatpush1.bf16.msra.mxu0 %v1476
    %2665 = vmatprep.subr.bf16.mxu0 %v1481
    %2666 = vmatpush1.bf16.msra.mxu0 %v1480
    %2667 = vmatprep.subr.bf16.mxu0 %v1485
    %2668 = vmatpush1.bf16.msra.mxu0 %v1484
    %2669 = vmatprep.subr.bf16.mxu0 %v1489
    %2670 = vmatpush1.bf16.msra.mxu0 %v1488
    %2671 = vmatprep.subr.bf16.mxu0 %v1493
    %2672 = vmatpush1.bf16.msra.mxu0 %v1492
    %2673 = vmatprep.subr.bf16.mxu0 %v1497
    %2674 = vmatpush1.bf16.msra.mxu0 %v1496
    %2675 = vmatprep.subr.bf16.mxu0 %v1501
    %2676 = vmatpush1.bf16.msra.mxu0 %v1500
    %2677 = vmatprep.subr.bf16.mxu0 %v1505
    %2678 = vmatpush1.bf16.msra.mxu0 %v1504
    %2679 = vmatprep.subr.bf16.mxu0 %v1509
    %2680 = vmatpush1.bf16.msra.mxu0 %v1508
    %2681 = vmatprep.subr.bf16.mxu0 %v1513
    %2682 = vmatpush1.bf16.msra.mxu0 %v1512
    %2683 = vmatprep.subr.bf16.mxu0 %v1517
    %2684 = vmatpush1.bf16.msra.mxu0 %v1516
    %2685 = vmatprep.mubr.bf16.mxu0 %v2301
    %2686 = vmatmul.mubr.bf16.gmra.mrb[0].mxu0 %v2299
    %v2687 = vpop.f32.mrb[0].mxu0
    %v2688 = vadd.f32 %v2647, %v2687
    %v2689 = vpop.f32.mrb[0].mxu0
    %v2690 = vadd.f32 %v2649, %v2689
    %v2691 = vpop.f32.mrb[0].mxu0
    %v2692 = vpop.f32.mrb[0].mxu0
    %2693 = vdwg.mxu0
    %2694 = vmatprep.subr.bf16.mxu0 %v1521
    %2695 = vmatpush1.bf16.msra.mxu0 %v1520
    %2696 = vmatprep.subr.bf16.mxu0 %v1525
    %2697 = vmatpush1.bf16.msra.mxu0 %v1524
    %2698 = vmatprep.subr.bf16.mxu0 %v1529
    %2699 = vmatpush1.bf16.msra.mxu0 %v1528
    %2700 = vmatprep.subr.bf16.mxu0 %v1533
    %2701 = vmatpush1.bf16.msra.mxu0 %v1532
    %2702 = vmatprep.subr.bf16.mxu0 %v1537
    %2703 = vmatpush1.bf16.msra.mxu0 %v1536
    %2704 = vmatprep.subr.bf16.mxu0 %v1541
    %2705 = vmatpush1.bf16.msra.mxu0 %v1540
    %2706 = vmatprep.subr.bf16.mxu0 %v1545
    %2707 = vmatpush1.bf16.msra.mxu0 %v1544
    %2708 = vmatprep.subr.bf16.mxu0 %v1549
    %2709 = vmatpush1.bf16.msra.mxu0 %v1548
    %2710 = vmatprep.subr.bf16.mxu0 0
    %2711 = vmatpush1.bf16.msra.mxu0 0
    %2712 = vmatprep.subr.bf16.mxu0 0
    %2713 = vmatpush1.bf16.msra.mxu0 0
    %2714 = vmatprep.subr.bf16.mxu0 0
    %2715 = vmatpush1.bf16.msra.mxu0 0
    %2716 = vmatprep.subr.bf16.mxu0 0
    %2717 = vmatpush1.bf16.msra.mxu0 0
    %2718 = vmatprep.subr.bf16.mxu0 0
    %2719 = vmatpush1.bf16.msra.mxu0 0
    %2720 = vmatprep.subr.bf16.mxu0 0
    %2721 = vmatpush1.bf16.msra.mxu0 0
    %2722 = vmatprep.subr.bf16.mxu0 0
    %2723 = vmatpush1.bf16.msra.mxu0 0
    %2724 = vmatprep.subr.bf16.mxu0 0
    %2725 = vmatpush1.bf16.msra.mxu0 0
    %2726 = vmatprep.mubr.bf16.mxu0 0
    %2727 = vmatmul.mubr.bf16.gmra.mrb[0].mxu0 %v2315
    %v2728 = vpop.f32.mrb[0].mxu0
    %v2729 = vadd.f32 %v2688, %v2728
    %v2730 = vpop.f32.mrb[0].mxu0
    %v2731 = vadd.f32 %v2690, %v2730
    %v2732 = vpop.f32.mrb[0].mxu0
    %v2733 = vpop.f32.mrb[0].mxu0
    %2734 = vdwg.mxu0
    %v2735 = vmax.f32 %v2037, %v2524
    %v2736 = vmax.f32 %v2039, %v2526
    %v2737 = vmax.f32 %v2242, %v2729
    %v2738 = vmax.f32 %v2244, %v2731
    %s2739 = scalar_lea.vmem %s0, 18
    %v2740 = vld [vmem:[%s2739] sm:$0xff]
    %v2741 = vld [vmem:[%s2739 + $0x8] sm:$0x1]
    %v2744 = vcombine.high %v2740, %v2740
    %v2746 = vunpack.c.l.s4 1966171168
    %v2747 = vunpack.c.0.s8 %v2746
    %v2748 = vlaneseq
    %v2749 = vshrl.u32 %v2748, 7
    %v2750 = vsub.s32 %v2747, %v2749
    %v2751 = vrot.slane %v2740, %v2750
    %v2753 = vunpack.c.l.s4 1966171168
    %v2754 = vunpack.c.0.s8 %v2753
    %v2755 = vlaneseq
    %v2756 = vshrl.u32 %v2755, 7
    %v2757 = vsub.s32 %v2754, %v2756
    %v2758 = vrot.slane %v2744, %v2757
    %v2759 = vcombine.high %v2751, %v2751
    %v2760 = vcombine.high %v2758, %v2758
    %v2762 = vunpack.c.l.s4 1966171168
    %v2763 = vunpack.c.0.s8 %v2762
    %v2764 = vlaneseq
    %v2765 = vshrl.u32 %v2764, 7
    %v2766 = vsub.s32 %v2763, %v2765
    %v2767 = vrot.slane %v2751, %v2766
    %v2769 = vunpack.c.l.s4 1966171168
    %v2770 = vunpack.c.0.s8 %v2769
    %v2771 = vlaneseq
    %v2772 = vshrl.u32 %v2771, 7
    %v2773 = vsub.s32 %v2770, %v2772
    %v2774 = vrot.slane %v2758, %v2773
    %v2776 = vunpack.c.l.s4 1966171168
    %v2777 = vunpack.c.0.s8 %v2776
    %v2778 = vlaneseq
    %v2779 = vshrl.u32 %v2778, 7
    %v2780 = vsub.s32 %v2777, %v2779
    %v2781 = vrot.slane %v2759, %v2780
    %v2783 = vunpack.c.l.s4 1966171168
    %v2784 = vunpack.c.0.s8 %v2783
    %v2785 = vlaneseq
    %v2786 = vshrl.u32 %v2785, 7
    %v2787 = vsub.s32 %v2784, %v2786
    %v2788 = vrot.slane %v2760, %v2787
    %v2789 = vcombine.high %v2767, %v2767
    %v2790 = vcombine.high %v2774, %v2774
    %v2791 = vcombine.high %v2781, %v2781
    %v2792 = vcombine.high %v2788, %v2788
    %v2794 = vunpack.c.l.s4 1966171168
    %v2795 = vunpack.c.0.s8 %v2794
    %v2796 = vlaneseq
    %v2797 = vshrl.u32 %v2796, 7
    %v2798 = vsub.s32 %v2795, %v2797
    %v2799 = vrot.slane %v2741, %v2798
    %v2801 = vunpack.c.l.s4 1966171168
    %v2802 = vunpack.c.0.s8 %v2801
    %v2803 = vlaneseq
    %v2804 = vshrl.u32 %v2803, 7
    %v2805 = vsub.s32 %v2802, %v2804
    %v2806 = vrot.slane %v2799, %v2805
    %2816 = vmatprep.subr.bf16.mxu0 %v1263
    %2817 = vmatpush1.bf16.msra.mxu0 %v1262
    %2818 = vmatprep.subr.bf16.mxu0 %v1267
    %2819 = vmatpush1.bf16.msra.mxu0 %v1266
    %2820 = vmatprep.subr.bf16.mxu0 %v1271
    %2821 = vmatpush1.bf16.msra.mxu0 %v1270
    %2822 = vmatprep.subr.bf16.mxu0 %v1275
    %2823 = vmatpush1.bf16.msra.mxu0 %v1274
    %2824 = vmatprep.subr.bf16.mxu0 %v1279
    %2825 = vmatpush1.bf16.msra.mxu0 %v1278
    %2826 = vmatprep.subr.bf16.mxu0 %v1283
    %2827 = vmatpush1.bf16.msra.mxu0 %v1282
    %2828 = vmatprep.subr.bf16.mxu0 %v1287
    %2829 = vmatpush1.bf16.msra.mxu0 %v1286
    %2830 = vmatprep.subr.bf16.mxu0 %v1291
    %2831 = vmatpush1.bf16.msra.mxu0 %v1290
    %2832 = vmatprep.subr.bf16.mxu0 %v1295
    %2833 = vmatpush1.bf16.msra.mxu0 %v1294
    %2834 = vmatprep.subr.bf16.mxu0 %v1299
    %2835 = vmatpush1.bf16.msra.mxu0 %v1298
    %2836 = vmatprep.subr.bf16.mxu0 %v1303
    %2837 = vmatpush1.bf16.msra.mxu0 %v1302
    %2838 = vmatprep.subr.bf16.mxu0 %v1307
    %2839 = vmatpush1.bf16.msra.mxu0 %v1306
    %2840 = vmatprep.subr.bf16.mxu0 %v1311
    %2841 = vmatpush1.bf16.msra.mxu0 %v1310
    %2842 = vmatprep.subr.bf16.mxu0 %v1315
    %2843 = vmatpush1.bf16.msra.mxu0 %v1314
    %2844 = vmatprep.subr.bf16.mxu0 %v1319
    %2845 = vmatpush1.bf16.msra.mxu0 %v1318
    %2846 = vmatprep.subr.bf16.mxu0 %v1323
    %2847 = vmatpush1.bf16.msra.mxu0 %v1322
    %2848 = vmatprep.mubr.bf16.mxu0 %v2781
    %2849 = vmatmul.mubr.bf16.gmra.mrb[0].mxu0 %v2767
    %v2850 = vpop.f32.mrb[0].mxu0
    %v2851 = vadd.f32 0.0, %v2850
    %v2852 = vpop.f32.mrb[0].mxu0
    %v2853 = vadd.f32 0.0, %v2852
    %v2854 = vpop.f32.mrb[0].mxu0
    %v2855 = vpop.f32.mrb[0].mxu0
    %2856 = vdwg.mxu0
    %2857 = vmatprep.subr.bf16.mxu0 %v1327
    %2858 = vmatpush1.bf16.msra.mxu0 %v1326
    %2859 = vmatprep.subr.bf16.mxu0 %v1331
    %2860 = vmatpush1.bf16.msra.mxu0 %v1330
    %2861 = vmatprep.subr.bf16.mxu0 %v1335
    %2862 = vmatpush1.bf16.msra.mxu0 %v1334
    %2863 = vmatprep.subr.bf16.mxu0 %v1339
    %2864 = vmatpush1.bf16.msra.mxu0 %v1338
    %2865 = vmatprep.subr.bf16.mxu0 %v1343
    %2866 = vmatpush1.bf16.msra.mxu0 %v1342
    %2867 = vmatprep.subr.bf16.mxu0 %v1347
    %2868 = vmatpush1.bf16.msra.mxu0 %v1346
    %2869 = vmatprep.subr.bf16.mxu0 %v1351
    %2870 = vmatpush1.bf16.msra.mxu0 %v1350
    %2871 = vmatprep.subr.bf16.mxu0 %v1355
    %2872 = vmatpush1.bf16.msra.mxu0 %v1354
    %2873 = vmatprep.subr.bf16.mxu0 %v1359
    %2874 = vmatpush1.bf16.msra.mxu0 %v1358
    %2875 = vmatprep.subr.bf16.mxu0 %v1363
    %2876 = vmatpush1.bf16.msra.mxu0 %v1362
    %2877 = vmatprep.subr.bf16.mxu0 %v1367
    %2878 = vmatpush1.bf16.msra.mxu0 %v1366
    %2879 = vmatprep.subr.bf16.mxu0 %v1371
    %2880 = vmatpush1.bf16.msra.mxu0 %v1370
    %2881 = vmatprep.subr.bf16.mxu0 %v1375
    %2882 = vmatpush1.bf16.msra.mxu0 %v1374
    %2883 = vmatprep.subr.bf16.mxu0 %v1379
    %2884 = vmatpush1.bf16.msra.mxu0 %v1378
    %2885 = vmatprep.subr.bf16.mxu0 %v1383
    %2886 = vmatpush1.bf16.msra.mxu0 %v1382
    %2887 = vmatprep.subr.bf16.mxu0 %v1387
    %2888 = vmatpush1.bf16.msra.mxu0 %v1386
    %2889 = vmatprep.mubr.bf16.mxu0 %v2791
    %2890 = vmatmul.mubr.bf16.gmra.mrb[0].mxu0 %v2789
    %v2891 = vpop.f32.mrb[0].mxu0
    %v2892 = vadd.f32 %v2851, %v2891
    %v2893 = vpop.f32.mrb[0].mxu0
    %v2894 = vadd.f32 %v2853, %v2893
    %v2895 = vpop.f32.mrb[0].mxu0
    %v2896 = vpop.f32.mrb[0].mxu0
    %2897 = vdwg.mxu0
    %2898 = vmatprep.subr.bf16.mxu0 %v1391
    %2899 = vmatpush1.bf16.msra.mxu0 %v1390
    %2900 = vmatprep.subr.bf16.mxu0 %v1395
    %2901 = vmatpush1.bf16.msra.mxu0 %v1394
    %2902 = vmatprep.subr.bf16.mxu0 %v1399
    %2903 = vmatpush1.bf16.msra.mxu0 %v1398
    %2904 = vmatprep.subr.bf16.mxu0 %v1403
    %2905 = vmatpush1.bf16.msra.mxu0 %v1402
    %2906 = vmatprep.subr.bf16.mxu0 %v1407
    %2907 = vmatpush1.bf16.msra.mxu0 %v1406
    %2908 = vmatprep.subr.bf16.mxu0 %v1411
    %2909 = vmatpush1.bf16.msra.mxu0 %v1410
    %2910 = vmatprep.subr.bf16.mxu0 %v1415
    %2911 = vmatpush1.bf16.msra.mxu0 %v1414
    %2912 = vmatprep.subr.bf16.mxu0 %v1419
    %2913 = vmatpush1.bf16.msra.mxu0 %v1418
    %2914 = vmatprep.subr.bf16.mxu0 %v1423
    %2915 = vmatpush1.bf16.msra.mxu0 %v1422
    %2916 = vmatprep.subr.bf16.mxu0 %v1427
    %2917 = vmatpush1.bf16.msra.mxu0 %v1426
    %2918 = vmatprep.subr.bf16.mxu0 %v1431
    %2919 = vmatpush1.bf16.msra.mxu0 %v1430
    %2920 = vmatprep.subr.bf16.mxu0 %v1435
    %2921 = vmatpush1.bf16.msra.mxu0 %v1434
    %2922 = vmatprep.subr.bf16.mxu0 %v1439
    %2923 = vmatpush1.bf16.msra.mxu0 %v1438
    %2924 = vmatprep.subr.bf16.mxu0 %v1443
    %2925 = vmatpush1.bf16.msra.mxu0 %v1442
    %2926 = vmatprep.subr.bf16.mxu0 %v1447
    %2927 = vmatpush1.bf16.msra.mxu0 %v1446
    %2928 = vmatprep.subr.bf16.mxu0 %v1451
    %2929 = vmatpush1.bf16.msra.mxu0 %v1450
    %2930 = vmatprep.mubr.bf16.mxu0 %v2788
    %2931 = vmatmul.mubr.bf16.gmra.mrb[0].mxu0 %v2774
    %v2932 = vpop.f32.mrb[0].mxu0
    %v2933 = vadd.f32 %v2892, %v2932
    %v2934 = vpop.f32.mrb[0].mxu0
    %v2935 = vadd.f32 %v2894, %v2934
    %v2936 = vpop.f32.mrb[0].mxu0
    %v2937 = vpop.f32.mrb[0].mxu0
    %2938 = vdwg.mxu0
    %2939 = vmatprep.subr.bf16.mxu0 %v1455
    %2940 = vmatpush1.bf16.msra.mxu0 %v1454
    %2941 = vmatprep.subr.bf16.mxu0 %v1459
    %2942 = vmatpush1.bf16.msra.mxu0 %v1458
    %2943 = vmatprep.subr.bf16.mxu0 %v1463
    %2944 = vmatpush1.bf16.msra.mxu0 %v1462
    %2945 = vmatprep.subr.bf16.mxu0 %v1467
    %2946 = vmatpush1.bf16.msra.mxu0 %v1466
    %2947 = vmatprep.subr.bf16.mxu0 %v1471
    %2948 = vmatpush1.bf16.msra.mxu0 %v1470
    %2949 = vmatprep.subr.bf16.mxu0 %v1475
    %2950 = vmatpush1.bf16.msra.mxu0 %v1474
    %2951 = vmatprep.subr.bf16.mxu0 %v1479
    %2952 = vmatpush1.bf16.msra.mxu0 %v1478
    %2953 = vmatprep.subr.bf16.mxu0 %v1483
    %2954 = vmatpush1.bf16.msra.mxu0 %v1482
    %2955 = vmatprep.subr.bf16.mxu0 %v1487
    %2956 = vmatpush1.bf16.msra.mxu0 %v1486
    %2957 = vmatprep.subr.bf16.mxu0 %v1491
    %2958 = vmatpush1.bf16.msra.mxu0 %v1490
    %2959 = vmatprep.subr.bf16.mxu0 %v1495
    %2960 = vmatpush1.bf16.msra.mxu0 %v1494
    %2961 = vmatprep.subr.bf16.mxu0 %v1499
    %2962 = vmatpush1.bf16.msra.mxu0 %v1498
    %2963 = vmatprep.subr.bf16.mxu0 %v1503
    %2964 = vmatpush1.bf16.msra.mxu0 %v1502
    %2965 = vmatprep.subr.bf16.mxu0 %v1507
    %2966 = vmatpush1.bf16.msra.mxu0 %v1506
    %2967 = vmatprep.subr.bf16.mxu0 %v1511
    %2968 = vmatpush1.bf16.msra.mxu0 %v1510
    %2969 = vmatprep.subr.bf16.mxu0 %v1515
    %2970 = vmatpush1.bf16.msra.mxu0 %v1514
    %2971 = vmatprep.mubr.bf16.mxu0 %v2792
    %2972 = vmatmul.mubr.bf16.gmra.mrb[0].mxu0 %v2790
    %v2973 = vpop.f32.mrb[0].mxu0
    %v2974 = vadd.f32 %v2933, %v2973
    %v2975 = vpop.f32.mrb[0].mxu0
    %v2976 = vadd.f32 %v2935, %v2975
    %v2977 = vpop.f32.mrb[0].mxu0
    %v2978 = vpop.f32.mrb[0].mxu0
    %2979 = vdwg.mxu0
    %2980 = vmatprep.subr.bf16.mxu0 %v1519
    %2981 = vmatpush1.bf16.msra.mxu0 %v1518
    %2982 = vmatprep.subr.bf16.mxu0 %v1523
    %2983 = vmatpush1.bf16.msra.mxu0 %v1522
    %2984 = vmatprep.subr.bf16.mxu0 %v1527
    %2985 = vmatpush1.bf16.msra.mxu0 %v1526
    %2986 = vmatprep.subr.bf16.mxu0 %v1531
    %2987 = vmatpush1.bf16.msra.mxu0 %v1530
    %2988 = vmatprep.subr.bf16.mxu0 %v1535
    %2989 = vmatpush1.bf16.msra.mxu0 %v1534
    %2990 = vmatprep.subr.bf16.mxu0 %v1539
    %2991 = vmatpush1.bf16.msra.mxu0 %v1538
    %2992 = vmatprep.subr.bf16.mxu0 %v1543
    %2993 = vmatpush1.bf16.msra.mxu0 %v1542
    %2994 = vmatprep.subr.bf16.mxu0 %v1547
    %2995 = vmatpush1.bf16.msra.mxu0 %v1546
    %2996 = vmatprep.subr.bf16.mxu0 0
    %2997 = vmatpush1.bf16.msra.mxu0 0
    %2998 = vmatprep.subr.bf16.mxu0 0
    %2999 = vmatpush1.bf16.msra.mxu0 0
    %3000 = vmatprep.subr.bf16.mxu0 0
    %3001 = vmatpush1.bf16.msra.mxu0 0
    %3002 = vmatprep.subr.bf16.mxu0 0
    %3003 = vmatpush1.bf16.msra.mxu0 0
    %3004 = vmatprep.subr.bf16.mxu0 0
    %3005 = vmatpush1.bf16.msra.mxu0 0
    %3006 = vmatprep.subr.bf16.mxu0 0
    %3007 = vmatpush1.bf16.msra.mxu0 0
    %3008 = vmatprep.subr.bf16.mxu0 0
    %3009 = vmatpush1.bf16.msra.mxu0 0
    %3010 = vmatprep.subr.bf16.mxu0 0
    %3011 = vmatpush1.bf16.msra.mxu0 0
    %3012 = vmatprep.mubr.bf16.mxu0 0
    %3013 = vmatmul.mubr.bf16.gmra.mrb[0].mxu0 %v2806
    %v3014 = vpop.f32.mrb[0].mxu0
    %v3015 = vadd.f32 %v2974, %v3014
    %v3016 = vpop.f32.mrb[0].mxu0
    %v3017 = vadd.f32 %v2976, %v3016
    %v3018 = vpop.f32.mrb[0].mxu0
    %v3019 = vpop.f32.mrb[0].mxu0
    %3020 = vdwg.mxu0
    %3021 = vmatprep.subr.bf16.mxu0 %v1265
    %3022 = vmatpush1.bf16.msra.mxu0 %v1264
    %3023 = vmatprep.subr.bf16.mxu0 %v1269
    %3024 = vmatpush1.bf16.msra.mxu0 %v1268
    %3025 = vmatprep.subr.bf16.mxu0 %v1273
    %3026 = vmatpush1.bf16.msra.mxu0 %v1272
    %3027 = vmatprep.subr.bf16.mxu0 %v1277
    %3028 = vmatpush1.bf16.msra.mxu0 %v1276
    %3029 = vmatprep.subr.bf16.mxu0 %v1281
    %3030 = vmatpush1.bf16.msra.mxu0 %v1280
    %3031 = vmatprep.subr.bf16.mxu0 %v1285
    %3032 = vmatpush1.bf16.msra.mxu0 %v1284
    %3033 = vmatprep.subr.bf16.mxu0 %v1289
    %3034 = vmatpush1.bf16.msra.mxu0 %v1288
    %3035 = vmatprep.subr.bf16.mxu0 %v1293
    %3036 = vmatpush1.bf16.msra.mxu0 %v1292
    %3037 = vmatprep.subr.bf16.mxu0 %v1297
    %3038 = vmatpush1.bf16.msra.mxu0 %v1296
    %3039 = vmatprep.subr.bf16.mxu0 %v1301
    %3040 = vmatpush1.bf16.msra.mxu0 %v1300
    %3041 = vmatprep.subr.bf16.mxu0 %v1305
    %3042 = vmatpush1.bf16.msra.mxu0 %v1304
    %3043 = vmatprep.subr.bf16.mxu0 %v1309
    %3044 = vmatpush1.bf16.msra.mxu0 %v1308
    %3045 = vmatprep.subr.bf16.mxu0 %v1313
    %3046 = vmatpush1.bf16.msra.mxu0 %v1312
    %3047 = vmatprep.subr.bf16.mxu0 %v1317
    %3048 = vmatpush1.bf16.msra.mxu0 %v1316
    %3049 = vmatprep.subr.bf16.mxu0 %v1321
    %3050 = vmatpush1.bf16.msra.mxu0 %v1320
    %3051 = vmatprep.subr.bf16.mxu0 %v1325
    %3052 = vmatpush1.bf16.msra.mxu0 %v1324
    %3053 = vmatprep.mubr.bf16.mxu0 %v2781
    %3054 = vmatmul.mubr.bf16.gmra.mrb[0].mxu0 %v2767
    %v3055 = vpop.f32.mrb[0].mxu0
    %v3056 = vadd.f32 0.0, %v3055
    %v3057 = vpop.f32.mrb[0].mxu0
    %v3058 = vadd.f32 0.0, %v3057
    %v3059 = vpop.f32.mrb[0].mxu0
    %v3060 = vpop.f32.mrb[0].mxu0
    %3061 = vdwg.mxu0
    %3062 = vmatprep.subr.bf16.mxu0 %v1329
    %3063 = vmatpush1.bf16.msra.mxu0 %v1328
    %3064 = vmatprep.subr.bf16.mxu0 %v1333
    %3065 = vmatpush1.bf16.msra.mxu0 %v1332
    %3066 = vmatprep.subr.bf16.mxu0 %v1337
    %3067 = vmatpush1.bf16.msra.mxu0 %v1336
    %3068 = vmatprep.subr.bf16.mxu0 %v1341
    %3069 = vmatpush1.bf16.msra.mxu0 %v1340
    %3070 = vmatprep.subr.bf16.mxu0 %v1345
    %3071 = vmatpush1.bf16.msra.mxu0 %v1344
    %3072 = vmatprep.subr.bf16.mxu0 %v1349
    %3073 = vmatpush1.bf16.msra.mxu0 %v1348
    %3074 = vmatprep.subr.bf16.mxu0 %v1353
    %3075 = vmatpush1.bf16.msra.mxu0 %v1352
    %3076 = vmatprep.subr.bf16.mxu0 %v1357
    %3077 = vmatpush1.bf16.msra.mxu0 %v1356
    %3078 = vmatprep.subr.bf16.mxu0 %v1361
    %3079 = vmatpush1.bf16.msra.mxu0 %v1360
    %3080 = vmatprep.subr.bf16.mxu0 %v1365
    %3081 = vmatpush1.bf16.msra.mxu0 %v1364
    %3082 = vmatprep.subr.bf16.mxu0 %v1369
    %3083 = vmatpush1.bf16.msra.mxu0 %v1368
    %3084 = vmatprep.subr.bf16.mxu0 %v1373
    %3085 = vmatpush1.bf16.msra.mxu0 %v1372
    %3086 = vmatprep.subr.bf16.mxu0 %v1377
    %3087 = vmatpush1.bf16.msra.mxu0 %v1376
    %3088 = vmatprep.subr.bf16.mxu0 %v1381
    %3089 = vmatpush1.bf16.msra.mxu0 %v1380
    %3090 = vmatprep.subr.bf16.mxu0 %v1385
    %3091 = vmatpush1.bf16.msra.mxu0 %v1384
    %3092 = vmatprep.subr.bf16.mxu0 %v1389
    %3093 = vmatpush1.bf16.msra.mxu0 %v1388
    %3094 = vmatprep.mubr.bf16.mxu0 %v2791
    %3095 = vmatmul.mubr.bf16.gmra.mrb[0].mxu0 %v2789
    %v3096 = vpop.f32.mrb[0].mxu0
    %v3097 = vadd.f32 %v3056, %v3096
    %v3098 = vpop.f32.mrb[0].mxu0
    %v3099 = vadd.f32 %v3058, %v3098
    %v3100 = vpop.f32.mrb[0].mxu0
    %v3101 = vpop.f32.mrb[0].mxu0
    %3102 = vdwg.mxu0
    %3103 = vmatprep.subr.bf16.mxu0 %v1393
    %3104 = vmatpush1.bf16.msra.mxu0 %v1392
    %3105 = vmatprep.subr.bf16.mxu0 %v1397
    %3106 = vmatpush1.bf16.msra.mxu0 %v1396
    %3107 = vmatprep.subr.bf16.mxu0 %v1401
    %3108 = vmatpush1.bf16.msra.mxu0 %v1400
    %3109 = vmatprep.subr.bf16.mxu0 %v1405
    %3110 = vmatpush1.bf16.msra.mxu0 %v1404
    %3111 = vmatprep.subr.bf16.mxu0 %v1409
    %3112 = vmatpush1.bf16.msra.mxu0 %v1408
    %3113 = vmatprep.subr.bf16.mxu0 %v1413
    %3114 = vmatpush1.bf16.msra.mxu0 %v1412
    %3115 = vmatprep.subr.bf16.mxu0 %v1417
    %3116 = vmatpush1.bf16.msra.mxu0 %v1416
    %3117 = vmatprep.subr.bf16.mxu0 %v1421
    %3118 = vmatpush1.bf16.msra.mxu0 %v1420
    %3119 = vmatprep.subr.bf16.mxu0 %v1425
    %3120 = vmatpush1.bf16.msra.mxu0 %v1424
    %3121 = vmatprep.subr.bf16.mxu0 %v1429
    %3122 = vmatpush1.bf16.msra.mxu0 %v1428
    %3123 = vmatprep.subr.bf16.mxu0 %v1433
    %3124 = vmatpush1.bf16.msra.mxu0 %v1432
    %3125 = vmatprep.subr.bf16.mxu0 %v1437
    %3126 = vmatpush1.bf16.msra.mxu0 %v1436
    %3127 = vmatprep.subr.bf16.mxu0 %v1441
    %3128 = vmatpush1.bf16.msra.mxu0 %v1440
    %3129 = vmatprep.subr.bf16.mxu0 %v1445
    %3130 = vmatpush1.bf16.msra.mxu0 %v1444
    %3131 = vmatprep.subr.bf16.mxu0 %v1449
    %3132 = vmatpush1.bf16.msra.mxu0 %v1448
    %3133 = vmatprep.subr.bf16.mxu0 %v1453
    %3134 = vmatpush1.bf16.msra.mxu0 %v1452
    %3135 = vmatprep.mubr.bf16.mxu0 %v2788
    %3136 = vmatmul.mubr.bf16.gmra.mrb[0].mxu0 %v2774
    %v3137 = vpop.f32.mrb[0].mxu0
    %v3138 = vadd.f32 %v3097, %v3137
    %v3139 = vpop.f32.mrb[0].mxu0
    %v3140 = vadd.f32 %v3099, %v3139
    %v3141 = vpop.f32.mrb[0].mxu0
    %v3142 = vpop.f32.mrb[0].mxu0
    %3143 = vdwg.mxu0
    %3144 = vmatprep.subr.bf16.mxu0 %v1457
    %3145 = vmatpush1.bf16.msra.mxu0 %v1456
    %3146 = vmatprep.subr.bf16.mxu0 %v1461
    %3147 = vmatpush1.bf16.msra.mxu0 %v1460
    %3148 = vmatprep.subr.bf16.mxu0 %v1465
    %3149 = vmatpush1.bf16.msra.mxu0 %v1464
    %3150 = vmatprep.subr.bf16.mxu0 %v1469
    %3151 = vmatpush1.bf16.msra.mxu0 %v1468
    %3152 = vmatprep.subr.bf16.mxu0 %v1473
    %3153 = vmatpush1.bf16.msra.mxu0 %v1472
    %3154 = vmatprep.subr.bf16.mxu0 %v1477
    %3155 = vmatpush1.bf16.msra.mxu0 %v1476
    %3156 = vmatprep.subr.bf16.mxu0 %v1481
    %3157 = vmatpush1.bf16.msra.mxu0 %v1480
    %3158 = vmatprep.subr.bf16.mxu0 %v1485
    %3159 = vmatpush1.bf16.msra.mxu0 %v1484
    %3160 = vmatprep.subr.bf16.mxu0 %v1489
    %3161 = vmatpush1.bf16.msra.mxu0 %v1488
    %3162 = vmatprep.subr.bf16.mxu0 %v1493
    %3163 = vmatpush1.bf16.msra.mxu0 %v1492
    %3164 = vmatprep.subr.bf16.mxu0 %v1497
    %3165 = vmatpush1.bf16.msra.mxu0 %v1496
    %3166 = vmatprep.subr.bf16.mxu0 %v1501
    %3167 = vmatpush1.bf16.msra.mxu0 %v1500
    %3168 = vmatprep.subr.bf16.mxu0 %v1505
    %3169 = vmatpush1.bf16.msra.mxu0 %v1504
    %3170 = vmatprep.subr.bf16.mxu0 %v1509
    %3171 = vmatpush1.bf16.msra.mxu0 %v1508
    %3172 = vmatprep.subr.bf16.mxu0 %v1513
    %3173 = vmatpush1.bf16.msra.mxu0 %v1512
    %3174 = vmatprep.subr.bf16.mxu0 %v1517
    %3175 = vmatpush1.bf16.msra.mxu0 %v1516
    %3176 = vmatprep.mubr.bf16.mxu0 %v2792
    %3177 = vmatmul.mubr.bf16.gmra.mrb[0].mxu0 %v2790
    %v3178 = vpop.f32.mrb[0].mxu0
    %v3179 = vadd.f32 %v3138, %v3178
    %v3180 = vpop.f32.mrb[0].mxu0
    %v3181 = vadd.f32 %v3140, %v3180
    %v3182 = vpop.f32.mrb[0].mxu0
    %v3183 = vpop.f32.mrb[0].mxu0
    %3184 = vdwg.mxu0
    %3185 = vmatprep.subr.bf16.mxu0 %v1521
    %3186 = vmatpush1.bf16.msra.mxu0 %v1520
    %3187 = vmatprep.subr.bf16.mxu0 %v1525
    %3188 = vmatpush1.bf16.msra.mxu0 %v1524
    %3189 = vmatprep.subr.bf16.mxu0 %v1529
    %3190 = vmatpush1.bf16.msra.mxu0 %v1528
    %3191 = vmatprep.subr.bf16.mxu0 %v1533
    %3192 = vmatpush1.bf16.msra.mxu0 %v1532
    %3193 = vmatprep.subr.bf16.mxu0 %v1537
    %3194 = vmatpush1.bf16.msra.mxu0 %v1536
    %3195 = vmatprep.subr.bf16.mxu0 %v1541
    %3196 = vmatpush1.bf16.msra.mxu0 %v1540
    %3197 = vmatprep.subr.bf16.mxu0 %v1545
    %3198 = vmatpush1.bf16.msra.mxu0 %v1544
    %3199 = vmatprep.subr.bf16.mxu0 %v1549
    %3200 = vmatpush1.bf16.msra.mxu0 %v1548
    %3201 = vmatprep.subr.bf16.mxu0 0
    %3202 = vmatpush1.bf16.msra.mxu0 0
    %3203 = vmatprep.subr.bf16.mxu0 0
    %3204 = vmatpush1.bf16.msra.mxu0 0
    %3205 = vmatprep.subr.bf16.mxu0 0
    %3206 = vmatpush1.bf16.msra.mxu0 0
    %3207 = vmatprep.subr.bf16.mxu0 0
    %3208 = vmatpush1.bf16.msra.mxu0 0
    %3209 = vmatprep.subr.bf16.mxu0 0
    %3210 = vmatpush1.bf16.msra.mxu0 0
    %3211 = vmatprep.subr.bf16.mxu0 0
    %3212 = vmatpush1.bf16.msra.mxu0 0
    %3213 = vmatprep.subr.bf16.mxu0 0
    %3214 = vmatpush1.bf16.msra.mxu0 0
    %3215 = vmatprep.subr.bf16.mxu0 0
    %3216 = vmatpush1.bf16.msra.mxu0 0
    %3217 = vmatprep.mubr.bf16.mxu0 0
    %3218 = vmatmul.mubr.bf16.gmra.mrb[0].mxu0 %v2806
    %v3219 = vpop.f32.mrb[0].mxu0
    %v3220 = vadd.f32 %v3179, %v3219
    %v3221 = vpop.f32.mrb[0].mxu0
    %v3222 = vadd.f32 %v3181, %v3221
    %v3223 = vpop.f32.mrb[0].mxu0
    %v3224 = vpop.f32.mrb[0].mxu0
    %3225 = vdwg.mxu0
    %v3226 = vmax.f32 %v2735, %v3015
    %v3227 = vmax.f32 %v2736, %v3017
    %v3228 = vmax.f32 %v2737, %v3220
    %v3229 = vmax.f32 %v2738, %v3222
    %s3230 = scalar_lea.vmem %s0, 27
    %v3231 = vld [vmem:[%s3230] sm:$0xff]
    %v3232 = vld [vmem:[%s3230 + $0x8] sm:$0x1]
    %v3235 = vcombine.high %v3231, %v3231
    %v3237 = vunpack.c.l.s4 1966171168
    %v3238 = vunpack.c.0.s8 %v3237
    %v3239 = vlaneseq
    %v3240 = vshrl.u32 %v3239, 7
    %v3241 = vsub.s32 %v3238, %v3240
    %v3242 = vrot.slane %v3231, %v3241
    %v3244 = vunpack.c.l.s4 1966171168
    %v3245 = vunpack.c.0.s8 %v3244
    %v3246 = vlaneseq
    %v3247 = vshrl.u32 %v3246, 7
    %v3248 = vsub.s32 %v3245, %v3247
    %v3249 = vrot.slane %v3235, %v3248
    %v3250 = vcombine.high %v3242, %v3242
    %v3251 = vcombine.high %v3249, %v3249
    %v3253 = vunpack.c.l.s4 1966171168
    %v3254 = vunpack.c.0.s8 %v3253
    %v3255 = vlaneseq
    %v3256 = vshrl.u32 %v3255, 7
    %v3257 = vsub.s32 %v3254, %v3256
    %v3258 = vrot.slane %v3242, %v3257
    %v3260 = vunpack.c.l.s4 1966171168
    %v3261 = vunpack.c.0.s8 %v3260
    %v3262 = vlaneseq
    %v3263 = vshrl.u32 %v3262, 7
    %v3264 = vsub.s32 %v3261, %v3263
    %v3265 = vrot.slane %v3249, %v3264
    %v3267 = vunpack.c.l.s4 1966171168
    %v3268 = vunpack.c.0.s8 %v3267
    %v3269 = vlaneseq
    %v3270 = vshrl.u32 %v3269, 7
    %v3271 = vsub.s32 %v3268, %v3270
    %v3272 = vrot.slane %v3250, %v3271
    %v3274 = vunpack.c.l.s4 1966171168
    %v3275 = vunpack.c.0.s8 %v3274
    %v3276 = vlaneseq
    %v3277 = vshrl.u32 %v3276, 7
    %v3278 = vsub.s32 %v3275, %v3277
    %v3279 = vrot.slane %v3251, %v3278
    %v3280 = vcombine.high %v3258, %v3258
    %v3281 = vcombine.high %v3265, %v3265
    %v3282 = vcombine.high %v3272, %v3272
    %v3283 = vcombine.high %v3279, %v3279
    %v3285 = vunpack.c.l.s4 1966171168
    %v3286 = vunpack.c.0.s8 %v3285
    %v3287 = vlaneseq
    %v3288 = vshrl.u32 %v3287, 7
    %v3289 = vsub.s32 %v3286, %v3288
    %v3290 = vrot.slane %v3232, %v3289
    %v3292 = vunpack.c.l.s4 1966171168
    %v3293 = vunpack.c.0.s8 %v3292
    %v3294 = vlaneseq
    %v3295 = vshrl.u32 %v3294, 7
    %v3296 = vsub.s32 %v3293, %v3295
    %v3297 = vrot.slane %v3290, %v3296
    %3307 = vmatprep.subr.bf16.mxu0 %v1263
    %3308 = vmatpush1.bf16.msra.mxu0 %v1262
    %3309 = vmatprep.subr.bf16.mxu0 %v1267
    %3310 = vmatpush1.bf16.msra.mxu0 %v1266
    %3311 = vmatprep.subr.bf16.mxu0 %v1271
    %3312 = vmatpush1.bf16.msra.mxu0 %v1270
    %3313 = vmatprep.subr.bf16.mxu0 %v1275
    %3314 = vmatpush1.bf16.msra.mxu0 %v1274
    %3315 = vmatprep.subr.bf16.mxu0 %v1279
    %3316 = vmatpush1.bf16.msra.mxu0 %v1278
    %3317 = vmatprep.subr.bf16.mxu0 %v1283
    %3318 = vmatpush1.bf16.msra.mxu0 %v1282
    %3319 = vmatprep.subr.bf16.mxu0 %v1287
    %3320 = vmatpush1.bf16.msra.mxu0 %v1286
    %3321 = vmatprep.subr.bf16.mxu0 %v1291
    %3322 = vmatpush1.bf16.msra.mxu0 %v1290
    %3323 = vmatprep.subr.bf16.mxu0 %v1295
    %3324 = vmatpush1.bf16.msra.mxu0 %v1294
    %3325 = vmatprep.subr.bf16.mxu0 %v1299
    %3326 = vmatpush1.bf16.msra.mxu0 %v1298
    %3327 = vmatprep.subr.bf16.mxu0 %v1303
    %3328 = vmatpush1.bf16.msra.mxu0 %v1302
    %3329 = vmatprep.subr.bf16.mxu0 %v1307
    %3330 = vmatpush1.bf16.msra.mxu0 %v1306
    %3331 = vmatprep.subr.bf16.mxu0 %v1311
    %3332 = vmatpush1.bf16.msra.mxu0 %v1310
    %3333 = vmatprep.subr.bf16.mxu0 %v1315
    %3334 = vmatpush1.bf16.msra.mxu0 %v1314
    %3335 = vmatprep.subr.bf16.mxu0 %v1319
    %3336 = vmatpush1.bf16.msra.mxu0 %v1318
    %3337 = vmatprep.subr.bf16.mxu0 %v1323
    %3338 = vmatpush1.bf16.msra.mxu0 %v1322
    %3339 = vmatprep.mubr.bf16.mxu0 %v3272
    %3340 = vmatmul.mubr.bf16.gmra.mrb[0].mxu0 %v3258
    %v3341 = vpop.f32.mrb[0].mxu0
    %v3342 = vadd.f32 0.0, %v3341
    %v3343 = vpop.f32.mrb[0].mxu0
    %v3344 = vadd.f32 0.0, %v3343
    %v3345 = vpop.f32.mrb[0].mxu0
    %v3346 = vpop.f32.mrb[0].mxu0
    %3347 = vdwg.mxu0
    %3348 = vmatprep.subr.bf16.mxu0 %v1327
    %3349 = vmatpush1.bf16.msra.mxu0 %v1326
    %3350 = vmatprep.subr.bf16.mxu0 %v1331
    %3351 = vmatpush1.bf16.msra.mxu0 %v1330
    %3352 = vmatprep.subr.bf16.mxu0 %v1335
    %3353 = vmatpush1.bf16.msra.mxu0 %v1334
    %3354 = vmatprep.subr.bf16.mxu0 %v1339
    %3355 = vmatpush1.bf16.msra.mxu0 %v1338
    %3356 = vmatprep.subr.bf16.mxu0 %v1343
    %3357 = vmatpush1.bf16.msra.mxu0 %v1342
    %3358 = vmatprep.subr.bf16.mxu0 %v1347
    %3359 = vmatpush1.bf16.msra.mxu0 %v1346
    %3360 = vmatprep.subr.bf16.mxu0 %v1351
    %3361 = vmatpush1.bf16.msra.mxu0 %v1350
    %3362 = vmatprep.subr.bf16.mxu0 %v1355
    %3363 = vmatpush1.bf16.msra.mxu0 %v1354
    %3364 = vmatprep.subr.bf16.mxu0 %v1359
    %3365 = vmatpush1.bf16.msra.mxu0 %v1358
    %3366 = vmatprep.subr.bf16.mxu0 %v1363
    %3367 = vmatpush1.bf16.msra.mxu0 %v1362
    %3368 = vmatprep.subr.bf16.mxu0 %v1367
    %3369 = vmatpush1.bf16.msra.mxu0 %v1366
    %3370 = vmatprep.subr.bf16.mxu0 %v1371
    %3371 = vmatpush1.bf16.msra.mxu0 %v1370
    %3372 = vmatprep.subr.bf16.mxu0 %v1375
    %3373 = vmatpush1.bf16.msra.mxu0 %v1374
    %3374 = vmatprep.subr.bf16.mxu0 %v1379
    %3375 = vmatpush1.bf16.msra.mxu0 %v1378
    %3376 = vmatprep.subr.bf16.mxu0 %v1383
    %3377 = vmatpush1.bf16.msra.mxu0 %v1382
    %3378 = vmatprep.subr.bf16.mxu0 %v1387
    %3379 = vmatpush1.bf16.msra.mxu0 %v1386
    %3380 = vmatprep.mubr.bf16.mxu0 %v3282
    %3381 = vmatmul.mubr.bf16.gmra.mrb[0].mxu0 %v3280
    %v3382 = vpop.f32.mrb[0].mxu0
    %v3383 = vadd.f32 %v3342, %v3382
    %v3384 = vpop.f32.mrb[0].mxu0
    %v3385 = vadd.f32 %v3344, %v3384
    %v3386 = vpop.f32.mrb[0].mxu0
    %v3387 = vpop.f32.mrb[0].mxu0
    %3388 = vdwg.mxu0
    %3389 = vmatprep.subr.bf16.mxu0 %v1391
    %3390 = vmatpush1.bf16.msra.mxu0 %v1390
    %3391 = vmatprep.subr.bf16.mxu0 %v1395
    %3392 = vmatpush1.bf16.msra.mxu0 %v1394
    %3393 = vmatprep.subr.bf16.mxu0 %v1399
    %3394 = vmatpush1.bf16.msra.mxu0 %v1398
    %3395 = vmatprep.subr.bf16.mxu0 %v1403
    %3396 = vmatpush1.bf16.msra.mxu0 %v1402
    %3397 = vmatprep.subr.bf16.mxu0 %v1407
    %3398 = vmatpush1.bf16.msra.mxu0 %v1406
    %3399 = vmatprep.subr.bf16.mxu0 %v1411
    %3400 = vmatpush1.bf16.msra.mxu0 %v1410
    %3401 = vmatprep.subr.bf16.mxu0 %v1415
    %3402 = vmatpush1.bf16.msra.mxu0 %v1414
    %3403 = vmatprep.subr.bf16.mxu0 %v1419
    %3404 = vmatpush1.bf16.msra.mxu0 %v1418
    %3405 = vmatprep.subr.bf16.mxu0 %v1423
    %3406 = vmatpush1.bf16.msra.mxu0 %v1422
    %3407 = vmatprep.subr.bf16.mxu0 %v1427
    %3408 = vmatpush1.bf16.msra.mxu0 %v1426
    %3409 = vmatprep.subr.bf16.mxu0 %v1431
    %3410 = vmatpush1.bf16.msra.mxu0 %v1430
    %3411 = vmatprep.subr.bf16.mxu0 %v1435
    %3412 = vmatpush1.bf16.msra.mxu0 %v1434
    %3413 = vmatprep.subr.bf16.mxu0 %v1439
    %3414 = vmatpush1.bf16.msra.mxu0 %v1438
    %3415 = vmatprep.subr.bf16.mxu0 %v1443
    %3416 = vmatpush1.bf16.msra.mxu0 %v1442
    %3417 = vmatprep.subr.bf16.mxu0 %v1447
    %3418 = vmatpush1.bf16.msra.mxu0 %v1446
    %3419 = vmatprep.subr.bf16.mxu0 %v1451
    %3420 = vmatpush1.bf16.msra.mxu0 %v1450
    %3421 = vmatprep.mubr.bf16.mxu0 %v3279
    %3422 = vmatmul.mubr.bf16.gmra.mrb[0].mxu0 %v3265
    %v3423 = vpop.f32.mrb[0].mxu0
    %v3424 = vadd.f32 %v3383, %v3423
    %v3425 = vpop.f32.mrb[0].mxu0
    %v3426 = vadd.f32 %v3385, %v3425
    %v3427 = vpop.f32.mrb[0].mxu0
    %v3428 = vpop.f32.mrb[0].mxu0
    %3429 = vdwg.mxu0
    %3430 = vmatprep.subr.bf16.mxu0 %v1455
    %3431 = vmatpush1.bf16.msra.mxu0 %v1454
    %3432 = vmatprep.subr.bf16.mxu0 %v1459
    %3433 = vmatpush1.bf16.msra.mxu0 %v1458
    %3434 = vmatprep.subr.bf16.mxu0 %v1463
    %3435 = vmatpush1.bf16.msra.mxu0 %v1462
    %3436 = vmatprep.subr.bf16.mxu0 %v1467
    %3437 = vmatpush1.bf16.msra.mxu0 %v1466
    %3438 = vmatprep.subr.bf16.mxu0 %v1471
    %3439 = vmatpush1.bf16.msra.mxu0 %v1470
    %3440 = vmatprep.subr.bf16.mxu0 %v1475
    %3441 = vmatpush1.bf16.msra.mxu0 %v1474
    %3442 = vmatprep.subr.bf16.mxu0 %v1479
    %3443 = vmatpush1.bf16.msra.mxu0 %v1478
    %3444 = vmatprep.subr.bf16.mxu0 %v1483
    %3445 = vmatpush1.bf16.msra.mxu0 %v1482
    %3446 = vmatprep.subr.bf16.mxu0 %v1487
    %3447 = vmatpush1.bf16.msra.mxu0 %v1486
    %3448 = vmatprep.subr.bf16.mxu0 %v1491
    %3449 = vmatpush1.bf16.msra.mxu0 %v1490
    %3450 = vmatprep.subr.bf16.mxu0 %v1495
    %3451 = vmatpush1.bf16.msra.mxu0 %v1494
    %3452 = vmatprep.subr.bf16.mxu0 %v1499
    %3453 = vmatpush1.bf16.msra.mxu0 %v1498
    %3454 = vmatprep.subr.bf16.mxu0 %v1503
    %3455 = vmatpush1.bf16.msra.mxu0 %v1502
    %3456 = vmatprep.subr.bf16.mxu0 %v1507
    %3457 = vmatpush1.bf16.msra.mxu0 %v1506
    %3458 = vmatprep.subr.bf16.mxu0 %v1511
    %3459 = vmatpush1.bf16.msra.mxu0 %v1510
    %3460 = vmatprep.subr.bf16.mxu0 %v1515
    %3461 = vmatpush1.bf16.msra.mxu0 %v1514
    %3462 = vmatprep.mubr.bf16.mxu0 %v3283
    %3463 = vmatmul.mubr.bf16.gmra.mrb[0].mxu0 %v3281
    %v3464 = vpop.f32.mrb[0].mxu0
    %v3465 = vadd.f32 %v3424, %v3464
    %v3466 = vpop.f32.mrb[0].mxu0
    %v3467 = vadd.f32 %v3426, %v3466
    %v3468 = vpop.f32.mrb[0].mxu0
    %v3469 = vpop.f32.mrb[0].mxu0
    %3470 = vdwg.mxu0
    %3471 = vmatprep.subr.bf16.mxu0 %v1519
    %3472 = vmatpush1.bf16.msra.mxu0 %v1518
    %3473 = vmatprep.subr.bf16.mxu0 %v1523
    %3474 = vmatpush1.bf16.msra.mxu0 %v1522
    %3475 = vmatprep.subr.bf16.mxu0 %v1527
    %3476 = vmatpush1.bf16.msra.mxu0 %v1526
    %3477 = vmatprep.subr.bf16.mxu0 %v1531
    %3478 = vmatpush1.bf16.msra.mxu0 %v1530
    %3479 = vmatprep.subr.bf16.mxu0 %v1535
    %3480 = vmatpush1.bf16.msra.mxu0 %v1534
    %3481 = vmatprep.subr.bf16.mxu0 %v1539
    %3482 = vmatpush1.bf16.msra.mxu0 %v1538
    %3483 = vmatprep.subr.bf16.mxu0 %v1543
    %3484 = vmatpush1.bf16.msra.mxu0 %v1542
    %3485 = vmatprep.subr.bf16.mxu0 %v1547
    %3486 = vmatpush1.bf16.msra.mxu0 %v1546
    %3487 = vmatprep.subr.bf16.mxu0 0
    %3488 = vmatpush1.bf16.msra.mxu0 0
    %3489 = vmatprep.subr.bf16.mxu0 0
    %3490 = vmatpush1.bf16.msra.mxu0 0
    %3491 = vmatprep.subr.bf16.mxu0 0
    %3492 = vmatpush1.bf16.msra.mxu0 0
    %3493 = vmatprep.subr.bf16.mxu0 0
    %3494 = vmatpush1.bf16.msra.mxu0 0
    %3495 = vmatprep.subr.bf16.mxu0 0
    %3496 = vmatpush1.bf16.msra.mxu0 0
    %3497 = vmatprep.subr.bf16.mxu0 0
    %3498 = vmatpush1.bf16.msra.mxu0 0
    %3499 = vmatprep.subr.bf16.mxu0 0
    %3500 = vmatpush1.bf16.msra.mxu0 0
    %3501 = vmatprep.subr.bf16.mxu0 0
    %3502 = vmatpush1.bf16.msra.mxu0 0
    %3503 = vmatprep.mubr.bf16.mxu0 0
    %3504 = vmatmul.mubr.bf16.gmra.mrb[0].mxu0 %v3297
    %v3505 = vpop.f32.mrb[0].mxu0
    %v3506 = vadd.f32 %v3465, %v3505
    %v3507 = vpop.f32.mrb[0].mxu0
    %v3508 = vadd.f32 %v3467, %v3507
    %v3509 = vpop.f32.mrb[0].mxu0
    %v3510 = vpop.f32.mrb[0].mxu0
    %3511 = vdwg.mxu0
    %3512 = vmatprep.subr.bf16.mxu0 %v1265
    %3513 = vmatpush1.bf16.msra.mxu0 %v1264
    %3514 = vmatprep.subr.bf16.mxu0 %v1269
    %3515 = vmatpush1.bf16.msra.mxu0 %v1268
    %3516 = vmatprep.subr.bf16.mxu0 %v1273
    %3517 = vmatpush1.bf16.msra.mxu0 %v1272
    %3518 = vmatprep.subr.bf16.mxu0 %v1277
    %3519 = vmatpush1.bf16.msra.mxu0 %v1276
    %3520 = vmatprep.subr.bf16.mxu0 %v1281
    %3521 = vmatpush1.bf16.msra.mxu0 %v1280
    %3522 = vmatprep.subr.bf16.mxu0 %v1285
    %3523 = vmatpush1.bf16.msra.mxu0 %v1284
    %3524 = vmatprep.subr.bf16.mxu0 %v1289
    %3525 = vmatpush1.bf16.msra.mxu0 %v1288
    %3526 = vmatprep.subr.bf16.mxu0 %v1293
    %3527 = vmatpush1.bf16.msra.mxu0 %v1292
    %3528 = vmatprep.subr.bf16.mxu0 %v1297
    %3529 = vmatpush1.bf16.msra.mxu0 %v1296
    %3530 = vmatprep.subr.bf16.mxu0 %v1301
    %3531 = vmatpush1.bf16.msra.mxu0 %v1300
    %3532 = vmatprep.subr.bf16.mxu0 %v1305
    %3533 = vmatpush1.bf16.msra.mxu0 %v1304
    %3534 = vmatprep.subr.bf16.mxu0 %v1309
    %3535 = vmatpush1.bf16.msra.mxu0 %v1308
    %3536 = vmatprep.subr.bf16.mxu0 %v1313
    %3537 = vmatpush1.bf16.msra.mxu0 %v1312
    %3538 = vmatprep.subr.bf16.mxu0 %v1317
    %3539 = vmatpush1.bf16.msra.mxu0 %v1316
    %3540 = vmatprep.subr.bf16.mxu0 %v1321
    %3541 = vmatpush1.bf16.msra.mxu0 %v1320
    %3542 = vmatprep.subr.bf16.mxu0 %v1325
    %3543 = vmatpush1.bf16.msra.mxu0 %v1324
    %3544 = vmatprep.mubr.bf16.mxu0 %v3272
    %3545 = vmatmul.mubr.bf16.gmra.mrb[0].mxu0 %v3258
    %v3546 = vpop.f32.mrb[0].mxu0
    %v3547 = vadd.f32 0.0, %v3546
    %v3548 = vpop.f32.mrb[0].mxu0
    %v3549 = vadd.f32 0.0, %v3548
    %v3550 = vpop.f32.mrb[0].mxu0
    %v3551 = vpop.f32.mrb[0].mxu0
    %3552 = vdwg.mxu0
    %3553 = vmatprep.subr.bf16.mxu0 %v1329
    %3554 = vmatpush1.bf16.msra.mxu0 %v1328
    %3555 = vmatprep.subr.bf16.mxu0 %v1333
    %3556 = vmatpush1.bf16.msra.mxu0 %v1332
    %3557 = vmatprep.subr.bf16.mxu0 %v1337
    %3558 = vmatpush1.bf16.msra.mxu0 %v1336
    %3559 = vmatprep.subr.bf16.mxu0 %v1341
    %3560 = vmatpush1.bf16.msra.mxu0 %v1340
    %3561 = vmatprep.subr.bf16.mxu0 %v1345
    %3562 = vmatpush1.bf16.msra.mxu0 %v1344
    %3563 = vmatprep.subr.bf16.mxu0 %v1349
    %3564 = vmatpush1.bf16.msra.mxu0 %v1348
    %3565 = vmatprep.subr.bf16.mxu0 %v1353
    %3566 = vmatpush1.bf16.msra.mxu0 %v1352
    %3567 = vmatprep.subr.bf16.mxu0 %v1357
    %3568 = vmatpush1.bf16.msra.mxu0 %v1356
    %3569 = vmatprep.subr.bf16.mxu0 %v1361
    %3570 = vmatpush1.bf16.msra.mxu0 %v1360
    %3571 = vmatprep.subr.bf16.mxu0 %v1365
    %3572 = vmatpush1.bf16.msra.mxu0 %v1364
    %3573 = vmatprep.subr.bf16.mxu0 %v1369
    %3574 = vmatpush1.bf16.msra.mxu0 %v1368
    %3575 = vmatprep.subr.bf16.mxu0 %v1373
    %3576 = vmatpush1.bf16.msra.mxu0 %v1372
    %3577 = vmatprep.subr.bf16.mxu0 %v1377
    %3578 = vmatpush1.bf16.msra.mxu0 %v1376
    %3579 = vmatprep.subr.bf16.mxu0 %v1381
    %3580 = vmatpush1.bf16.msra.mxu0 %v1380
    %3581 = vmatprep.subr.bf16.mxu0 %v1385
    %3582 = vmatpush1.bf16.msra.mxu0 %v1384
    %3583 = vmatprep.subr.bf16.mxu0 %v1389
    %3584 = vmatpush1.bf16.msra.mxu0 %v1388
    %3585 = vmatprep.mubr.bf16.mxu0 %v3282
    %3586 = vmatmul.mubr.bf16.gmra.mrb[0].mxu0 %v3280
    %v3587 = vpop.f32.mrb[0].mxu0
    %v3588 = vadd.f32 %v3547, %v3587
    %v3589 = vpop.f32.mrb[0].mxu0
    %v3590 = vadd.f32 %v3549, %v3589
    %v3591 = vpop.f32.mrb[0].mxu0
    %v3592 = vpop.f32.mrb[0].mxu0
    %3593 = vdwg.mxu0
    %3594 = vmatprep.subr.bf16.mxu0 %v1393
    %3595 = vmatpush1.bf16.msra.mxu0 %v1392
    %3596 = vmatprep.subr.bf16.mxu0 %v1397
    %3597 = vmatpush1.bf16.msra.mxu0 %v1396
    %3598 = vmatprep.subr.bf16.mxu0 %v1401
    %3599 = vmatpush1.bf16.msra.mxu0 %v1400
    %3600 = vmatprep.subr.bf16.mxu0 %v1405
    %3601 = vmatpush1.bf16.msra.mxu0 %v1404
    %3602 = vmatprep.subr.bf16.mxu0 %v1409
    %3603 = vmatpush1.bf16.msra.mxu0 %v1408
    %3604 = vmatprep.subr.bf16.mxu0 %v1413
    %3605 = vmatpush1.bf16.msra.mxu0 %v1412
    %3606 = vmatprep.subr.bf16.mxu0 %v1417
    %3607 = vmatpush1.bf16.msra.mxu0 %v1416
    %3608 = vmatprep.subr.bf16.mxu0 %v1421
    %3609 = vmatpush1.bf16.msra.mxu0 %v1420
    %3610 = vmatprep.subr.bf16.mxu0 %v1425
    %3611 = vmatpush1.bf16.msra.mxu0 %v1424
    %3612 = vmatprep.subr.bf16.mxu0 %v1429
    %3613 = vmatpush1.bf16.msra.mxu0 %v1428
    %3614 = vmatprep.subr.bf16.mxu0 %v1433
    %3615 = vmatpush1.bf16.msra.mxu0 %v1432
    %3616 = vmatprep.subr.bf16.mxu0 %v1437
    %3617 = vmatpush1.bf16.msra.mxu0 %v1436
    %3618 = vmatprep.subr.bf16.mxu0 %v1441
    %3619 = vmatpush1.bf16.msra.mxu0 %v1440
    %3620 = vmatprep.subr.bf16.mxu0 %v1445
    %3621 = vmatpush1.bf16.msra.mxu0 %v1444
    %3622 = vmatprep.subr.bf16.mxu0 %v1449
    %3623 = vmatpush1.bf16.msra.mxu0 %v1448
    %3624 = vmatprep.subr.bf16.mxu0 %v1453
    %3625 = vmatpush1.bf16.msra.mxu0 %v1452
    %3626 = vmatprep.mubr.bf16.mxu0 %v3279
    %3627 = vmatmul.mubr.bf16.gmra.mrb[0].mxu0 %v3265
    %v3628 = vpop.f32.mrb[0].mxu0
    %v3629 = vadd.f32 %v3588, %v3628
    %v3630 = vpop.f32.mrb[0].mxu0
    %v3631 = vadd.f32 %v3590, %v3630
    %v3632 = vpop.f32.mrb[0].mxu0
    %v3633 = vpop.f32.mrb[0].mxu0
    %3634 = vdwg.mxu0
    %3635 = vmatprep.subr.bf16.mxu0 %v1457
    %3636 = vmatpush1.bf16.msra.mxu0 %v1456
    %3637 = vmatprep.subr.bf16.mxu0 %v1461
    %3638 = vmatpush1.bf16.msra.mxu0 %v1460
    %3639 = vmatprep.subr.bf16.mxu0 %v1465
    %3640 = vmatpush1.bf16.msra.mxu0 %v1464
    %3641 = vmatprep.subr.bf16.mxu0 %v1469
    %3642 = vmatpush1.bf16.msra.mxu0 %v1468
    %3643 = vmatprep.subr.bf16.mxu0 %v1473
    %3644 = vmatpush1.bf16.msra.mxu0 %v1472
    %3645 = vmatprep.subr.bf16.mxu0 %v1477
    %3646 = vmatpush1.bf16.msra.mxu0 %v1476
    %3647 = vmatprep.subr.bf16.mxu0 %v1481
    %3648 = vmatpush1.bf16.msra.mxu0 %v1480
    %3649 = vmatprep.subr.bf16.mxu0 %v1485
    %3650 = vmatpush1.bf16.msra.mxu0 %v1484
    %3651 = vmatprep.subr.bf16.mxu0 %v1489
    %3652 = vmatpush1.bf16.msra.mxu0 %v1488
    %3653 = vmatprep.subr.bf16.mxu0 %v1493
    %3654 = vmatpush1.bf16.msra.mxu0 %v1492
    %3655 = vmatprep.subr.bf16.mxu0 %v1497
    %3656 = vmatpush1.bf16.msra.mxu0 %v1496
    %3657 = vmatprep.subr.bf16.mxu0 %v1501
    %3658 = vmatpush1.bf16.msra.mxu0 %v1500
    %3659 = vmatprep.subr.bf16.mxu0 %v1505
    %3660 = vmatpush1.bf16.msra.mxu0 %v1504
    %3661 = vmatprep.subr.bf16.mxu0 %v1509
    %3662 = vmatpush1.bf16.msra.mxu0 %v1508
    %3663 = vmatprep.subr.bf16.mxu0 %v1513
    %3664 = vmatpush1.bf16.msra.mxu0 %v1512
    %3665 = vmatprep.subr.bf16.mxu0 %v1517
    %3666 = vmatpush1.bf16.msra.mxu0 %v1516
    %3667 = vmatprep.mubr.bf16.mxu0 %v3283
    %3668 = vmatmul.mubr.bf16.gmra.mrb[0].mxu0 %v3281
    %v3669 = vpop.f32.mrb[0].mxu0
    %v3670 = vadd.f32 %v3629, %v3669
    %v3671 = vpop.f32.mrb[0].mxu0
    %v3672 = vadd.f32 %v3631, %v3671
    %v3673 = vpop.f32.mrb[0].mxu0
    %v3674 = vpop.f32.mrb[0].mxu0
    %3675 = vdwg.mxu0
    %3676 = vmatprep.subr.bf16.mxu0 %v1521
    %3677 = vmatpush1.bf16.msra.mxu0 %v1520
    %3678 = vmatprep.subr.bf16.mxu0 %v1525
    %3679 = vmatpush1.bf16.msra.mxu0 %v1524
    %3680 = vmatprep.subr.bf16.mxu0 %v1529
    %3681 = vmatpush1.bf16.msra.mxu0 %v1528
    %3682 = vmatprep.subr.bf16.mxu0 %v1533
    %3683 = vmatpush1.bf16.msra.mxu0 %v1532
    %3684 = vmatprep.subr.bf16.mxu0 %v1537
    %3685 = vmatpush1.bf16.msra.mxu0 %v1536
    %3686 = vmatprep.subr.bf16.mxu0 %v1541
    %3687 = vmatpush1.bf16.msra.mxu0 %v1540
    %3688 = vmatprep.subr.bf16.mxu0 %v1545
    %3689 = vmatpush1.bf16.msra.mxu0 %v1544
    %3690 = vmatprep.subr.bf16.mxu0 %v1549
    %3691 = vmatpush1.bf16.msra.mxu0 %v1548
    %3692 = vmatprep.subr.bf16.mxu0 0
    %3693 = vmatpush1.bf16.msra.mxu0 0
    %3694 = vmatprep.subr.bf16.mxu0 0
    %3695 = vmatpush1.bf16.msra.mxu0 0
    %3696 = vmatprep.subr.bf16.mxu0 0
    %3697 = vmatpush1.bf16.msra.mxu0 0
    %3698 = vmatprep.subr.bf16.mxu0 0
    %3699 = vmatpush1.bf16.msra.mxu0 0
    %3700 = vmatprep.subr.bf16.mxu0 0
    %3701 = vmatpush1.bf16.msra.mxu0 0
    %3702 = vmatprep.subr.bf16.mxu0 0
    %3703 = vmatpush1.bf16.msra.mxu0 0
    %3704 = vmatprep.subr.bf16.mxu0 0
    %3705 = vmatpush1.bf16.msra.mxu0 0
    %3706 = vmatprep.subr.bf16.mxu0 0
    %3707 = vmatpush1.bf16.msra.mxu0 0
    %3708 = vmatprep.mubr.bf16.mxu0 0
    %3709 = vmatmul.mubr.bf16.gmra.mrb[0].mxu0 %v3297
    %v3710 = vpop.f32.mrb[0].mxu0
    %v3711 = vadd.f32 %v3670, %v3710
    %v3712 = vpop.f32.mrb[0].mxu0
    %v3713 = vadd.f32 %v3672, %v3712
    %v3714 = vpop.f32.mrb[0].mxu0
    %v3715 = vpop.f32.mrb[0].mxu0
    %3716 = vdwg.mxu0
    %v3717 = vmax.f32 %v3226, %v3506
    %v3718 = vmax.f32 %v3227, %v3508
    %v3719 = vmax.f32 %v3228, %v3711
    %v3720 = vmax.f32 %v3229, %v3713
    %v3721 = vld [vmem:[%s2] sm:$0xf]
    %v3723 = vlaneseq
    %v3724 = vshrl.u32 %v3723, 7
    %v3725 = vsub.s32 0, %v3724
    %v3726 = vrot.slane %v3721, %v3725
    %v3727 = vlaneseq
    %v3728 = vshrl.u32 %v3727, 7
    %v3729 = vsub.s32 1, %v3728
    %v3730 = vrot.slane %v3721, %v3729
    %v3731 = vlaneseq
    %v3732 = vshrl.u32 %v3731, 7
    %v3733 = vsub.s32 2, %v3732
    %v3734 = vrot.slane %v3721, %v3733
    %v3735 = vlaneseq
    %v3736 = vshrl.u32 %v3735, 7
    %v3737 = vsub.s32 3, %v3736
    %v3738 = vrot.slane %v3721, %v3737
    %v3743 = vadd.f32 %v3717, %v3726
    %v3744 = vadd.f32 %v3718, %v3730
    %v3745 = vadd.f32 %v3719, %v3734
    %v3746 = vadd.f32 %v3720, %v3738
    %v3747 = vmax.f32 %v3743, 0.0
    %v3748 = vmax.f32 %v3744, 0.0
    %v3749 = vmax.f32 %v3745, 0.0
    %v3750 = vmax.f32 %v3746, 0.0
    %v3751 = vpack.c.bf16 %v3747, %v3747
    %v3752 = vpack.c.bf16 %v3748, %v3748
    %v3753 = vpack.c.bf16 %v3749, %v3749
    %v3754 = vpack.c.bf16 %v3750, %v3750
    %v3755 = vld [vmem:[%s3] sm:$0xff]
    %v3756 = vld [vmem:[%s3 + $0x8] sm:$0xff]
    %v3757 = vld [vmem:[%s3 + $0x10] sm:$0xff]
    %v3758 = vld [vmem:[%s3 + $0x18] sm:$0xff]
    %v3759 = vld [vmem:[%s3 + $0x20] sm:$0xff]
    %v3760 = vld [vmem:[%s3 + $0x28] sm:$0xff]
    %v3761 = vld [vmem:[%s3 + $0x30] sm:$0xff]
    %v3762 = vld [vmem:[%s3 + $0x38] sm:$0xff]
    %v3763 = vld [vmem:[%s3 + $0x40] sm:$0xff]
    %v3764 = vld [vmem:[%s3 + $0x48] sm:$0xff]
    %v3765 = vld [vmem:[%s3 + $0x50] sm:$0xff]
    %v3766 = vld [vmem:[%s3 + $0x58] sm:$0xff]
    %v3767 = vld [vmem:[%s3 + $0x60] sm:$0xff]
    %v3768 = vld [vmem:[%s3 + $0x68] sm:$0xff]
    %v3769 = vld [vmem:[%s3 + $0x70] sm:$0xff]
    %v3770 = vld [vmem:[%s3 + $0x78] sm:$0xff]
    %v3771 = vld [vmem:[%s3 + $0x80] sm:$0xff]
    %v3772 = vld [vmem:[%s3 + $0x88] sm:$0xff]
    %v3773 = vld [vmem:[%s3 + $0x90] sm:$0xff]
    %v3774 = vld [vmem:[%s3 + $0x98] sm:$0xff]
    %v3775 = vld [vmem:[%s3 + $0xa0] sm:$0xff]
    %v3776 = vld [vmem:[%s3 + $0xa8] sm:$0xff]
    %v3777 = vld [vmem:[%s3 + $0xb0] sm:$0xff]
    %v3778 = vld [vmem:[%s3 + $0xb8] sm:$0xff]
    %v3779 = vld [vmem:[%s3 + $0xc0] sm:$0xff]
    %v3780 = vld [vmem:[%s3 + $0xc8] sm:$0xff]
    %v3781 = vld [vmem:[%s3 + $0xd0] sm:$0xff]
    %v3782 = vld [vmem:[%s3 + $0xd8] sm:$0xff]
    %v3783 = vld [vmem:[%s3 + $0xe0] sm:$0xff]
    %v3784 = vld [vmem:[%s3 + $0xe8] sm:$0xff]
    %v3785 = vld [vmem:[%s3 + $0xf0] sm:$0xff]
    %v3786 = vld [vmem:[%s3 + $0xf8] sm:$0xff]
    %v3787 = vld [vmem:[%s3 + $0x100] sm:$0xff]
    %v3788 = vld [vmem:[%s3 + $0x108] sm:$0xff]
    %v3789 = vld [vmem:[%s3 + $0x110] sm:$0xff]
    %v3790 = vld [vmem:[%s3 + $0x118] sm:$0xff]
    %v3791 = vld [vmem:[%s3 + $0x120] sm:$0xff]
    %v3792 = vld [vmem:[%s3 + $0x128] sm:$0xff]
    %v3793 = vld [vmem:[%s3 + $0x130] sm:$0xff]
    %v3794 = vld [vmem:[%s3 + $0x138] sm:$0xff]
    %v3795 = vld [vmem:[%s3 + $0x140] sm:$0xff]
    %v3796 = vld [vmem:[%s3 + $0x148] sm:$0xff]
    %v3797 = vld [vmem:[%s3 + $0x150] sm:$0xff]
    %v3798 = vld [vmem:[%s3 + $0x158] sm:$0xff]
    %v3799 = vld [vmem:[%s3 + $0x160] sm:$0xff]
    %v3800 = vld [vmem:[%s3 + $0x168] sm:$0xff]
    %v3801 = vld [vmem:[%s3 + $0x170] sm:$0xff]
    %v3802 = vld [vmem:[%s3 + $0x178] sm:$0xff]
    %v3803 = vld [vmem:[%s3 + $0x180] sm:$0xff]
    %v3804 = vld [vmem:[%s3 + $0x188] sm:$0xff]
    %v3805 = vld [vmem:[%s3 + $0x190] sm:$0xff]
    %v3806 = vld [vmem:[%s3 + $0x198] sm:$0xff]
    %v3807 = vld [vmem:[%s3 + $0x1a0] sm:$0xff]
    %v3808 = vld [vmem:[%s3 + $0x1a8] sm:$0xff]
    %v3809 = vld [vmem:[%s3 + $0x1b0] sm:$0xff]
    %v3810 = vld [vmem:[%s3 + $0x1b8] sm:$0xff]
    %v3811 = vld [vmem:[%s3 + $0x1c0] sm:$0xff]
    %v3812 = vld [vmem:[%s3 + $0x1c8] sm:$0xff]
    %v3813 = vld [vmem:[%s3 + $0x1d0] sm:$0xff]
    %v3814 = vld [vmem:[%s3 + $0x1d8] sm:$0xff]
    %v3815 = vld [vmem:[%s3 + $0x1e0] sm:$0xff]
    %v3816 = vld [vmem:[%s3 + $0x1e8] sm:$0xff]
    %v3817 = vld [vmem:[%s3 + $0x1f0] sm:$0xff]
    %v3818 = vld [vmem:[%s3 + $0x1f8] sm:$0xff]
    %v3819 = vld [vmem:[%s3 + $0x200] sm:$0xff]
    %v3820 = vld [vmem:[%s3 + $0x208] sm:$0xff]
    %v3821 = vld [vmem:[%s3 + $0x210] sm:$0xff]
    %v3822 = vld [vmem:[%s3 + $0x218] sm:$0xff]
    %v3823 = vld [vmem:[%s3 + $0x220] sm:$0xff]
    %v3824 = vld [vmem:[%s3 + $0x228] sm:$0xff]
    %v3825 = vld [vmem:[%s3 + $0x230] sm:$0xff]
    %v3826 = vld [vmem:[%s3 + $0x238] sm:$0xff]
    %v3827 = vld [vmem:[%s3 + $0x240] sm:$0xff]
    %v3828 = vld [vmem:[%s3 + $0x248] sm:$0xff]
    %v3829 = vld [vmem:[%s3 + $0x250] sm:$0xff]
    %v3830 = vld [vmem:[%s3 + $0x258] sm:$0xff]
    %v3831 = vld [vmem:[%s3 + $0x260] sm:$0xff]
    %v3832 = vld [vmem:[%s3 + $0x268] sm:$0xff]
    %v3833 = vld [vmem:[%s3 + $0x270] sm:$0xff]
    %v3834 = vld [vmem:[%s3 + $0x278] sm:$0xff]
    %v3835 = vld [vmem:[%s3 + $0x280] sm:$0xff]
    %v3836 = vld [vmem:[%s3 + $0x288] sm:$0xff]
    %v3837 = vld [vmem:[%s3 + $0x290] sm:$0xff]
    %v3838 = vld [vmem:[%s3 + $0x298] sm:$0xff]
    %v3839 = vld [vmem:[%s3 + $0x2a0] sm:$0xff]
    %v3840 = vld [vmem:[%s3 + $0x2a8] sm:$0xff]
    %v3841 = vld [vmem:[%s3 + $0x2b0] sm:$0xff]
    %v3842 = vld [vmem:[%s3 + $0x2b8] sm:$0xff]
    %v3843 = vld [vmem:[%s3 + $0x2c0] sm:$0xff]
    %v3844 = vld [vmem:[%s3 + $0x2c8] sm:$0xff]
    %v3845 = vld [vmem:[%s3 + $0x2d0] sm:$0xff]
    %v3846 = vld [vmem:[%s3 + $0x2d8] sm:$0xff]
    %v3847 = vld [vmem:[%s3 + $0x2e0] sm:$0xff]
    %v3848 = vld [vmem:[%s3 + $0x2e8] sm:$0xff]
    %v3849 = vld [vmem:[%s3 + $0x2f0] sm:$0xff]
    %v3850 = vld [vmem:[%s3 + $0x2f8] sm:$0xff]
    %v3851 = vld [vmem:[%s3 + $0x300] sm:$0xff]
    %v3852 = vld [vmem:[%s3 + $0x308] sm:$0xff]
    %v3853 = vld [vmem:[%s3 + $0x310] sm:$0xff]
    %v3854 = vld [vmem:[%s3 + $0x318] sm:$0xff]
    %v3855 = vld [vmem:[%s3 + $0x320] sm:$0xff]
    %v3856 = vld [vmem:[%s3 + $0x328] sm:$0xff]
    %v3857 = vld [vmem:[%s3 + $0x330] sm:$0xff]
    %v3858 = vld [vmem:[%s3 + $0x338] sm:$0xff]
    %v3859 = vld [vmem:[%s3 + $0x340] sm:$0xff]
    %v3860 = vld [vmem:[%s3 + $0x348] sm:$0xff]
    %v3861 = vld [vmem:[%s3 + $0x350] sm:$0xff]
    %v3862 = vld [vmem:[%s3 + $0x358] sm:$0xff]
    %v3863 = vld [vmem:[%s3 + $0x360] sm:$0xff]
    %v3864 = vld [vmem:[%s3 + $0x368] sm:$0xff]
    %v3865 = vld [vmem:[%s3 + $0x370] sm:$0xff]
    %v3866 = vld [vmem:[%s3 + $0x378] sm:$0xff]
    %v3867 = vld [vmem:[%s3 + $0x380] sm:$0xff]
    %v3868 = vld [vmem:[%s3 + $0x388] sm:$0xff]
    %v3869 = vld [vmem:[%s3 + $0x390] sm:$0xff]
    %v3870 = vld [vmem:[%s3 + $0x398] sm:$0xff]
    %v3871 = vld [vmem:[%s3 + $0x3a0] sm:$0xff]
    %v3872 = vld [vmem:[%s3 + $0x3a8] sm:$0xff]
    %v3873 = vld [vmem:[%s3 + $0x3b0] sm:$0xff]
    %v3874 = vld [vmem:[%s3 + $0x3b8] sm:$0xff]
    %v3875 = vld [vmem:[%s3 + $0x3c0] sm:$0xff]
    %v3876 = vld [vmem:[%s3 + $0x3c8] sm:$0xff]
    %v3877 = vld [vmem:[%s3 + $0x3d0] sm:$0xff]
    %v3878 = vld [vmem:[%s3 + $0x3d8] sm:$0xff]
    %v3879 = vld [vmem:[%s3 + $0x3e0] sm:$0xff]
    %v3880 = vld [vmem:[%s3 + $0x3e8] sm:$0xff]
    %v3881 = vld [vmem:[%s3 + $0x3f0] sm:$0xff]
    %v3882 = vld [vmem:[%s3 + $0x3f8] sm:$0xff]
    %v3883 = vld [vmem:[%s4] sm:$0xf]
    %v3885 = vlaneseq
    %v3886 = vshrl.u32 %v3885, 7
    %v3887 = vsub.s32 0, %v3886
    %v3888 = vrot.slane %v3883, %v3887
    %v3889 = vlaneseq
    %v3890 = vshrl.u32 %v3889, 7
    %v3891 = vsub.s32 1, %v3890
    %v3892 = vrot.slane %v3883, %v3891
    %v3893 = vlaneseq
    %v3894 = vshrl.u32 %v3893, 7
    %v3895 = vsub.s32 2, %v3894
    %v3896 = vrot.slane %v3883, %v3895
    %v3897 = vlaneseq
    %v3898 = vshrl.u32 %v3897, 7
    %v3899 = vsub.s32 3, %v3898
    %v3900 = vrot.slane %v3883, %v3899
    %v4033 = vunpack.c.l.b16 %v3755
    %v4034 = vunpack.c.h.b16 %v3755
    %v4035 = vunpack.c.l.b16 %v3756
    %v4036 = vunpack.c.h.b16 %v3756
    %v4037 = vunpack.c.l.b16 %v3757
    %v4038 = vunpack.c.h.b16 %v3757
    %v4039 = vunpack.c.l.b16 %v3758
    %v4040 = vunpack.c.h.b16 %v3758
    %v4041 = vunpack.c.l.b16 %v3759
    %v4042 = vunpack.c.h.b16 %v3759
    %v4043 = vunpack.c.l.b16 %v3760
    %v4044 = vunpack.c.h.b16 %v3760
    %v4045 = vunpack.c.l.b16 %v3761
    %v4046 = vunpack.c.h.b16 %v3761
    %v4047 = vunpack.c.l.b16 %v3762
    %v4048 = vunpack.c.h.b16 %v3762
    %v4049 = vunpack.c.l.b16 %v3763
    %v4050 = vunpack.c.h.b16 %v3763
    %v4051 = vunpack.c.l.b16 %v3764
    %v4052 = vunpack.c.h.b16 %v3764
    %v4053 = vunpack.c.l.b16 %v3765
    %v4054 = vunpack.c.h.b16 %v3765
    %v4055 = vunpack.c.l.b16 %v3766
    %v4056 = vunpack.c.h.b16 %v3766
    %v4057 = vunpack.c.l.b16 %v3767
    %v4058 = vunpack.c.h.b16 %v3767
    %v4059 = vunpack.c.l.b16 %v3768
    %v4060 = vunpack.c.h.b16 %v3768
    %v4061 = vunpack.c.l.b16 %v3769
    %v4062 = vunpack.c.h.b16 %v3769
    %v4063 = vunpack.c.l.b16 %v3770
    %v4064 = vunpack.c.h.b16 %v3770
    %v4065 = vunpack.c.l.b16 %v3771
    %v4066 = vunpack.c.h.b16 %v3771
    %v4067 = vunpack.c.l.b16 %v3772
    %v4068 = vunpack.c.h.b16 %v3772
    %v4069 = vunpack.c.l.b16 %v3773
    %v4070 = vunpack.c.h.b16 %v3773
    %v4071 = vunpack.c.l.b16 %v3774
    %v4072 = vunpack.c.h.b16 %v3774
    %v4073 = vunpack.c.l.b16 %v3775
    %v4074 = vunpack.c.h.b16 %v3775
    %v4075 = vunpack.c.l.b16 %v3776
    %v4076 = vunpack.c.h.b16 %v3776
    %v4077 = vunpack.c.l.b16 %v3777
    %v4078 = vunpack.c.h.b16 %v3777
    %v4079 = vunpack.c.l.b16 %v3778
    %v4080 = vunpack.c.h.b16 %v3778
    %v4081 = vunpack.c.l.b16 %v3779
    %v4082 = vunpack.c.h.b16 %v3779
    %v4083 = vunpack.c.l.b16 %v3780
    %v4084 = vunpack.c.h.b16 %v3780
    %v4085 = vunpack.c.l.b16 %v3781
    %v4086 = vunpack.c.h.b16 %v3781
    %v4087 = vunpack.c.l.b16 %v3782
    %v4088 = vunpack.c.h.b16 %v3782
    %v4089 = vunpack.c.l.b16 %v3783
    %v4090 = vunpack.c.h.b16 %v3783
    %v4091 = vunpack.c.l.b16 %v3784
    %v4092 = vunpack.c.h.b16 %v3784
    %v4093 = vunpack.c.l.b16 %v3785
    %v4094 = vunpack.c.h.b16 %v3785
    %v4095 = vunpack.c.l.b16 %v3786
    %v4096 = vunpack.c.h.b16 %v3786
    %v4097 = vunpack.c.l.b16 %v3787
    %v4098 = vunpack.c.h.b16 %v3787
    %v4099 = vunpack.c.l.b16 %v3788
    %v4100 = vunpack.c.h.b16 %v3788
    %v4101 = vunpack.c.l.b16 %v3789
    %v4102 = vunpack.c.h.b16 %v3789
    %v4103 = vunpack.c.l.b16 %v3790
    %v4104 = vunpack.c.h.b16 %v3790
    %v4105 = vunpack.c.l.b16 %v3791
    %v4106 = vunpack.c.h.b16 %v3791
    %v4107 = vunpack.c.l.b16 %v3792
    %v4108 = vunpack.c.h.b16 %v3792
    %v4109 = vunpack.c.l.b16 %v3793
    %v4110 = vunpack.c.h.b16 %v3793
    %v4111 = vunpack.c.l.b16 %v3794
    %v4112 = vunpack.c.h.b16 %v3794
    %v4113 = vunpack.c.l.b16 %v3795
    %v4114 = vunpack.c.h.b16 %v3795
    %v4115 = vunpack.c.l.b16 %v3796
    %v4116 = vunpack.c.h.b16 %v3796
    %v4117 = vunpack.c.l.b16 %v3797
    %v4118 = vunpack.c.h.b16 %v3797
    %v4119 = vunpack.c.l.b16 %v3798
    %v4120 = vunpack.c.h.b16 %v3798
    %v4121 = vunpack.c.l.b16 %v3799
    %v4122 = vunpack.c.h.b16 %v3799
    %v4123 = vunpack.c.l.b16 %v3800
    %v4124 = vunpack.c.h.b16 %v3800
    %v4125 = vunpack.c.l.b16 %v3801
    %v4126 = vunpack.c.h.b16 %v3801
    %v4127 = vunpack.c.l.b16 %v3802
    %v4128 = vunpack.c.h.b16 %v3802
    %v4129 = vunpack.c.l.b16 %v3803
    %v4130 = vunpack.c.h.b16 %v3803
    %v4131 = vunpack.c.l.b16 %v3804
    %v4132 = vunpack.c.h.b16 %v3804
    %v4133 = vunpack.c.l.b16 %v3805
    %v4134 = vunpack.c.h.b16 %v3805
    %v4135 = vunpack.c.l.b16 %v3806
    %v4136 = vunpack.c.h.b16 %v3806
    %v4137 = vunpack.c.l.b16 %v3807
    %v4138 = vunpack.c.h.b16 %v3807
    %v4139 = vunpack.c.l.b16 %v3808
    %v4140 = vunpack.c.h.b16 %v3808
    %v4141 = vunpack.c.l.b16 %v3809
    %v4142 = vunpack.c.h.b16 %v3809
    %v4143 = vunpack.c.l.b16 %v3810
    %v4144 = vunpack.c.h.b16 %v3810
    %v4145 = vunpack.c.l.b16 %v3811
    %v4146 = vunpack.c.h.b16 %v3811
    %v4147 = vunpack.c.l.b16 %v3812
    %v4148 = vunpack.c.h.b16 %v3812
    %v4149 = vunpack.c.l.b16 %v3813
    %v4150 = vunpack.c.h.b16 %v3813
    %v4151 = vunpack.c.l.b16 %v3814
    %v4152 = vunpack.c.h.b16 %v3814
    %v4153 = vunpack.c.l.b16 %v3815
    %v4154 = vunpack.c.h.b16 %v3815
    %v4155 = vunpack.c.l.b16 %v3816
    %v4156 = vunpack.c.h.b16 %v3816
    %v4157 = vunpack.c.l.b16 %v3817
    %v4158 = vunpack.c.h.b16 %v3817
    %v4159 = vunpack.c.l.b16 %v3818
    %v4160 = vunpack.c.h.b16 %v3818
    %v4161 = vunpack.c.l.b16 %v3819
    %v4162 = vunpack.c.h.b16 %v3819
    %v4163 = vunpack.c.l.b16 %v3820
    %v4164 = vunpack.c.h.b16 %v3820
    %v4165 = vunpack.c.l.b16 %v3821
    %v4166 = vunpack.c.h.b16 %v3821
    %v4167 = vunpack.c.l.b16 %v3822
    %v4168 = vunpack.c.h.b16 %v3822
    %v4169 = vunpack.c.l.b16 %v3823
    %v4170 = vunpack.c.h.b16 %v3823
    %v4171 = vunpack.c.l.b16 %v3824
    %v4172 = vunpack.c.h.b16 %v3824
    %v4173 = vunpack.c.l.b16 %v3825
    %v4174 = vunpack.c.h.b16 %v3825
    %v4175 = vunpack.c.l.b16 %v3826
    %v4176 = vunpack.c.h.b16 %v3826
    %v4177 = vunpack.c.l.b16 %v3827
    %v4178 = vunpack.c.h.b16 %v3827
    %v4179 = vunpack.c.l.b16 %v3828
    %v4180 = vunpack.c.h.b16 %v3828
    %v4181 = vunpack.c.l.b16 %v3829
    %v4182 = vunpack.c.h.b16 %v3829
    %v4183 = vunpack.c.l.b16 %v3830
    %v4184 = vunpack.c.h.b16 %v3830
    %v4185 = vunpack.c.l.b16 %v3831
    %v4186 = vunpack.c.h.b16 %v3831
    %v4187 = vunpack.c.l.b16 %v3832
    %v4188 = vunpack.c.h.b16 %v3832
    %v4189 = vunpack.c.l.b16 %v3833
    %v4190 = vunpack.c.h.b16 %v3833
    %v4191 = vunpack.c.l.b16 %v3834
    %v4192 = vunpack.c.h.b16 %v3834
    %v4193 = vunpack.c.l.b16 %v3835
    %v4194 = vunpack.c.h.b16 %v3835
    %v4195 = vunpack.c.l.b16 %v3836
    %v4196 = vunpack.c.h.b16 %v3836
    %v4197 = vunpack.c.l.b16 %v3837
    %v4198 = vunpack.c.h.b16 %v3837
    %v4199 = vunpack.c.l.b16 %v3838
    %v4200 = vunpack.c.h.b16 %v3838
    %v4201 = vunpack.c.l.b16 %v3839
    %v4202 = vunpack.c.h.b16 %v3839
    %v4203 = vunpack.c.l.b16 %v3840
    %v4204 = vunpack.c.h.b16 %v3840
    %v4205 = vunpack.c.l.b16 %v3841
    %v4206 = vunpack.c.h.b16 %v3841
    %v4207 = vunpack.c.l.b16 %v3842
    %v4208 = vunpack.c.h.b16 %v3842
    %v4209 = vunpack.c.l.b16 %v3843
    %v4210 = vunpack.c.h.b16 %v3843
    %v4211 = vunpack.c.l.b16 %v3844
    %v4212 = vunpack.c.h.b16 %v3844
    %v4213 = vunpack.c.l.b16 %v3845
    %v4214 = vunpack.c.h.b16 %v3845
    %v4215 = vunpack.c.l.b16 %v3846
    %v4216 = vunpack.c.h.b16 %v3846
    %v4217 = vunpack.c.l.b16 %v3847
    %v4218 = vunpack.c.h.b16 %v3847
    %v4219 = vunpack.c.l.b16 %v3848
    %v4220 = vunpack.c.h.b16 %v3848
    %v4221 = vunpack.c.l.b16 %v3849
    %v4222 = vunpack.c.h.b16 %v3849
    %v4223 = vunpack.c.l.b16 %v3850
    %v4224 = vunpack.c.h.b16 %v3850
    %v4225 = vunpack.c.l.b16 %v3851
    %v4226 = vunpack.c.h.b16 %v3851
    %v4227 = vunpack.c.l.b16 %v3852
    %v4228 = vunpack.c.h.b16 %v3852
    %v4229 = vunpack.c.l.b16 %v3853
    %v4230 = vunpack.c.h.b16 %v3853
    %v4231 = vunpack.c.l.b16 %v3854
    %v4232 = vunpack.c.h.b16 %v3854
    %v4233 = vunpack.c.l.b16 %v3855
    %v4234 = vunpack.c.h.b16 %v3855
    %v4235 = vunpack.c.l.b16 %v3856
    %v4236 = vunpack.c.h.b16 %v3856
    %v4237 = vunpack.c.l.b16 %v3857
    %v4238 = vunpack.c.h.b16 %v3857
    %v4239 = vunpack.c.l.b16 %v3858
    %v4240 = vunpack.c.h.b16 %v3858
    %v4241 = vunpack.c.l.b16 %v3859
    %v4242 = vunpack.c.h.b16 %v3859
    %v4243 = vunpack.c.l.b16 %v3860
    %v4244 = vunpack.c.h.b16 %v3860
    %v4245 = vunpack.c.l.b16 %v3861
    %v4246 = vunpack.c.h.b16 %v3861
    %v4247 = vunpack.c.l.b16 %v3862
    %v4248 = vunpack.c.h.b16 %v3862
    %v4249 = vunpack.c.l.b16 %v3863
    %v4250 = vunpack.c.h.b16 %v3863
    %v4251 = vunpack.c.l.b16 %v3864
    %v4252 = vunpack.c.h.b16 %v3864
    %v4253 = vunpack.c.l.b16 %v3865
    %v4254 = vunpack.c.h.b16 %v3865
    %v4255 = vunpack.c.l.b16 %v3866
    %v4256 = vunpack.c.h.b16 %v3866
    %v4257 = vunpack.c.l.b16 %v3867
    %v4258 = vunpack.c.h.b16 %v3867
    %v4259 = vunpack.c.l.b16 %v3868
    %v4260 = vunpack.c.h.b16 %v3868
    %v4261 = vunpack.c.l.b16 %v3869
    %v4262 = vunpack.c.h.b16 %v3869
    %v4263 = vunpack.c.l.b16 %v3870
    %v4264 = vunpack.c.h.b16 %v3870
    %v4265 = vunpack.c.l.b16 %v3871
    %v4266 = vunpack.c.h.b16 %v3871
    %v4267 = vunpack.c.l.b16 %v3872
    %v4268 = vunpack.c.h.b16 %v3872
    %v4269 = vunpack.c.l.b16 %v3873
    %v4270 = vunpack.c.h.b16 %v3873
    %v4271 = vunpack.c.l.b16 %v3874
    %v4272 = vunpack.c.h.b16 %v3874
    %v4273 = vunpack.c.l.b16 %v3875
    %v4274 = vunpack.c.h.b16 %v3875
    %v4275 = vunpack.c.l.b16 %v3876
    %v4276 = vunpack.c.h.b16 %v3876
    %v4277 = vunpack.c.l.b16 %v3877
    %v4278 = vunpack.c.h.b16 %v3877
    %v4279 = vunpack.c.l.b16 %v3878
    %v4280 = vunpack.c.h.b16 %v3878
    %v4281 = vunpack.c.l.b16 %v3879
    %v4282 = vunpack.c.h.b16 %v3879
    %v4283 = vunpack.c.l.b16 %v3880
    %v4284 = vunpack.c.h.b16 %v3880
    %v4285 = vunpack.c.l.b16 %v3881
    %v4286 = vunpack.c.h.b16 %v3881
    %v4287 = vunpack.c.l.b16 %v3882
    %v4288 = vunpack.c.h.b16 %v3882
    %v4289 = vpack.c.b16 %v4037, %v4033
    %v4290 = vpack.c.b16 %v4038, %v4034
    %v4291 = vpack.c.b16 %v4039, %v4035
    %v4292 = vpack.c.b16 %v4040, %v4036
    %v4293 = vpack.c.b16 %v4045, %v4041
    %v4294 = vpack.c.b16 %v4046, %v4042
    %v4295 = vpack.c.b16 %v4047, %v4043
    %v4296 = vpack.c.b16 %v4048, %v4044
    %v4297 = vpack.c.b16 %v4053, %v4049
    %v4298 = vpack.c.b16 %v4054, %v4050
    %v4299 = vpack.c.b16 %v4055, %v4051
    %v4300 = vpack.c.b16 %v4056, %v4052
    %v4301 = vpack.c.b16 %v4061, %v4057
    %v4302 = vpack.c.b16 %v4062, %v4058
    %v4303 = vpack.c.b16 %v4063, %v4059
    %v4304 = vpack.c.b16 %v4064, %v4060
    %v4305 = vpack.c.b16 %v4069, %v4065
    %v4306 = vpack.c.b16 %v4070, %v4066
    %v4307 = vpack.c.b16 %v4071, %v4067
    %v4308 = vpack.c.b16 %v4072, %v4068
    %v4309 = vpack.c.b16 %v4077, %v4073
    %v4310 = vpack.c.b16 %v4078, %v4074
    %v4311 = vpack.c.b16 %v4079, %v4075
    %v4312 = vpack.c.b16 %v4080, %v4076
    %v4313 = vpack.c.b16 %v4085, %v4081
    %v4314 = vpack.c.b16 %v4086, %v4082
    %v4315 = vpack.c.b16 %v4087, %v4083
    %v4316 = vpack.c.b16 %v4088, %v4084
    %v4317 = vpack.c.b16 %v4093, %v4089
    %v4318 = vpack.c.b16 %v4094, %v4090
    %v4319 = vpack.c.b16 %v4095, %v4091
    %v4320 = vpack.c.b16 %v4096, %v4092
    %v4321 = vpack.c.b16 %v4101, %v4097
    %v4322 = vpack.c.b16 %v4102, %v4098
    %v4323 = vpack.c.b16 %v4103, %v4099
    %v4324 = vpack.c.b16 %v4104, %v4100
    %v4325 = vpack.c.b16 %v4109, %v4105
    %v4326 = vpack.c.b16 %v4110, %v4106
    %v4327 = vpack.c.b16 %v4111, %v4107
    %v4328 = vpack.c.b16 %v4112, %v4108
    %v4329 = vpack.c.b16 %v4117, %v4113
    %v4330 = vpack.c.b16 %v4118, %v4114
    %v4331 = vpack.c.b16 %v4119, %v4115
    %v4332 = vpack.c.b16 %v4120, %v4116
    %v4333 = vpack.c.b16 %v4125, %v4121
    %v4334 = vpack.c.b16 %v4126, %v4122
    %v4335 = vpack.c.b16 %v4127, %v4123
    %v4336 = vpack.c.b16 %v4128, %v4124
    %v4337 = vpack.c.b16 %v4133, %v4129
    %v4338 = vpack.c.b16 %v4134, %v4130
    %v4339 = vpack.c.b16 %v4135, %v4131
    %v4340 = vpack.c.b16 %v4136, %v4132
    %v4341 = vpack.c.b16 %v4141, %v4137
    %v4342 = vpack.c.b16 %v4142, %v4138
    %v4343 = vpack.c.b16 %v4143, %v4139
    %v4344 = vpack.c.b16 %v4144, %v4140
    %v4345 = vpack.c.b16 %v4149, %v4145
    %v4346 = vpack.c.b16 %v4150, %v4146
    %v4347 = vpack.c.b16 %v4151, %v4147
    %v4348 = vpack.c.b16 %v4152, %v4148
    %v4349 = vpack.c.b16 %v4157, %v4153
    %v4350 = vpack.c.b16 %v4158, %v4154
    %v4351 = vpack.c.b16 %v4159, %v4155
    %v4352 = vpack.c.b16 %v4160, %v4156
    %v4353 = vpack.c.b16 %v4165, %v4161
    %v4354 = vpack.c.b16 %v4166, %v4162
    %v4355 = vpack.c.b16 %v4167, %v4163
    %v4356 = vpack.c.b16 %v4168, %v4164
    %v4357 = vpack.c.b16 %v4173, %v4169
    %v4358 = vpack.c.b16 %v4174, %v4170
    %v4359 = vpack.c.b16 %v4175, %v4171
    %v4360 = vpack.c.b16 %v4176, %v4172
    %v4361 = vpack.c.b16 %v4181, %v4177
    %v4362 = vpack.c.b16 %v4182, %v4178
    %v4363 = vpack.c.b16 %v4183, %v4179
    %v4364 = vpack.c.b16 %v4184, %v4180
    %v4365 = vpack.c.b16 %v4189, %v4185
    %v4366 = vpack.c.b16 %v4190, %v4186
    %v4367 = vpack.c.b16 %v4191, %v4187
    %v4368 = vpack.c.b16 %v4192, %v4188
    %v4369 = vpack.c.b16 %v4197, %v4193
    %v4370 = vpack.c.b16 %v4198, %v4194
    %v4371 = vpack.c.b16 %v4199, %v4195
    %v4372 = vpack.c.b16 %v4200, %v4196
    %v4373 = vpack.c.b16 %v4205, %v4201
    %v4374 = vpack.c.b16 %v4206, %v4202
    %v4375 = vpack.c.b16 %v4207, %v4203
    %v4376 = vpack.c.b16 %v4208, %v4204
    %v4377 = vpack.c.b16 %v4213, %v4209
    %v4378 = vpack.c.b16 %v4214, %v4210
    %v4379 = vpack.c.b16 %v4215, %v4211
    %v4380 = vpack.c.b16 %v4216, %v4212
    %v4381 = vpack.c.b16 %v4221, %v4217
    %v4382 = vpack.c.b16 %v4222, %v4218
    %v4383 = vpack.c.b16 %v4223, %v4219
    %v4384 = vpack.c.b16 %v4224, %v4220
    %v4385 = vpack.c.b16 %v4229, %v4225
    %v4386 = vpack.c.b16 %v4230, %v4226
    %v4387 = vpack.c.b16 %v4231, %v4227
    %v4388 = vpack.c.b16 %v4232, %v4228
    %v4389 = vpack.c.b16 %v4237, %v4233
    %v4390 = vpack.c.b16 %v4238, %v4234
    %v4391 = vpack.c.b16 %v4239, %v4235
    %v4392 = vpack.c.b16 %v4240, %v4236
    %v4393 = vpack.c.b16 %v4245, %v4241
    %v4394 = vpack.c.b16 %v4246, %v4242
    %v4395 = vpack.c.b16 %v4247, %v4243
    %v4396 = vpack.c.b16 %v4248, %v4244
    %v4397 = vpack.c.b16 %v4253, %v4249
    %v4398 = vpack.c.b16 %v4254, %v4250
    %v4399 = vpack.c.b16 %v4255, %v4251
    %v4400 = vpack.c.b16 %v4256, %v4252
    %v4401 = vpack.c.b16 %v4261, %v4257
    %v4402 = vpack.c.b16 %v4262, %v4258
    %v4403 = vpack.c.b16 %v4263, %v4259
    %v4404 = vpack.c.b16 %v4264, %v4260
    %v4405 = vpack.c.b16 %v4269, %v4265
    %v4406 = vpack.c.b16 %v4270, %v4266
    %v4407 = vpack.c.b16 %v4271, %v4267
    %v4408 = vpack.c.b16 %v4272, %v4268
    %v4409 = vpack.c.b16 %v4277, %v4273
    %v4410 = vpack.c.b16 %v4278, %v4274
    %v4411 = vpack.c.b16 %v4279, %v4275
    %v4412 = vpack.c.b16 %v4280, %v4276
    %v4413 = vpack.c.b16 %v4285, %v4281
    %v4414 = vpack.c.b16 %v4286, %v4282
    %v4415 = vpack.c.b16 %v4287, %v4283
    %v4416 = vpack.c.b16 %v4288, %v4284
    %4545 = vmatprep.subr.bf16.mxu0 %v4290
    %4546 = vmatpush1.bf16.msra.mxu0 %v4289
    %4547 = vmatprep.subr.bf16.mxu0 %v4294
    %4548 = vmatpush1.bf16.msra.mxu0 %v4293
    %4549 = vmatprep.subr.bf16.mxu0 %v4298
    %4550 = vmatpush1.bf16.msra.mxu0 %v4297
    %4551 = vmatprep.subr.bf16.mxu0 %v4302
    %4552 = vmatpush1.bf16.msra.mxu0 %v4301
    %4553 = vmatprep.subr.bf16.mxu0 %v4306
    %4554 = vmatpush1.bf16.msra.mxu0 %v4305
    %4555 = vmatprep.subr.bf16.mxu0 %v4310
    %4556 = vmatpush1.bf16.msra.mxu0 %v4309
    %4557 = vmatprep.subr.bf16.mxu0 %v4314
    %4558 = vmatpush1.bf16.msra.mxu0 %v4313
    %4559 = vmatprep.subr.bf16.mxu0 %v4318
    %4560 = vmatpush1.bf16.msra.mxu0 %v4317
    %4561 = vmatprep.subr.bf16.mxu0 %v4322
    %4562 = vmatpush1.bf16.msra.mxu0 %v4321
    %4563 = vmatprep.subr.bf16.mxu0 %v4326
    %4564 = vmatpush1.bf16.msra.mxu0 %v4325
    %4565 = vmatprep.subr.bf16.mxu0 %v4330
    %4566 = vmatpush1.bf16.msra.mxu0 %v4329
    %4567 = vmatprep.subr.bf16.mxu0 %v4334
    %4568 = vmatpush1.bf16.msra.mxu0 %v4333
    %4569 = vmatprep.subr.bf16.mxu0 %v4338
    %4570 = vmatpush1.bf16.msra.mxu0 %v4337
    %4571 = vmatprep.subr.bf16.mxu0 %v4342
    %4572 = vmatpush1.bf16.msra.mxu0 %v4341
    %4573 = vmatprep.subr.bf16.mxu0 %v4346
    %4574 = vmatpush1.bf16.msra.mxu0 %v4345
    %4575 = vmatprep.subr.bf16.mxu0 %v4350
    %4576 = vmatpush1.bf16.msra.mxu0 %v4349
    %4577 = vmatprep.mubr.bf16.mxu0 %v3752
    %4578 = vmatmul.mubr.bf16.gmra.mrb[0].mxu0 %v3751
    %v4579 = vpop.f32.mrb[0].mxu0
    %v4580 = vadd.f32 %v3888, %v4579
    %v4581 = vpop.f32.mrb[0].mxu0
    %v4582 = vadd.f32 %v3892, %v4581
    %v4583 = vpop.f32.mrb[0].mxu0
    %v4584 = vpop.f32.mrb[0].mxu0
    %4585 = vdwg.mxu0
    %4586 = vmatprep.subr.bf16.mxu0 %v4354
    %4587 = vmatpush1.bf16.msra.mxu0 %v4353
    %4588 = vmatprep.subr.bf16.mxu0 %v4358
    %4589 = vmatpush1.bf16.msra.mxu0 %v4357
    %4590 = vmatprep.subr.bf16.mxu0 %v4362
    %4591 = vmatpush1.bf16.msra.mxu0 %v4361
    %4592 = vmatprep.subr.bf16.mxu0 %v4366
    %4593 = vmatpush1.bf16.msra.mxu0 %v4365
    %4594 = vmatprep.subr.bf16.mxu0 %v4370
    %4595 = vmatpush1.bf16.msra.mxu0 %v4369
    %4596 = vmatprep.subr.bf16.mxu0 %v4374
    %4597 = vmatpush1.bf16.msra.mxu0 %v4373
    %4598 = vmatprep.subr.bf16.mxu0 %v4378
    %4599 = vmatpush1.bf16.msra.mxu0 %v4377
    %4600 = vmatprep.subr.bf16.mxu0 %v4382
    %4601 = vmatpush1.bf16.msra.mxu0 %v4381
    %4602 = vmatprep.subr.bf16.mxu0 %v4386
    %4603 = vmatpush1.bf16.msra.mxu0 %v4385
    %4604 = vmatprep.subr.bf16.mxu0 %v4390
    %4605 = vmatpush1.bf16.msra.mxu0 %v4389
    %4606 = vmatprep.subr.bf16.mxu0 %v4394
    %4607 = vmatpush1.bf16.msra.mxu0 %v4393
    %4608 = vmatprep.subr.bf16.mxu0 %v4398
    %4609 = vmatpush1.bf16.msra.mxu0 %v4397
    %4610 = vmatprep.subr.bf16.mxu0 %v4402
    %4611 = vmatpush1.bf16.msra.mxu0 %v4401
    %4612 = vmatprep.subr.bf16.mxu0 %v4406
    %4613 = vmatpush1.bf16.msra.mxu0 %v4405
    %4614 = vmatprep.subr.bf16.mxu0 %v4410
    %4615 = vmatpush1.bf16.msra.mxu0 %v4409
    %4616 = vmatprep.subr.bf16.mxu0 %v4414
    %4617 = vmatpush1.bf16.msra.mxu0 %v4413
    %4618 = vmatprep.mubr.bf16.mxu0 %v3754
    %4619 = vmatmul.mubr.bf16.gmra.mrb[0].mxu0 %v3753
    %v4620 = vpop.f32.mrb[0].mxu0
    %v4621 = vadd.f32 %v4580, %v4620
    %v4622 = vpop.f32.mrb[0].mxu0
    %v4623 = vadd.f32 %v4582, %v4622
    %v4624 = vpop.f32.mrb[0].mxu0
    %v4625 = vpop.f32.mrb[0].mxu0
    %4626 = vdwg.mxu0
    %4627 = vmatprep.subr.bf16.mxu0 %v4292
    %4628 = vmatpush1.bf16.msra.mxu0 %v4291
    %4629 = vmatprep.subr.bf16.mxu0 %v4296
    %4630 = vmatpush1.bf16.msra.mxu0 %v4295
    %4631 = vmatprep.subr.bf16.mxu0 %v4300
    %4632 = vmatpush1.bf16.msra.mxu0 %v4299
    %4633 = vmatprep.subr.bf16.mxu0 %v4304
    %4634 = vmatpush1.bf16.msra.mxu0 %v4303
    %4635 = vmatprep.subr.bf16.mxu0 %v4308
    %4636 = vmatpush1.bf16.msra.mxu0 %v4307
    %4637 = vmatprep.subr.bf16.mxu0 %v4312
    %4638 = vmatpush1.bf16.msra.mxu0 %v4311
    %4639 = vmatprep.subr.bf16.mxu0 %v4316
    %4640 = vmatpush1.bf16.msra.mxu0 %v4315
    %4641 = vmatprep.subr.bf16.mxu0 %v4320
    %4642 = vmatpush1.bf16.msra.mxu0 %v4319
    %4643 = vmatprep.subr.bf16.mxu0 %v4324
    %4644 = vmatpush1.bf16.msra.mxu0 %v4323
    %4645 = vmatprep.subr.bf16.mxu0 %v4328
    %4646 = vmatpush1.bf16.msra.mxu0 %v4327
    %4647 = vmatprep.subr.bf16.mxu0 %v4332
    %4648 = vmatpush1.bf16.msra.mxu0 %v4331
    %4649 = vmatprep.subr.bf16.mxu0 %v4336
    %4650 = vmatpush1.bf16.msra.mxu0 %v4335
    %4651 = vmatprep.subr.bf16.mxu0 %v4340
    %4652 = vmatpush1.bf16.msra.mxu0 %v4339
    %4653 = vmatprep.subr.bf16.mxu0 %v4344
    %4654 = vmatpush1.bf16.msra.mxu0 %v4343
    %4655 = vmatprep.subr.bf16.mxu0 %v4348
    %4656 = vmatpush1.bf16.msra.mxu0 %v4347
    %4657 = vmatprep.subr.bf16.mxu0 %v4352
    %4658 = vmatpush1.bf16.msra.mxu0 %v4351
    %4659 = vmatprep.mubr.bf16.mxu0 %v3752
    %4660 = vmatmul.mubr.bf16.gmra.mrb[0].mxu0 %v3751
    %v4661 = vpop.f32.mrb[0].mxu0
    %v4662 = vadd.f32 %v3896, %v4661
    %v4663 = vpop.f32.mrb[0].mxu0
    %v4664 = vadd.f32 %v3900, %v4663
    %v4665 = vpop.f32.mrb[0].mxu0
    %v4666 = vpop.f32.mrb[0].mxu0
    %4667 = vdwg.mxu0
    %4668 = vmatprep.subr.bf16.mxu0 %v4356
    %4669 = vmatpush1.bf16.msra.mxu0 %v4355
    %4670 = vmatprep.subr.bf16.mxu0 %v4360
    %4671 = vmatpush1.bf16.msra.mxu0 %v4359
    %4672 = vmatprep.subr.bf16.mxu0 %v4364
    %4673 = vmatpush1.bf16.msra.mxu0 %v4363
    %4674 = vmatprep.subr.bf16.mxu0 %v4368
    %4675 = vmatpush1.bf16.msra.mxu0 %v4367
    %4676 = vmatprep.subr.bf16.mxu0 %v4372
    %4677 = vmatpush1.bf16.msra.mxu0 %v4371
    %4678 = vmatprep.subr.bf16.mxu0 %v4376
    %4679 = vmatpush1.bf16.msra.mxu0 %v4375
    %4680 = vmatprep.subr.bf16.mxu0 %v4380
    %4681 = vmatpush1.bf16.msra.mxu0 %v4379
    %4682 = vmatprep.subr.bf16.mxu0 %v4384
    %4683 = vmatpush1.bf16.msra.mxu0 %v4383
    %4684 = vmatprep.subr.bf16.mxu0 %v4388
    %4685 = vmatpush1.bf16.msra.mxu0 %v4387
    %4686 = vmatprep.subr.bf16.mxu0 %v4392
    %4687 = vmatpush1.bf16.msra.mxu0 %v4391
    %4688 = vmatprep.subr.bf16.mxu0 %v4396
    %4689 = vmatpush1.bf16.msra.mxu0 %v4395
    %4690 = vmatprep.subr.bf16.mxu0 %v4400
    %4691 = vmatpush1.bf16.msra.mxu0 %v4399
    %4692 = vmatprep.subr.bf16.mxu0 %v4404
    %4693 = vmatpush1.bf16.msra.mxu0 %v4403
    %4694 = vmatprep.subr.bf16.mxu0 %v4408
    %4695 = vmatpush1.bf16.msra.mxu0 %v4407
    %4696 = vmatprep.subr.bf16.mxu0 %v4412
    %4697 = vmatpush1.bf16.msra.mxu0 %v4411
    %4698 = vmatprep.subr.bf16.mxu0 %v4416
    %4699 = vmatpush1.bf16.msra.mxu0 %v4415
    %4700 = vmatprep.mubr.bf16.mxu0 %v3754
    %4701 = vmatmul.mubr.bf16.gmra.mrb[0].mxu0 %v3753
    %v4702 = vpop.f32.mrb[0].mxu0
    %v4703 = vadd.f32 %v4662, %v4702
    %v4704 = vpop.f32.mrb[0].mxu0
    %v4705 = vadd.f32 %v4664, %v4704
    %v4706 = vpop.f32.mrb[0].mxu0
    %v4707 = vpop.f32.mrb[0].mxu0
    %4708 = vdwg.mxu0
    %v4709 = vmax.f32 %v4621, 0.0
    %v4710 = vmax.f32 %v4623, 0.0
    %v4711 = vmax.f32 %v4703, 0.0
    %v4712 = vmax.f32 %v4705, 0.0
    %v4713 = vpack.c.bf16 %v4709, %v4709
    %v4714 = vpack.c.bf16 %v4710, %v4710
    %v4715 = vpack.c.bf16 %v4711, %v4711
    %v4716 = vpack.c.bf16 %v4712, %v4712
    %v4717 = vld [vmem:[%s5] sm:$0xff]
    %v4718 = vld [vmem:[%s5 + $0x8] sm:$0xff]
    %v4719 = vld [vmem:[%s5 + $0x10] sm:$0xff]
    %v4720 = vld [vmem:[%s5 + $0x18] sm:$0xff]
    %v4721 = vld [vmem:[%s5 + $0x20] sm:$0xff]
    %v4722 = vld [vmem:[%s5 + $0x28] sm:$0xff]
    %v4723 = vld [vmem:[%s5 + $0x30] sm:$0xff]
    %v4724 = vld [vmem:[%s5 + $0x38] sm:$0xff]
    %v4725 = vld [vmem:[%s5 + $0x40] sm:$0xff]
    %v4726 = vld [vmem:[%s5 + $0x48] sm:$0xff]
    %v4727 = vld [vmem:[%s5 + $0x50] sm:$0xff]
    %v4728 = vld [vmem:[%s5 + $0x58] sm:$0xff]
    %v4729 = vld [vmem:[%s5 + $0x60] sm:$0xff]
    %v4730 = vld [vmem:[%s5 + $0x68] sm:$0xff]
    %v4731 = vld [vmem:[%s5 + $0x70] sm:$0xff]
    %v4732 = vld [vmem:[%s5 + $0x78] sm:$0xff]
    %v4733 = vld [vmem:[%s5 + $0x80] sm:$0xff]
    %v4734 = vld [vmem:[%s5 + $0x88] sm:$0xff]
    %v4735 = vld [vmem:[%s5 + $0x90] sm:$0xff]
    %v4736 = vld [vmem:[%s5 + $0x98] sm:$0xff]
    %v4737 = vld [vmem:[%s5 + $0xa0] sm:$0xff]
    %v4738 = vld [vmem:[%s5 + $0xa8] sm:$0xff]
    %v4739 = vld [vmem:[%s5 + $0xb0] sm:$0xff]
    %v4740 = vld [vmem:[%s5 + $0xb8] sm:$0xff]
    %v4741 = vld [vmem:[%s5 + $0xc0] sm:$0xff]
    %v4742 = vld [vmem:[%s5 + $0xc8] sm:$0xff]
    %v4743 = vld [vmem:[%s5 + $0xd0] sm:$0xff]
    %v4744 = vld [vmem:[%s5 + $0xd8] sm:$0xff]
    %v4745 = vld [vmem:[%s5 + $0xe0] sm:$0xff]
    %v4746 = vld [vmem:[%s5 + $0xe8] sm:$0xff]
    %v4747 = vld [vmem:[%s5 + $0xf0] sm:$0xff]
    %v4748 = vld [vmem:[%s5 + $0xf8] sm:$0xff]
    %v4749 = vld [vmem:[%s5 + $0x100] sm:$0xff]
    %v4750 = vld [vmem:[%s5 + $0x108] sm:$0xff]
    %v4751 = vld [vmem:[%s5 + $0x110] sm:$0xff]
    %v4752 = vld [vmem:[%s5 + $0x118] sm:$0xff]
    %v4753 = vld [vmem:[%s5 + $0x120] sm:$0xff]
    %v4754 = vld [vmem:[%s5 + $0x128] sm:$0xff]
    %v4755 = vld [vmem:[%s5 + $0x130] sm:$0xff]
    %v4756 = vld [vmem:[%s5 + $0x138] sm:$0xff]
    %v4757 = vld [vmem:[%s5 + $0x140] sm:$0xff]
    %v4758 = vld [vmem:[%s5 + $0x148] sm:$0xff]
    %v4759 = vld [vmem:[%s5 + $0x150] sm:$0xff]
    %v4760 = vld [vmem:[%s5 + $0x158] sm:$0xff]
    %v4761 = vld [vmem:[%s5 + $0x160] sm:$0xff]
    %v4762 = vld [vmem:[%s5 + $0x168] sm:$0xff]
    %v4763 = vld [vmem:[%s5 + $0x170] sm:$0xff]
    %v4764 = vld [vmem:[%s5 + $0x178] sm:$0xff]
    %v4765 = vld [vmem:[%s5 + $0x180] sm:$0xff]
    %v4766 = vld [vmem:[%s5 + $0x188] sm:$0xff]
    %v4767 = vld [vmem:[%s5 + $0x190] sm:$0xff]
    %v4768 = vld [vmem:[%s5 + $0x198] sm:$0xff]
    %v4769 = vld [vmem:[%s5 + $0x1a0] sm:$0xff]
    %v4770 = vld [vmem:[%s5 + $0x1a8] sm:$0xff]
    %v4771 = vld [vmem:[%s5 + $0x1b0] sm:$0xff]
    %v4772 = vld [vmem:[%s5 + $0x1b8] sm:$0xff]
    %v4773 = vld [vmem:[%s5 + $0x1c0] sm:$0xff]
    %v4774 = vld [vmem:[%s5 + $0x1c8] sm:$0xff]
    %v4775 = vld [vmem:[%s5 + $0x1d0] sm:$0xff]
    %v4776 = vld [vmem:[%s5 + $0x1d8] sm:$0xff]
    %v4777 = vld [vmem:[%s5 + $0x1e0] sm:$0xff]
    %v4778 = vld [vmem:[%s5 + $0x1e8] sm:$0xff]
    %v4779 = vld [vmem:[%s5 + $0x1f0] sm:$0xff]
    %v4780 = vld [vmem:[%s5 + $0x1f8] sm:$0xff]
    %v4781 = vld [vmem:[%s5 + $0x200] sm:$0xff]
    %v4782 = vld [vmem:[%s5 + $0x208] sm:$0xff]
    %v4783 = vld [vmem:[%s5 + $0x210] sm:$0xff]
    %v4784 = vld [vmem:[%s5 + $0x218] sm:$0xff]
    %v4785 = vld [vmem:[%s5 + $0x220] sm:$0xff]
    %v4786 = vld [vmem:[%s5 + $0x228] sm:$0xff]
    %v4787 = vld [vmem:[%s5 + $0x230] sm:$0xff]
    %v4788 = vld [vmem:[%s5 + $0x238] sm:$0xff]
    %v4789 = vld [vmem:[%s5 + $0x240] sm:$0xff]
    %v4790 = vld [vmem:[%s5 + $0x248] sm:$0xff]
    %v4791 = vld [vmem:[%s5 + $0x250] sm:$0xff]
    %v4792 = vld [vmem:[%s5 + $0x258] sm:$0xff]
    %v4793 = vld [vmem:[%s5 + $0x260] sm:$0xff]
    %v4794 = vld [vmem:[%s5 + $0x268] sm:$0xff]
    %v4795 = vld [vmem:[%s5 + $0x270] sm:$0xff]
    %v4796 = vld [vmem:[%s5 + $0x278] sm:$0xff]
    %v4797 = vld [vmem:[%s5 + $0x280] sm:$0xff]
    %v4798 = vld [vmem:[%s5 + $0x288] sm:$0xff]
    %v4799 = vld [vmem:[%s5 + $0x290] sm:$0xff]
    %v4800 = vld [vmem:[%s5 + $0x298] sm:$0xff]
    %v4801 = vld [vmem:[%s5 + $0x2a0] sm:$0xff]
    %v4802 = vld [vmem:[%s5 + $0x2a8] sm:$0xff]
    %v4803 = vld [vmem:[%s5 + $0x2b0] sm:$0xff]
    %v4804 = vld [vmem:[%s5 + $0x2b8] sm:$0xff]
    %v4805 = vld [vmem:[%s5 + $0x2c0] sm:$0xff]
    %v4806 = vld [vmem:[%s5 + $0x2c8] sm:$0xff]
    %v4807 = vld [vmem:[%s5 + $0x2d0] sm:$0xff]
    %v4808 = vld [vmem:[%s5 + $0x2d8] sm:$0xff]
    %v4809 = vld [vmem:[%s5 + $0x2e0] sm:$0xff]
    %v4810 = vld [vmem:[%s5 + $0x2e8] sm:$0xff]
    %v4811 = vld [vmem:[%s5 + $0x2f0] sm:$0xff]
    %v4812 = vld [vmem:[%s5 + $0x2f8] sm:$0xff]
    %v4813 = vld [vmem:[%s5 + $0x300] sm:$0xff]
    %v4814 = vld [vmem:[%s5 + $0x308] sm:$0xff]
    %v4815 = vld [vmem:[%s5 + $0x310] sm:$0xff]
    %v4816 = vld [vmem:[%s5 + $0x318] sm:$0xff]
    %v4817 = vld [vmem:[%s5 + $0x320] sm:$0xff]
    %v4818 = vld [vmem:[%s5 + $0x328] sm:$0xff]
    %v4819 = vld [vmem:[%s5 + $0x330] sm:$0xff]
    %v4820 = vld [vmem:[%s5 + $0x338] sm:$0xff]
    %v4821 = vld [vmem:[%s5 + $0x340] sm:$0xff]
    %v4822 = vld [vmem:[%s5 + $0x348] sm:$0xff]
    %v4823 = vld [vmem:[%s5 + $0x350] sm:$0xff]
    %v4824 = vld [vmem:[%s5 + $0x358] sm:$0xff]
    %v4825 = vld [vmem:[%s5 + $0x360] sm:$0xff]
    %v4826 = vld [vmem:[%s5 + $0x368] sm:$0xff]
    %v4827 = vld [vmem:[%s5 + $0x370] sm:$0xff]
    %v4828 = vld [vmem:[%s5 + $0x378] sm:$0xff]
    %v4829 = vld [vmem:[%s5 + $0x380] sm:$0xff]
    %v4830 = vld [vmem:[%s5 + $0x388] sm:$0xff]
    %v4831 = vld [vmem:[%s5 + $0x390] sm:$0xff]
    %v4832 = vld [vmem:[%s5 + $0x398] sm:$0xff]
    %v4833 = vld [vmem:[%s5 + $0x3a0] sm:$0xff]
    %v4834 = vld [vmem:[%s5 + $0x3a8] sm:$0xff]
    %v4835 = vld [vmem:[%s5 + $0x3b0] sm:$0xff]
    %v4836 = vld [vmem:[%s5 + $0x3b8] sm:$0xff]
    %v4837 = vld [vmem:[%s5 + $0x3c0] sm:$0xff]
    %v4838 = vld [vmem:[%s5 + $0x3c8] sm:$0xff]
    %v4839 = vld [vmem:[%s5 + $0x3d0] sm:$0xff]
    %v4840 = vld [vmem:[%s5 + $0x3d8] sm:$0xff]
    %v4841 = vld [vmem:[%s5 + $0x3e0] sm:$0xff]
    %v4842 = vld [vmem:[%s5 + $0x3e8] sm:$0xff]
    %v4843 = vld [vmem:[%s5 + $0x3f0] sm:$0xff]
    %v4844 = vld [vmem:[%s5 + $0x3f8] sm:$0xff]
    %v4845 = vld [vmem:[%s6] sm:$0xf]
    %v4847 = vlaneseq
    %v4848 = vshrl.u32 %v4847, 7
    %v4849 = vsub.s32 0, %v4848
    %v4850 = vrot.slane %v4845, %v4849
    %v4851 = vlaneseq
    %v4852 = vshrl.u32 %v4851, 7
    %v4853 = vsub.s32 1, %v4852
    %v4854 = vrot.slane %v4845, %v4853
    %v4855 = vlaneseq
    %v4856 = vshrl.u32 %v4855, 7
    %v4857 = vsub.s32 2, %v4856
    %v4858 = vrot.slane %v4845, %v4857
    %v4859 = vlaneseq
    %v4860 = vshrl.u32 %v4859, 7
    %v4861 = vsub.s32 3, %v4860
    %v4862 = vrot.slane %v4845, %v4861
    %v4995 = vunpack.c.l.b16 %v4717
    %v4996 = vunpack.c.h.b16 %v4717
    %v4997 = vunpack.c.l.b16 %v4718
    %v4998 = vunpack.c.h.b16 %v4718
    %v4999 = vunpack.c.l.b16 %v4719
    %v5000 = vunpack.c.h.b16 %v4719
    %v5001 = vunpack.c.l.b16 %v4720
    %v5002 = vunpack.c.h.b16 %v4720
    %v5003 = vunpack.c.l.b16 %v4721
    %v5004 = vunpack.c.h.b16 %v4721
    %v5005 = vunpack.c.l.b16 %v4722
    %v5006 = vunpack.c.h.b16 %v4722
    %v5007 = vunpack.c.l.b16 %v4723
    %v5008 = vunpack.c.h.b16 %v4723
    %v5009 = vunpack.c.l.b16 %v4724
    %v5010 = vunpack.c.h.b16 %v4724
    %v5011 = vunpack.c.l.b16 %v4725
    %v5012 = vunpack.c.h.b16 %v4725
    %v5013 = vunpack.c.l.b16 %v4726
    %v5014 = vunpack.c.h.b16 %v4726
    %v5015 = vunpack.c.l.b16 %v4727
    %v5016 = vunpack.c.h.b16 %v4727
    %v5017 = vunpack.c.l.b16 %v4728
    %v5018 = vunpack.c.h.b16 %v4728
    %v5019 = vunpack.c.l.b16 %v4729
    %v5020 = vunpack.c.h.b16 %v4729
    %v5021 = vunpack.c.l.b16 %v4730
    %v5022 = vunpack.c.h.b16 %v4730
    %v5023 = vunpack.c.l.b16 %v4731
    %v5024 = vunpack.c.h.b16 %v4731
    %v5025 = vunpack.c.l.b16 %v4732
    %v5026 = vunpack.c.h.b16 %v4732
    %v5027 = vunpack.c.l.b16 %v4733
    %v5028 = vunpack.c.h.b16 %v4733
    %v5029 = vunpack.c.l.b16 %v4734
    %v5030 = vunpack.c.h.b16 %v4734
    %v5031 = vunpack.c.l.b16 %v4735
    %v5032 = vunpack.c.h.b16 %v4735
    %v5033 = vunpack.c.l.b16 %v4736
    %v5034 = vunpack.c.h.b16 %v4736
    %v5035 = vunpack.c.l.b16 %v4737
    %v5036 = vunpack.c.h.b16 %v4737
    %v5037 = vunpack.c.l.b16 %v4738
    %v5038 = vunpack.c.h.b16 %v4738
    %v5039 = vunpack.c.l.b16 %v4739
    %v5040 = vunpack.c.h.b16 %v4739
    %v5041 = vunpack.c.l.b16 %v4740
    %v5042 = vunpack.c.h.b16 %v4740
    %v5043 = vunpack.c.l.b16 %v4741
    %v5044 = vunpack.c.h.b16 %v4741
    %v5045 = vunpack.c.l.b16 %v4742
    %v5046 = vunpack.c.h.b16 %v4742
    %v5047 = vunpack.c.l.b16 %v4743
    %v5048 = vunpack.c.h.b16 %v4743
    %v5049 = vunpack.c.l.b16 %v4744
    %v5050 = vunpack.c.h.b16 %v4744
    %v5051 = vunpack.c.l.b16 %v4745
    %v5052 = vunpack.c.h.b16 %v4745
    %v5053 = vunpack.c.l.b16 %v4746
    %v5054 = vunpack.c.h.b16 %v4746
    %v5055 = vunpack.c.l.b16 %v4747
    %v5056 = vunpack.c.h.b16 %v4747
    %v5057 = vunpack.c.l.b16 %v4748
    %v5058 = vunpack.c.h.b16 %v4748
    %v5059 = vunpack.c.l.b16 %v4749
    %v5060 = vunpack.c.h.b16 %v4749
    %v5061 = vunpack.c.l.b16 %v4750
    %v5062 = vunpack.c.h.b16 %v4750
    %v5063 = vunpack.c.l.b16 %v4751
    %v5064 = vunpack.c.h.b16 %v4751
    %v5065 = vunpack.c.l.b16 %v4752
    %v5066 = vunpack.c.h.b16 %v4752
    %v5067 = vunpack.c.l.b16 %v4753
    %v5068 = vunpack.c.h.b16 %v4753
    %v5069 = vunpack.c.l.b16 %v4754
    %v5070 = vunpack.c.h.b16 %v4754
    %v5071 = vunpack.c.l.b16 %v4755
    %v5072 = vunpack.c.h.b16 %v4755
    %v5073 = vunpack.c.l.b16 %v4756
    %v5074 = vunpack.c.h.b16 %v4756
    %v5075 = vunpack.c.l.b16 %v4757
    %v5076 = vunpack.c.h.b16 %v4757
    %v5077 = vunpack.c.l.b16 %v4758
    %v5078 = vunpack.c.h.b16 %v4758
    %v5079 = vunpack.c.l.b16 %v4759
    %v5080 = vunpack.c.h.b16 %v4759
    %v5081 = vunpack.c.l.b16 %v4760
    %v5082 = vunpack.c.h.b16 %v4760
    %v5083 = vunpack.c.l.b16 %v4761
    %v5084 = vunpack.c.h.b16 %v4761
    %v5085 = vunpack.c.l.b16 %v4762
    %v5086 = vunpack.c.h.b16 %v4762
    %v5087 = vunpack.c.l.b16 %v4763
    %v5088 = vunpack.c.h.b16 %v4763
    %v5089 = vunpack.c.l.b16 %v4764
    %v5090 = vunpack.c.h.b16 %v4764
    %v5091 = vunpack.c.l.b16 %v4765
    %v5092 = vunpack.c.h.b16 %v4765
    %v5093 = vunpack.c.l.b16 %v4766
    %v5094 = vunpack.c.h.b16 %v4766
    %v5095 = vunpack.c.l.b16 %v4767
    %v5096 = vunpack.c.h.b16 %v4767
    %v5097 = vunpack.c.l.b16 %v4768
    %v5098 = vunpack.c.h.b16 %v4768
    %v5099 = vunpack.c.l.b16 %v4769
    %v5100 = vunpack.c.h.b16 %v4769
    %v5101 = vunpack.c.l.b16 %v4770
    %v5102 = vunpack.c.h.b16 %v4770
    %v5103 = vunpack.c.l.b16 %v4771
    %v5104 = vunpack.c.h.b16 %v4771
    %v5105 = vunpack.c.l.b16 %v4772
    %v5106 = vunpack.c.h.b16 %v4772
    %v5107 = vunpack.c.l.b16 %v4773
    %v5108 = vunpack.c.h.b16 %v4773
    %v5109 = vunpack.c.l.b16 %v4774
    %v5110 = vunpack.c.h.b16 %v4774
    %v5111 = vunpack.c.l.b16 %v4775
    %v5112 = vunpack.c.h.b16 %v4775
    %v5113 = vunpack.c.l.b16 %v4776
    %v5114 = vunpack.c.h.b16 %v4776
    %v5115 = vunpack.c.l.b16 %v4777
    %v5116 = vunpack.c.h.b16 %v4777
    %v5117 = vunpack.c.l.b16 %v4778
    %v5118 = vunpack.c.h.b16 %v4778
    %v5119 = vunpack.c.l.b16 %v4779
    %v5120 = vunpack.c.h.b16 %v4779
    %v5121 = vunpack.c.l.b16 %v4780
    %v5122 = vunpack.c.h.b16 %v4780
    %v5123 = vunpack.c.l.b16 %v4781
    %v5124 = vunpack.c.h.b16 %v4781
    %v5125 = vunpack.c.l.b16 %v4782
    %v5126 = vunpack.c.h.b16 %v4782
    %v5127 = vunpack.c.l.b16 %v4783
    %v5128 = vunpack.c.h.b16 %v4783
    %v5129 = vunpack.c.l.b16 %v4784
    %v5130 = vunpack.c.h.b16 %v4784
    %v5131 = vunpack.c.l.b16 %v4785
    %v5132 = vunpack.c.h.b16 %v4785
    %v5133 = vunpack.c.l.b16 %v4786
    %v5134 = vunpack.c.h.b16 %v4786
    %v5135 = vunpack.c.l.b16 %v4787
    %v5136 = vunpack.c.h.b16 %v4787
    %v5137 = vunpack.c.l.b16 %v4788
    %v5138 = vunpack.c.h.b16 %v4788
    %v5139 = vunpack.c.l.b16 %v4789
    %v5140 = vunpack.c.h.b16 %v4789
    %v5141 = vunpack.c.l.b16 %v4790
    %v5142 = vunpack.c.h.b16 %v4790
    %v5143 = vunpack.c.l.b16 %v4791
    %v5144 = vunpack.c.h.b16 %v4791
    %v5145 = vunpack.c.l.b16 %v4792
    %v5146 = vunpack.c.h.b16 %v4792
    %v5147 = vunpack.c.l.b16 %v4793
    %v5148 = vunpack.c.h.b16 %v4793
    %v5149 = vunpack.c.l.b16 %v4794
    %v5150 = vunpack.c.h.b16 %v4794
    %v5151 = vunpack.c.l.b16 %v4795
    %v5152 = vunpack.c.h.b16 %v4795
    %v5153 = vunpack.c.l.b16 %v4796
    %v5154 = vunpack.c.h.b16 %v4796
    %v5155 = vunpack.c.l.b16 %v4797
    %v5156 = vunpack.c.h.b16 %v4797
    %v5157 = vunpack.c.l.b16 %v4798
    %v5158 = vunpack.c.h.b16 %v4798
    %v5159 = vunpack.c.l.b16 %v4799
    %v5160 = vunpack.c.h.b16 %v4799
    %v5161 = vunpack.c.l.b16 %v4800
    %v5162 = vunpack.c.h.b16 %v4800
    %v5163 = vunpack.c.l.b16 %v4801
    %v5164 = vunpack.c.h.b16 %v4801
    %v5165 = vunpack.c.l.b16 %v4802
    %v5166 = vunpack.c.h.b16 %v4802
    %v5167 = vunpack.c.l.b16 %v4803
    %v5168 = vunpack.c.h.b16 %v4803
    %v5169 = vunpack.c.l.b16 %v4804
    %v5170 = vunpack.c.h.b16 %v4804
    %v5171 = vunpack.c.l.b16 %v4805
    %v5172 = vunpack.c.h.b16 %v4805
    %v5173 = vunpack.c.l.b16 %v4806
    %v5174 = vunpack.c.h.b16 %v4806
    %v5175 = vunpack.c.l.b16 %v4807
    %v5176 = vunpack.c.h.b16 %v4807
    %v5177 = vunpack.c.l.b16 %v4808
    %v5178 = vunpack.c.h.b16 %v4808
    %v5179 = vunpack.c.l.b16 %v4809
    %v5180 = vunpack.c.h.b16 %v4809
    %v5181 = vunpack.c.l.b16 %v4810
    %v5182 = vunpack.c.h.b16 %v4810
    %v5183 = vunpack.c.l.b16 %v4811
    %v5184 = vunpack.c.h.b16 %v4811
    %v5185 = vunpack.c.l.b16 %v4812
    %v5186 = vunpack.c.h.b16 %v4812
    %v5187 = vunpack.c.l.b16 %v4813
    %v5188 = vunpack.c.h.b16 %v4813
    %v5189 = vunpack.c.l.b16 %v4814
    %v5190 = vunpack.c.h.b16 %v4814
    %v5191 = vunpack.c.l.b16 %v4815
    %v5192 = vunpack.c.h.b16 %v4815
    %v5193 = vunpack.c.l.b16 %v4816
    %v5194 = vunpack.c.h.b16 %v4816
    %v5195 = vunpack.c.l.b16 %v4817
    %v5196 = vunpack.c.h.b16 %v4817
    %v5197 = vunpack.c.l.b16 %v4818
    %v5198 = vunpack.c.h.b16 %v4818
    %v5199 = vunpack.c.l.b16 %v4819
    %v5200 = vunpack.c.h.b16 %v4819
    %v5201 = vunpack.c.l.b16 %v4820
    %v5202 = vunpack.c.h.b16 %v4820
    %v5203 = vunpack.c.l.b16 %v4821
    %v5204 = vunpack.c.h.b16 %v4821
    %v5205 = vunpack.c.l.b16 %v4822
    %v5206 = vunpack.c.h.b16 %v4822
    %v5207 = vunpack.c.l.b16 %v4823
    %v5208 = vunpack.c.h.b16 %v4823
    %v5209 = vunpack.c.l.b16 %v4824
    %v5210 = vunpack.c.h.b16 %v4824
    %v5211 = vunpack.c.l.b16 %v4825
    %v5212 = vunpack.c.h.b16 %v4825
    %v5213 = vunpack.c.l.b16 %v4826
    %v5214 = vunpack.c.h.b16 %v4826
    %v5215 = vunpack.c.l.b16 %v4827
    %v5216 = vunpack.c.h.b16 %v4827
    %v5217 = vunpack.c.l.b16 %v4828
    %v5218 = vunpack.c.h.b16 %v4828
    %v5219 = vunpack.c.l.b16 %v4829
    %v5220 = vunpack.c.h.b16 %v4829
    %v5221 = vunpack.c.l.b16 %v4830
    %v5222 = vunpack.c.h.b16 %v4830
    %v5223 = vunpack.c.l.b16 %v4831
    %v5224 = vunpack.c.h.b16 %v4831
    %v5225 = vunpack.c.l.b16 %v4832
    %v5226 = vunpack.c.h.b16 %v4832
    %v5227 = vunpack.c.l.b16 %v4833
    %v5228 = vunpack.c.h.b16 %v4833
    %v5229 = vunpack.c.l.b16 %v4834
    %v5230 = vunpack.c.h.b16 %v4834
    %v5231 = vunpack.c.l.b16 %v4835
    %v5232 = vunpack.c.h.b16 %v4835
    %v5233 = vunpack.c.l.b16 %v4836
    %v5234 = vunpack.c.h.b16 %v4836
    %v5235 = vunpack.c.l.b16 %v4837
    %v5236 = vunpack.c.h.b16 %v4837
    %v5237 = vunpack.c.l.b16 %v4838
    %v5238 = vunpack.c.h.b16 %v4838
    %v5239 = vunpack.c.l.b16 %v4839
    %v5240 = vunpack.c.h.b16 %v4839
    %v5241 = vunpack.c.l.b16 %v4840
    %v5242 = vunpack.c.h.b16 %v4840
    %v5243 = vunpack.c.l.b16 %v4841
    %v5244 = vunpack.c.h.b16 %v4841
    %v5245 = vunpack.c.l.b16 %v4842
    %v5246 = vunpack.c.h.b16 %v4842
    %v5247 = vunpack.c.l.b16 %v4843
    %v5248 = vunpack.c.h.b16 %v4843
    %v5249 = vunpack.c.l.b16 %v4844
    %v5250 = vunpack.c.h.b16 %v4844
    %v5251 = vpack.c.b16 %v4999, %v4995
    %v5252 = vpack.c.b16 %v5000, %v4996
    %v5253 = vpack.c.b16 %v5001, %v4997
    %v5254 = vpack.c.b16 %v5002, %v4998
    %v5255 = vpack.c.b16 %v5007, %v5003
    %v5256 = vpack.c.b16 %v5008, %v5004
    %v5257 = vpack.c.b16 %v5009, %v5005
    %v5258 = vpack.c.b16 %v5010, %v5006
    %v5259 = vpack.c.b16 %v5015, %v5011
    %v5260 = vpack.c.b16 %v5016, %v5012
    %v5261 = vpack.c.b16 %v5017, %v5013
    %v5262 = vpack.c.b16 %v5018, %v5014
    %v5263 = vpack.c.b16 %v5023, %v5019
    %v5264 = vpack.c.b16 %v5024, %v5020
    %v5265 = vpack.c.b16 %v5025, %v5021
    %v5266 = vpack.c.b16 %v5026, %v5022
    %v5267 = vpack.c.b16 %v5031, %v5027
    %v5268 = vpack.c.b16 %v5032, %v5028
    %v5269 = vpack.c.b16 %v5033, %v5029
    %v5270 = vpack.c.b16 %v5034, %v5030
    %v5271 = vpack.c.b16 %v5039, %v5035
    %v5272 = vpack.c.b16 %v5040, %v5036
    %v5273 = vpack.c.b16 %v5041, %v5037
    %v5274 = vpack.c.b16 %v5042, %v5038
    %v5275 = vpack.c.b16 %v5047, %v5043
    %v5276 = vpack.c.b16 %v5048, %v5044
    %v5277 = vpack.c.b16 %v5049, %v5045
    %v5278 = vpack.c.b16 %v5050, %v5046
    %v5279 = vpack.c.b16 %v5055, %v5051
    %v5280 = vpack.c.b16 %v5056, %v5052
    %v5281 = vpack.c.b16 %v5057, %v5053
    %v5282 = vpack.c.b16 %v5058, %v5054
    %v5283 = vpack.c.b16 %v5063, %v5059
    %v5284 = vpack.c.b16 %v5064, %v5060
    %v5285 = vpack.c.b16 %v5065, %v5061
    %v5286 = vpack.c.b16 %v5066, %v5062
    %v5287 = vpack.c.b16 %v5071, %v5067
    %v5288 = vpack.c.b16 %v5072, %v5068
    %v5289 = vpack.c.b16 %v5073, %v5069
    %v5290 = vpack.c.b16 %v5074, %v5070
    %v5291 = vpack.c.b16 %v5079, %v5075
    %v5292 = vpack.c.b16 %v5080, %v5076
    %v5293 = vpack.c.b16 %v5081, %v5077
    %v5294 = vpack.c.b16 %v5082, %v5078
    %v5295 = vpack.c.b16 %v5087, %v5083
    %v5296 = vpack.c.b16 %v5088, %v5084
    %v5297 = vpack.c.b16 %v5089, %v5085
    %v5298 = vpack.c.b16 %v5090, %v5086
    %v5299 = vpack.c.b16 %v5095, %v5091
    %v5300 = vpack.c.b16 %v5096, %v5092
    %v5301 = vpack.c.b16 %v5097, %v5093
    %v5302 = vpack.c.b16 %v5098, %v5094
    %v5303 = vpack.c.b16 %v5103, %v5099
    %v5304 = vpack.c.b16 %v5104, %v5100
    %v5305 = vpack.c.b16 %v5105, %v5101
    %v5306 = vpack.c.b16 %v5106, %v5102
    %v5307 = vpack.c.b16 %v5111, %v5107
    %v5308 = vpack.c.b16 %v5112, %v5108
    %v5309 = vpack.c.b16 %v5113, %v5109
    %v5310 = vpack.c.b16 %v5114, %v5110
    %v5311 = vpack.c.b16 %v5119, %v5115
    %v5312 = vpack.c.b16 %v5120, %v5116
    %v5313 = vpack.c.b16 %v5121, %v5117
    %v5314 = vpack.c.b16 %v5122, %v5118
    %v5315 = vpack.c.b16 %v5127, %v5123
    %v5316 = vpack.c.b16 %v5128, %v5124
    %v5317 = vpack.c.b16 %v5129, %v5125
    %v5318 = vpack.c.b16 %v5130, %v5126
    %v5319 = vpack.c.b16 %v5135, %v5131
    %v5320 = vpack.c.b16 %v5136, %v5132
    %v5321 = vpack.c.b16 %v5137, %v5133
    %v5322 = vpack.c.b16 %v5138, %v5134
    %v5323 = vpack.c.b16 %v5143, %v5139
    %v5324 = vpack.c.b16 %v5144, %v5140
    %v5325 = vpack.c.b16 %v5145, %v5141
    %v5326 = vpack.c.b16 %v5146, %v5142
    %v5327 = vpack.c.b16 %v5151, %v5147
    %v5328 = vpack.c.b16 %v5152, %v5148
    %v5329 = vpack.c.b16 %v5153, %v5149
    %v5330 = vpack.c.b16 %v5154, %v5150
    %v5331 = vpack.c.b16 %v5159, %v5155
    %v5332 = vpack.c.b16 %v5160, %v5156
    %v5333 = vpack.c.b16 %v5161, %v5157
    %v5334 = vpack.c.b16 %v5162, %v5158
    %v5335 = vpack.c.b16 %v5167, %v5163
    %v5336 = vpack.c.b16 %v5168, %v5164
    %v5337 = vpack.c.b16 %v5169, %v5165
    %v5338 = vpack.c.b16 %v5170, %v5166
    %v5339 = vpack.c.b16 %v5175, %v5171
    %v5340 = vpack.c.b16 %v5176, %v5172
    %v5341 = vpack.c.b16 %v5177, %v5173
    %v5342 = vpack.c.b16 %v5178, %v5174
    %v5343 = vpack.c.b16 %v5183, %v5179
    %v5344 = vpack.c.b16 %v5184, %v5180
    %v5345 = vpack.c.b16 %v5185, %v5181
    %v5346 = vpack.c.b16 %v5186, %v5182
    %v5347 = vpack.c.b16 %v5191, %v5187
    %v5348 = vpack.c.b16 %v5192, %v5188
    %v5349 = vpack.c.b16 %v5193, %v5189
    %v5350 = vpack.c.b16 %v5194, %v5190
    %v5351 = vpack.c.b16 %v5199, %v5195
    %v5352 = vpack.c.b16 %v5200, %v5196
    %v5353 = vpack.c.b16 %v5201, %v5197
    %v5354 = vpack.c.b16 %v5202, %v5198
    %v5355 = vpack.c.b16 %v5207, %v5203
    %v5356 = vpack.c.b16 %v5208, %v5204
    %v5357 = vpack.c.b16 %v5209, %v5205
    %v5358 = vpack.c.b16 %v5210, %v5206
    %v5359 = vpack.c.b16 %v5215, %v5211
    %v5360 = vpack.c.b16 %v5216, %v5212
    %v5361 = vpack.c.b16 %v5217, %v5213
    %v5362 = vpack.c.b16 %v5218, %v5214
    %v5363 = vpack.c.b16 %v5223, %v5219
    %v5364 = vpack.c.b16 %v5224, %v5220
    %v5365 = vpack.c.b16 %v5225, %v5221
    %v5366 = vpack.c.b16 %v5226, %v5222
    %v5367 = vpack.c.b16 %v5231, %v5227
    %v5368 = vpack.c.b16 %v5232, %v5228
    %v5369 = vpack.c.b16 %v5233, %v5229
    %v5370 = vpack.c.b16 %v5234, %v5230
    %v5371 = vpack.c.b16 %v5239, %v5235
    %v5372 = vpack.c.b16 %v5240, %v5236
    %v5373 = vpack.c.b16 %v5241, %v5237
    %v5374 = vpack.c.b16 %v5242, %v5238
    %v5375 = vpack.c.b16 %v5247, %v5243
    %v5376 = vpack.c.b16 %v5248, %v5244
    %v5377 = vpack.c.b16 %v5249, %v5245
    %v5378 = vpack.c.b16 %v5250, %v5246
    %5507 = vmatprep.subr.bf16.mxu0 %v5252
    %5508 = vmatpush1.bf16.msra.mxu0 %v5251
    %5509 = vmatprep.subr.bf16.mxu0 %v5256
    %5510 = vmatpush1.bf16.msra.mxu0 %v5255
    %5511 = vmatprep.subr.bf16.mxu0 %v5260
    %5512 = vmatpush1.bf16.msra.mxu0 %v5259
    %5513 = vmatprep.subr.bf16.mxu0 %v5264
    %5514 = vmatpush1.bf16.msra.mxu0 %v5263
    %5515 = vmatprep.subr.bf16.mxu0 %v5268
    %5516 = vmatpush1.bf16.msra.mxu0 %v5267
    %5517 = vmatprep.subr.bf16.mxu0 %v5272
    %5518 = vmatpush1.bf16.msra.mxu0 %v5271
    %5519 = vmatprep.subr.bf16.mxu0 %v5276
    %5520 = vmatpush1.bf16.msra.mxu0 %v5275
    %5521 = vmatprep.subr.bf16.mxu0 %v5280
    %5522 = vmatpush1.bf16.msra.mxu0 %v5279
    %5523 = vmatprep.subr.bf16.mxu0 %v5284
    %5524 = vmatpush1.bf16.msra.mxu0 %v5283
    %5525 = vmatprep.subr.bf16.mxu0 %v5288
    %5526 = vmatpush1.bf16.msra.mxu0 %v5287
    %5527 = vmatprep.subr.bf16.mxu0 %v5292
    %5528 = vmatpush1.bf16.msra.mxu0 %v5291
    %5529 = vmatprep.subr.bf16.mxu0 %v5296
    %5530 = vmatpush1.bf16.msra.mxu0 %v5295
    %5531 = vmatprep.subr.bf16.mxu0 %v5300
    %5532 = vmatpush1.bf16.msra.mxu0 %v5299
    %5533 = vmatprep.subr.bf16.mxu0 %v5304
    %5534 = vmatpush1.bf16.msra.mxu0 %v5303
    %5535 = vmatprep.subr.bf16.mxu0 %v5308
    %5536 = vmatpush1.bf16.msra.mxu0 %v5307
    %5537 = vmatprep.subr.bf16.mxu0 %v5312
    %5538 = vmatpush1.bf16.msra.mxu0 %v5311
    %5539 = vmatprep.mubr.bf16.mxu0 %v4714
    %5540 = vmatmul.mubr.bf16.gmra.mrb[0].mxu0 %v4713
    %v5541 = vpop.f32.mrb[0].mxu0
    %v5542 = vadd.f32 %v4850, %v5541
    %v5543 = vpop.f32.mrb[0].mxu0
    %v5544 = vadd.f32 %v4854, %v5543
    %v5545 = vpop.f32.mrb[0].mxu0
    %v5546 = vpop.f32.mrb[0].mxu0
    %5547 = vdwg.mxu0
    %5548 = vmatprep.subr.bf16.mxu0 %v5316
    %5549 = vmatpush1.bf16.msra.mxu0 %v5315
    %5550 = vmatprep.subr.bf16.mxu0 %v5320
    %5551 = vmatpush1.bf16.msra.mxu0 %v5319
    %5552 = vmatprep.subr.bf16.mxu0 %v5324
    %5553 = vmatpush1.bf16.msra.mxu0 %v5323
    %5554 = vmatprep.subr.bf16.mxu0 %v5328
    %5555 = vmatpush1.bf16.msra.mxu0 %v5327
    %5556 = vmatprep.subr.bf16.mxu0 %v5332
    %5557 = vmatpush1.bf16.msra.mxu0 %v5331
    %5558 = vmatprep.subr.bf16.mxu0 %v5336
    %5559 = vmatpush1.bf16.msra.mxu0 %v5335
    %5560 = vmatprep.subr.bf16.mxu0 %v5340
    %5561 = vmatpush1.bf16.msra.mxu0 %v5339
    %5562 = vmatprep.subr.bf16.mxu0 %v5344
    %5563 = vmatpush1.bf16.msra.mxu0 %v5343
    %5564 = vmatprep.subr.bf16.mxu0 %v5348
    %5565 = vmatpush1.bf16.msra.mxu0 %v5347
    %5566 = vmatprep.subr.bf16.mxu0 %v5352
    %5567 = vmatpush1.bf16.msra.mxu0 %v5351
    %5568 = vmatprep.subr.bf16.mxu0 %v5356
    %5569 = vmatpush1.bf16.msra.mxu0 %v5355
    %5570 = vmatprep.subr.bf16.mxu0 %v5360
    %5571 = vmatpush1.bf16.msra.mxu0 %v5359
    %5572 = vmatprep.subr.bf16.mxu0 %v5364
    %5573 = vmatpush1.bf16.msra.mxu0 %v5363
    %5574 = vmatprep.subr.bf16.mxu0 %v5368
    %5575 = vmatpush1.bf16.msra.mxu0 %v5367
    %5576 = vmatprep.subr.bf16.mxu0 %v5372
    %5577 = vmatpush1.bf16.msra.mxu0 %v5371
    %5578 = vmatprep.subr.bf16.mxu0 %v5376
    %5579 = vmatpush1.bf16.msra.mxu0 %v5375
    %5580 = vmatprep.mubr.bf16.mxu0 %v4716
    %5581 = vmatmul.mubr.bf16.gmra.mrb[0].mxu0 %v4715
    %v5582 = vpop.f32.mrb[0].mxu0
    %v5583 = vadd.f32 %v5542, %v5582
    %v5584 = vpop.f32.mrb[0].mxu0
    %v5585 = vadd.f32 %v5544, %v5584
    %v5586 = vpop.f32.mrb[0].mxu0
    %v5587 = vpop.f32.mrb[0].mxu0
    %5588 = vdwg.mxu0
    %5589 = vmatprep.subr.bf16.mxu0 %v5254
    %5590 = vmatpush1.bf16.msra.mxu0 %v5253
    %5591 = vmatprep.subr.bf16.mxu0 %v5258
    %5592 = vmatpush1.bf16.msra.mxu0 %v5257
    %5593 = vmatprep.subr.bf16.mxu0 %v5262
    %5594 = vmatpush1.bf16.msra.mxu0 %v5261
    %5595 = vmatprep.subr.bf16.mxu0 %v5266
    %5596 = vmatpush1.bf16.msra.mxu0 %v5265
    %5597 = vmatprep.subr.bf16.mxu0 %v5270
    %5598 = vmatpush1.bf16.msra.mxu0 %v5269
    %5599 = vmatprep.subr.bf16.mxu0 %v5274
    %5600 = vmatpush1.bf16.msra.mxu0 %v5273
    %5601 = vmatprep.subr.bf16.mxu0 %v5278
    %5602 = vmatpush1.bf16.msra.mxu0 %v5277
    %5603 = vmatprep.subr.bf16.mxu0 %v5282
    %5604 = vmatpush1.bf16.msra.mxu0 %v5281
    %5605 = vmatprep.subr.bf16.mxu0 %v5286
    %5606 = vmatpush1.bf16.msra.mxu0 %v5285
    %5607 = vmatprep.subr.bf16.mxu0 %v5290
    %5608 = vmatpush1.bf16.msra.mxu0 %v5289
    %5609 = vmatprep.subr.bf16.mxu0 %v5294
    %5610 = vmatpush1.bf16.msra.mxu0 %v5293
    %5611 = vmatprep.subr.bf16.mxu0 %v5298
    %5612 = vmatpush1.bf16.msra.mxu0 %v5297
    %5613 = vmatprep.subr.bf16.mxu0 %v5302
    %5614 = vmatpush1.bf16.msra.mxu0 %v5301
    %5615 = vmatprep.subr.bf16.mxu0 %v5306
    %5616 = vmatpush1.bf16.msra.mxu0 %v5305
    %5617 = vmatprep.subr.bf16.mxu0 %v5310
    %5618 = vmatpush1.bf16.msra.mxu0 %v5309
    %5619 = vmatprep.subr.bf16.mxu0 %v5314
    %5620 = vmatpush1.bf16.msra.mxu0 %v5313
    %5621 = vmatprep.mubr.bf16.mxu0 %v4714
    %5622 = vmatmul.mubr.bf16.gmra.mrb[0].mxu0 %v4713
    %v5623 = vpop.f32.mrb[0].mxu0
    %v5624 = vadd.f32 %v4858, %v5623
    %v5625 = vpop.f32.mrb[0].mxu0
    %v5626 = vadd.f32 %v4862, %v5625
    %v5627 = vpop.f32.mrb[0].mxu0
    %v5628 = vpop.f32.mrb[0].mxu0
    %5629 = vdwg.mxu0
    %5630 = vmatprep.subr.bf16.mxu0 %v5318
    %5631 = vmatpush1.bf16.msra.mxu0 %v5317
    %5632 = vmatprep.subr.bf16.mxu0 %v5322
    %5633 = vmatpush1.bf16.msra.mxu0 %v5321
    %5634 = vmatprep.subr.bf16.mxu0 %v5326
    %5635 = vmatpush1.bf16.msra.mxu0 %v5325
    %5636 = vmatprep.subr.bf16.mxu0 %v5330
    %5637 = vmatpush1.bf16.msra.mxu0 %v5329
    %5638 = vmatprep.subr.bf16.mxu0 %v5334
    %5639 = vmatpush1.bf16.msra.mxu0 %v5333
    %5640 = vmatprep.subr.bf16.mxu0 %v5338
    %5641 = vmatpush1.bf16.msra.mxu0 %v5337
    %5642 = vmatprep.subr.bf16.mxu0 %v5342
    %5643 = vmatpush1.bf16.msra.mxu0 %v5341
    %5644 = vmatprep.subr.bf16.mxu0 %v5346
    %5645 = vmatpush1.bf16.msra.mxu0 %v5345
    %5646 = vmatprep.subr.bf16.mxu0 %v5350
    %5647 = vmatpush1.bf16.msra.mxu0 %v5349
    %5648 = vmatprep.subr.bf16.mxu0 %v5354
    %5649 = vmatpush1.bf16.msra.mxu0 %v5353
    %5650 = vmatprep.subr.bf16.mxu0 %v5358
    %5651 = vmatpush1.bf16.msra.mxu0 %v5357
    %5652 = vmatprep.subr.bf16.mxu0 %v5362
    %5653 = vmatpush1.bf16.msra.mxu0 %v5361
    %5654 = vmatprep.subr.bf16.mxu0 %v5366
    %5655 = vmatpush1.bf16.msra.mxu0 %v5365
    %5656 = vmatprep.subr.bf16.mxu0 %v5370
    %5657 = vmatpush1.bf16.msra.mxu0 %v5369
    %5658 = vmatprep.subr.bf16.mxu0 %v5374
    %5659 = vmatpush1.bf16.msra.mxu0 %v5373
    %5660 = vmatprep.subr.bf16.mxu0 %v5378
    %5661 = vmatpush1.bf16.msra.mxu0 %v5377
    %5662 = vmatprep.mubr.bf16.mxu0 %v4716
    %5663 = vmatmul.mubr.bf16.gmra.mrb[0].mxu0 %v4715
    %v5664 = vpop.f32.mrb[0].mxu0
    %v5665 = vadd.f32 %v5624, %v5664
    %v5666 = vpop.f32.mrb[0].mxu0
    %v5667 = vadd.f32 %v5626, %v5666
    %v5668 = vpop.f32.mrb[0].mxu0
    %v5669 = vpop.f32.mrb[0].mxu0
    %5670 = vdwg.mxu0
    %v5671 = vmax.f32 %v5583, 0.0
    %v5672 = vmax.f32 %v5585, 0.0
    %v5673 = vmax.f32 %v5665, 0.0
    %v5674 = vmax.f32 %v5667, 0.0
    %v5675 = vpack.c.bf16 %v5671, %v5671
    %v5676 = vpack.c.bf16 %v5672, %v5672
    %v5677 = vpack.c.bf16 %v5673, %v5673
    %v5678 = vpack.c.bf16 %v5674, %v5674
    %v5679 = vld [vmem:[%s7] sm:$0xf]
    %v5680 = vld [vmem:[%s7 + $0x4] sm:$0xf]
    %v5681 = vld [vmem:[%s7 + $0x8] sm:$0xf]
    %v5682 = vld [vmem:[%s7 + $0xc] sm:$0xf]
    %v5683 = vld [vmem:[%s7 + $0x10] sm:$0xf]
    %v5684 = vld [vmem:[%s7 + $0x14] sm:$0xf]
    %v5685 = vld [vmem:[%s7 + $0x18] sm:$0xf]
    %v5686 = vld [vmem:[%s7 + $0x1c] sm:$0xf]
    %v5687 = vld [vmem:[%s7 + $0x20] sm:$0xf]
    %v5688 = vld [vmem:[%s7 + $0x24] sm:$0xf]
    %v5689 = vld [vmem:[%s7 + $0x28] sm:$0xf]
    %v5690 = vld [vmem:[%s7 + $0x2c] sm:$0xf]
    %v5691 = vld [vmem:[%s7 + $0x30] sm:$0xf]
    %v5692 = vld [vmem:[%s7 + $0x34] sm:$0xf]
    %v5693 = vld [vmem:[%s7 + $0x38] sm:$0xf]
    %v5694 = vld [vmem:[%s7 + $0x3c] sm:$0xf]
    %v5695 = vld [vmem:[%s7 + $0x40] sm:$0xf]
    %v5696 = vld [vmem:[%s7 + $0x44] sm:$0xf]
    %v5697 = vld [vmem:[%s7 + $0x48] sm:$0xf]
    %v5698 = vld [vmem:[%s7 + $0x4c] sm:$0xf]
    %v5699 = vld [vmem:[%s7 + $0x50] sm:$0xf]
    %v5700 = vld [vmem:[%s7 + $0x54] sm:$0xf]
    %v5701 = vld [vmem:[%s7 + $0x58] sm:$0xf]
    %v5702 = vld [vmem:[%s7 + $0x5c] sm:$0xf]
    %v5703 = vld [vmem:[%s7 + $0x60] sm:$0xf]
    %v5704 = vld [vmem:[%s7 + $0x64] sm:$0xf]
    %v5705 = vld [vmem:[%s7 + $0x68] sm:$0xf]
    %v5706 = vld [vmem:[%s7 + $0x6c] sm:$0xf]
    %v5707 = vld [vmem:[%s7 + $0x70] sm:$0xf]
    %v5708 = vld [vmem:[%s7 + $0x74] sm:$0xf]
    %v5709 = vld [vmem:[%s7 + $0x78] sm:$0xf]
    %v5710 = vld [vmem:[%s7 + $0x7c] sm:$0xf]
    %v5711 = vld [vmem:[%s7 + $0x80] sm:$0xf]
    %v5712 = vld [vmem:[%s7 + $0x84] sm:$0xf]
    %v5713 = vld [vmem:[%s7 + $0x88] sm:$0xf]
    %v5714 = vld [vmem:[%s7 + $0x8c] sm:$0xf]
    %v5715 = vld [vmem:[%s7 + $0x90] sm:$0xf]
    %v5716 = vld [vmem:[%s7 + $0x94] sm:$0xf]
    %v5717 = vld [vmem:[%s7 + $0x98] sm:$0xf]
    %v5718 = vld [vmem:[%s7 + $0x9c] sm:$0xf]
    %v5719 = vld [vmem:[%s7 + $0xa0] sm:$0xf]
    %v5720 = vld [vmem:[%s7 + $0xa4] sm:$0xf]
    %v5721 = vld [vmem:[%s7 + $0xa8] sm:$0xf]
    %v5722 = vld [vmem:[%s7 + $0xac] sm:$0xf]
    %v5723 = vld [vmem:[%s7 + $0xb0] sm:$0xf]
    %v5724 = vld [vmem:[%s7 + $0xb4] sm:$0xf]
    %v5725 = vld [vmem:[%s7 + $0xb8] sm:$0xf]
    %v5726 = vld [vmem:[%s7 + $0xbc] sm:$0xf]
    %v5727 = vld [vmem:[%s7 + $0xc0] sm:$0xf]
    %v5728 = vld [vmem:[%s7 + $0xc4] sm:$0xf]
    %v5729 = vld [vmem:[%s7 + $0xc8] sm:$0xf]
    %v5730 = vld [vmem:[%s7 + $0xcc] sm:$0xf]
    %v5731 = vld [vmem:[%s7 + $0xd0] sm:$0xf]
    %v5732 = vld [vmem:[%s7 + $0xd4] sm:$0xf]
    %v5733 = vld [vmem:[%s7 + $0xd8] sm:$0xf]
    %v5734 = vld [vmem:[%s7 + $0xdc] sm:$0xf]
    %v5735 = vld [vmem:[%s7 + $0xe0] sm:$0xf]
    %v5736 = vld [vmem:[%s7 + $0xe4] sm:$0xf]
    %v5737 = vld [vmem:[%s7 + $0xe8] sm:$0xf]
    %v5738 = vld [vmem:[%s7 + $0xec] sm:$0xf]
    %v5739 = vld [vmem:[%s7 + $0xf0] sm:$0xf]
    %v5740 = vld [vmem:[%s7 + $0xf4] sm:$0xf]
    %v5741 = vld [vmem:[%s7 + $0xf8] sm:$0xf]
    %v5742 = vld [vmem:[%s7 + $0xfc] sm:$0xf]
    %v5743 = vld [vmem:[%s8] sm:$0x1]
    %v5745 = vlaneseq
    %v5746 = vshrl.u32 %v5745, 7
    %v5747 = vsub.s32 0, %v5746
    %v5748 = vrot.slane %v5743, %v5747
    %v5814 = vunpack.c.l.b16 %v5679
    %v5815 = vunpack.c.l.b16 %v5680
    %v5816 = vunpack.c.l.b16 %v5681
    %v5817 = vunpack.c.l.b16 %v5682
    %v5818 = vunpack.c.l.b16 %v5683
    %v5819 = vunpack.c.l.b16 %v5684
    %v5820 = vunpack.c.l.b16 %v5685
    %v5821 = vunpack.c.l.b16 %v5686
    %v5822 = vunpack.c.l.b16 %v5687
    %v5823 = vunpack.c.l.b16 %v5688
    %v5824 = vunpack.c.l.b16 %v5689
    %v5825 = vunpack.c.l.b16 %v5690
    %v5826 = vunpack.c.l.b16 %v5691
    %v5827 = vunpack.c.l.b16 %v5692
    %v5828 = vunpack.c.l.b16 %v5693
    %v5829 = vunpack.c.l.b16 %v5694
    %v5830 = vunpack.c.l.b16 %v5695
    %v5831 = vunpack.c.l.b16 %v5696
    %v5832 = vunpack.c.l.b16 %v5697
    %v5833 = vunpack.c.l.b16 %v5698
    %v5834 = vunpack.c.l.b16 %v5699
    %v5835 = vunpack.c.l.b16 %v5700
    %v5836 = vunpack.c.l.b16 %v5701
    %v5837 = vunpack.c.l.b16 %v5702
    %v5838 = vunpack.c.l.b16 %v5703
    %v5839 = vunpack.c.l.b16 %v5704
    %v5840 = vunpack.c.l.b16 %v5705
    %v5841 = vunpack.c.l.b16 %v5706
    %v5842 = vunpack.c.l.b16 %v5707
    %v5843 = vunpack.c.l.b16 %v5708
    %v5844 = vunpack.c.l.b16 %v5709
    %v5845 = vunpack.c.l.b16 %v5710
    %v5846 = vunpack.c.l.b16 %v5711
    %v5847 = vunpack.c.l.b16 %v5712
    %v5848 = vunpack.c.l.b16 %v5713
    %v5849 = vunpack.c.l.b16 %v5714
    %v5850 = vunpack.c.l.b16 %v5715
    %v5851 = vunpack.c.l.b16 %v5716
    %v5852 = vunpack.c.l.b16 %v5717
    %v5853 = vunpack.c.l.b16 %v5718
    %v5854 = vunpack.c.l.b16 %v5719
    %v5855 = vunpack.c.l.b16 %v5720
    %v5856 = vunpack.c.l.b16 %v5721
    %v5857 = vunpack.c.l.b16 %v5722
    %v5858 = vunpack.c.l.b16 %v5723
    %v5859 = vunpack.c.l.b16 %v5724
    %v5860 = vunpack.c.l.b16 %v5725
    %v5861 = vunpack.c.l.b16 %v5726
    %v5862 = vunpack.c.l.b16 %v5727
    %v5863 = vunpack.c.l.b16 %v5728
    %v5864 = vunpack.c.l.b16 %v5729
    %v5865 = vunpack.c.l.b16 %v5730
    %v5866 = vunpack.c.l.b16 %v5731
    %v5867 = vunpack.c.l.b16 %v5732
    %v5868 = vunpack.c.l.b16 %v5733
    %v5869 = vunpack.c.l.b16 %v5734
    %v5870 = vunpack.c.l.b16 %v5735
    %v5871 = vunpack.c.l.b16 %v5736
    %v5872 = vunpack.c.l.b16 %v5737
    %v5873 = vunpack.c.l.b16 %v5738
    %v5874 = vunpack.c.l.b16 %v5739
    %v5875 = vunpack.c.l.b16 %v5740
    %v5876 = vunpack.c.l.b16 %v5741
    %v5877 = vunpack.c.l.b16 %v5742
    %v5878 = vpack.c.b16 %v5815, %v5814
    %v5879 = vpack.c.b16 %v5817, %v5816
    %v5880 = vpack.c.b16 %v5819, %v5818
    %v5881 = vpack.c.b16 %v5821, %v5820
    %v5882 = vpack.c.b16 %v5823, %v5822
    %v5883 = vpack.c.b16 %v5825, %v5824
    %v5884 = vpack.c.b16 %v5827, %v5826
    %v5885 = vpack.c.b16 %v5829, %v5828
    %v5886 = vpack.c.b16 %v5831, %v5830
    %v5887 = vpack.c.b16 %v5833, %v5832
    %v5888 = vpack.c.b16 %v5835, %v5834
    %v5889 = vpack.c.b16 %v5837, %v5836
    %v5890 = vpack.c.b16 %v5839, %v5838
    %v5891 = vpack.c.b16 %v5841, %v5840
    %v5892 = vpack.c.b16 %v5843, %v5842
    %v5893 = vpack.c.b16 %v5845, %v5844
    %v5894 = vpack.c.b16 %v5847, %v5846
    %v5895 = vpack.c.b16 %v5849, %v5848
    %v5896 = vpack.c.b16 %v5851, %v5850
    %v5897 = vpack.c.b16 %v5853, %v5852
    %v5898 = vpack.c.b16 %v5855, %v5854
    %v5899 = vpack.c.b16 %v5857, %v5856
    %v5900 = vpack.c.b16 %v5859, %v5858
    %v5901 = vpack.c.b16 %v5861, %v5860
    %v5902 = vpack.c.b16 %v5863, %v5862
    %v5903 = vpack.c.b16 %v5865, %v5864
    %v5904 = vpack.c.b16 %v5867, %v5866
    %v5905 = vpack.c.b16 %v5869, %v5868
    %v5906 = vpack.c.b16 %v5871, %v5870
    %v5907 = vpack.c.b16 %v5873, %v5872
    %v5908 = vpack.c.b16 %v5875, %v5874
    %v5909 = vpack.c.b16 %v5877, %v5876
    %5942 = vmatprep.subr.bf16.mxu0 0
    %5943 = vmatpush1.bf16.msra.mxu0 %v5878
    %5944 = vmatprep.subr.bf16.mxu0 0
    %5945 = vmatpush1.bf16.msra.mxu0 %v5879
    %5946 = vmatprep.subr.bf16.mxu0 0
    %5947 = vmatpush1.bf16.msra.mxu0 %v5880
    %5948 = vmatprep.subr.bf16.mxu0 0
    %5949 = vmatpush1.bf16.msra.mxu0 %v5881
    %5950 = vmatprep.subr.bf16.mxu0 0
    %5951 = vmatpush1.bf16.msra.mxu0 %v5882
    %5952 = vmatprep.subr.bf16.mxu0 0
    %5953 = vmatpush1.bf16.msra.mxu0 %v5883
    %5954 = vmatprep.subr.bf16.mxu0 0
    %5955 = vmatpush1.bf16.msra.mxu0 %v5884
    %5956 = vmatprep.subr.bf16.mxu0 0
    %5957 = vmatpush1.bf16.msra.mxu0 %v5885
    %5958 = vmatprep.subr.bf16.mxu0 0
    %5959 = vmatpush1.bf16.msra.mxu0 %v5886
    %5960 = vmatprep.subr.bf16.mxu0 0
    %5961 = vmatpush1.bf16.msra.mxu0 %v5887
    %5962 = vmatprep.subr.bf16.mxu0 0
    %5963 = vmatpush1.bf16.msra.mxu0 %v5888
    %5964 = vmatprep.subr.bf16.mxu0 0
    %5965 = vmatpush1.bf16.msra.mxu0 %v5889
    %5966 = vmatprep.subr.bf16.mxu0 0
    %5967 = vmatpush1.bf16.msra.mxu0 %v5890
    %5968 = vmatprep.subr.bf16.mxu0 0
    %5969 = vmatpush1.bf16.msra.mxu0 %v5891
    %5970 = vmatprep.subr.bf16.mxu0 0
    %5971 = vmatpush1.bf16.msra.mxu0 %v5892
    %5972 = vmatprep.subr.bf16.mxu0 0
    %5973 = vmatpush1.bf16.msra.mxu0 %v5893
    %5974 = vmatprep.mubr.bf16.mxu0 %v5676
    %5975 = vmatmul.mubr.bf16.gmra.mrb[0].mxu0 %v5675
    %v5976 = vpop.f32.mrb[0].mxu0
    %v5977 = vadd.f32 %v5748, %v5976
    %v5978 = vpop.f32.mrb[0].mxu0
    %v5979 = vpop.f32.mrb[0].mxu0
    %v5980 = vpop.f32.mrb[0].mxu0
    %5981 = vdwg.mxu0
    %5982 = vmatprep.subr.bf16.mxu0 0
    %5983 = vmatpush1.bf16.msra.mxu0 %v5894
    %5984 = vmatprep.subr.bf16.mxu0 0
    %5985 = vmatpush1.bf16.msra.mxu0 %v5895
    %5986 = vmatprep.subr.bf16.mxu0 0
    %5987 = vmatpush1.bf16.msra.mxu0 %v5896
    %5988 = vmatprep.subr.bf16.mxu0 0
    %5989 = vmatpush1.bf16.msra.mxu0 %v5897
    %5990 = vmatprep.subr.bf16.mxu0 0
    %5991 = vmatpush1.bf16.msra.mxu0 %v5898
    %5992 = vmatprep.subr.bf16.mxu0 0
    %5993 = vmatpush1.bf16.msra.mxu0 %v5899
    %5994 = vmatprep.subr.bf16.mxu0 0
    %5995 = vmatpush1.bf16.msra.mxu0 %v5900
    %5996 = vmatprep.subr.bf16.mxu0 0
    %5997 = vmatpush1.bf16.msra.mxu0 %v5901
    %5998 = vmatprep.subr.bf16.mxu0 0
    %5999 = vmatpush1.bf16.msra.mxu0 %v5902
    %6000 = vmatprep.subr.bf16.mxu0 0
    %6001 = vmatpush1.bf16.msra.mxu0 %v5903
    %6002 = vmatprep.subr.bf16.mxu0 0
    %6003 = vmatpush1.bf16.msra.mxu0 %v5904
    %6004 = vmatprep.subr.bf16.mxu0 0
    %6005 = vmatpush1.bf16.msra.mxu0 %v5905
    %6006 = vmatprep.subr.bf16.mxu0 0
    %6007 = vmatpush1.bf16.msra.mxu0 %v5906
    %6008 = vmatprep.subr.bf16.mxu0 0
    %6009 = vmatpush1.bf16.msra.mxu0 %v5907
    %6010 = vmatprep.subr.bf16.mxu0 0
    %6011 = vmatpush1.bf16.msra.mxu0 %v5908
    %6012 = vmatprep.subr.bf16.mxu0 0
    %6013 = vmatpush1.bf16.msra.mxu0 %v5909
    %6014 = vmatprep.mubr.bf16.mxu0 %v5678
    %6015 = vmatmul.mubr.bf16.gmra.mrb[0].mxu0 %v5677
    %v6016 = vpop.f32.mrb[0].mxu0
    %v6017 = vadd.f32 %v5977, %v6016
    %v6018 = vpop.f32.mrb[0].mxu0
    %v6019 = vpop.f32.mrb[0].mxu0
    %v6020 = vpop.f32.mrb[0].mxu0
    %6021 = vdwg.mxu0
    %6022 = vst [vmem:[#allocation2] sm:$0x3] %v6017
    // Predicated region
    $region38: #{vgg_forward.5} parent=1 // pred_check
      _
    $region39: #{vgg_forward.5} parent=1 // pred_check_branch
      %6024 = sbr.rel (0) target = $region41
    $region40: #{vgg_forward.5} parent=1 // pred_region
      %s6026 = ssub.s32 32, 32
      %6027 = vsyncadd [#allocation3], %s6026
      %s6029 = sshll.u32 [#allocation2], 4
      %s6030 = int_to_ptr.vmem [resolvable:$true] %s6029
      %6032 = dma.vmem_to_hbm [thread:$0]  %s6030, 32, %s9, [#allocation3]
    $region41: #{vgg_forward.5} parent=1 // pred_fallthru
      _
    // Predicated region
    $region42: #{vgg_forward.5} parent=1 // pred_check
      _
    $region43: #{vgg_forward.5} parent=1 // pred_check_branch
      %6034 = sbr.rel (0) target = $region45
    $region44: #{vgg_forward.5} parent=1 // pred_region
      %6035 = dma.done [#allocation3], 32
    $region45: #{vgg_forward.5} parent=1 // pred_fallthru
      _
    %6036 = vsyncpa [#allocation3], 1

</llo_original>
